<compile_context>
chip_gen: v7x
topology: tpu7x:2x2x1
jax: 0.10.0
libtpu: 0.0.40
codegen_flags: <defaults>
</compile_context>

<pallas_src>
import jax
import jax.numpy as jnp
from jax.experimental import pallas as pl
from jax.experimental.pallas import tpu as pltpu

N, C_IN, H, W = 1, 1488, 7, 7
C_OUT = 248
EPS = 1e-5


def bn_relu_conv_kernel(x_ref, scale_ref, shift_ref, w_ref, o_ref):
    # x_ref:     [1, Cin, HW]   one batch element, NCHW layout (HW on lanes)
    # scale_ref: [Cin, 1]       folded BN scale  = gamma / sqrt(var + eps)
    # shift_ref: [Cin, 1]       folded BN shift  = beta - mean * scale
    # w_ref:     [Cout, Cin]    1x1 conv weight in native PyTorch layout
    # o_ref:     [1, Cout, HW]  already NCHW -> no output transpose needed
    x = x_ref[0]                                        # [Cin, HW]
    y = x * scale_ref[...] + shift_ref[...]             # BatchNorm (eval / folded)
    y = jnp.maximum(y, 0.0)                             # ReLU
    # 1x1 conv == matmul on the MXU: [Cout, Cin] @ [Cin, HW] -> [Cout, HW].
    o_ref[0] = jnp.dot(w_ref[...], y,
                       preferred_element_type=jnp.float32).astype(o_ref.dtype)


@jax.jit
def bn_relu_conv2d_1x1(x_nchw, gamma, beta, run_mean, run_var, conv_w):
    """x_nchw: [N, Cin, H, W] f32;  conv_w: [Cout, Cin, 1, 1] f32 -> [N, Cout, H, W]."""
    n, c_in, h, w = x_nchw.shape
    c_out = conv_w.shape[0]
    hw = h * w

    # Fold BN (eval mode) into per-channel scale/shift.  In deployment these are
    # constants (running stats + affine params) and constant-fold away.
    scale = (gamma * jax.lax.rsqrt(run_var + EPS)).reshape(c_in, 1)      # [Cin, 1]
    shift = beta.reshape(c_in, 1) - run_mean.reshape(c_in, 1) * scale    # [Cin, 1]

    # Pure metadata reshapes — no data movement, no transposes:
    x_r = x_nchw.reshape(n, c_in, hw)          # [N, Cin, H*W]
    w_mat = conv_w.reshape(c_out, c_in)        # [Cout, Cin]

    out = pl.pallas_call(
        bn_relu_conv_kernel,
        out_shape=jax.ShapeDtypeStruct((n, c_out, hw), jnp.float32),
        grid=(n,),
        in_specs=[
            pl.BlockSpec((1, c_in, hw), lambda b: (b, 0, 0)),
            pl.BlockSpec((c_in, 1), lambda b: (0, 0)),
            pl.BlockSpec((c_in, 1), lambda b: (0, 0)),
            pl.BlockSpec((c_out, c_in), lambda b: (0, 0)),
        ],
        out_specs=pl.BlockSpec((1, c_out, hw), lambda b: (b, 0, 0)),
        compiler_params=pltpu.CompilerParams(
            dimension_semantics=("parallel",)),
    )(x_r, scale, shift, w_mat)

    return out.reshape(n, c_out, h, w)         # metadata reshape -> NCHW


def _reference(x_nchw, gamma, beta, run_mean, run_var, conv_w):
    scale = gamma / jnp.sqrt(run_var + EPS)
    shift = beta - run_mean * scale
    y = x_nchw * scale[None, :, None, None] + shift[None, :, None, None]
    y = jnp.maximum(y, 0.0)
    return jnp.einsum("nchw,oc->nohw", y, conv_w.reshape(C_OUT, C_IN))


if __name__ == "__main__":
    key = jax.random.PRNGKey(0)
    kx, kg, kb, km, kv, kw = jax.random.split(key, 6)

    x = jax.random.normal(kx, (N, C_IN, H, W), dtype=jnp.float32)
    gamma = jax.random.normal(kg, (C_IN,), dtype=jnp.float32) * 0.1 + 1.0
    beta = jax.random.normal(kb, (C_IN,), dtype=jnp.float32) * 0.1
    run_mean = jax.random.normal(km, (C_IN,), dtype=jnp.float32) * 0.1
    run_var = jnp.abs(jax.random.normal(kv, (C_IN,), dtype=jnp.float32)) * 0.1 + 1.0
    conv_w = jax.random.normal(kw, (C_OUT, C_IN, 1, 1), dtype=jnp.float32) * 0.02

    out = bn_relu_conv2d_1x1(x, gamma, beta, run_mean, run_var, conv_w)
    out = jax.block_until_ready(out)

    ref = _reference(x, gamma, beta, run_mean, run_var, conv_w)
    assert out.shape == (N, C_OUT, H, W), out.shape
    assert jnp.allclose(out, ref, atol=1e-3, rtol=1e-3), float(
        jnp.max(jnp.abs(out - ref)))

    print("KERNEL_OK")
</pallas_src>

<mosaic_0001>
module attributes {stable_mosaic.version = 11 : i64} {
  func.func @bn_relu_conv_kernel(%arg0: i32, %arg1: memref<1x1488x49xf32, #tpu.memory_space<vmem>>, %arg2: memref<1488x1xf32, #tpu.memory_space<vmem>>, %arg3: memref<1488x1xf32, #tpu.memory_space<vmem>>, %arg4: memref<248x1488xf32, #tpu.memory_space<vmem>>, %arg5: memref<1x248x49xf32, #tpu.memory_space<vmem>>) attributes {dimension_semantics = [#tpu.dimension_semantics<parallel>], iteration_bounds = array<i64: 1>, scalar_prefetch = 0 : i64, scratch_operands = 0 : i64, tpu.core_type = #tpu.core_type<tc>, window_params = [{transform_indices = @transform_0, window_bounds = array<i64: 1, 1488, 49>}, {pipeline_mode = #tpu.pipeline_mode<synchronous>, transform_indices = @transform_1, window_bounds = array<i64: 1488, 1>}, {pipeline_mode = #tpu.pipeline_mode<synchronous>, transform_indices = @transform_2, window_bounds = array<i64: 1488, 1>}, {pipeline_mode = #tpu.pipeline_mode<synchronous>, transform_indices = @transform_3, window_bounds = array<i64: 248, 1488>}, {transform_indices = @transform_4, window_bounds = array<i64: 1, 248, 49>}]} {
    %c0 = arith.constant 0 : index
    %c0_0 = arith.constant 0 : index
    %c0_1 = arith.constant 0 : index
    %0 = vector.load %arg1[%c0, %c0_0, %c0_1] : memref<1x1488x49xf32, #tpu.memory_space<vmem>>, vector<1x1488x49xf32>
    %1 = vector.shape_cast %0 : vector<1x1488x49xf32> to vector<1488x49xf32>
    %c0_2 = arith.constant 0 : index
    %c0_3 = arith.constant 0 : index
    %2 = vector.load %arg2[%c0_2, %c0_3] : memref<1488x1xf32, #tpu.memory_space<vmem>>, vector<1488x1xf32>
    %3 = vector.broadcast %2 : vector<1488x1xf32> to vector<1488x49xf32>
    %4 = arith.mulf %1, %3 : vector<1488x49xf32>
    %c0_4 = arith.constant 0 : index
    %c0_5 = arith.constant 0 : index
    %5 = vector.load %arg3[%c0_4, %c0_5] : memref<1488x1xf32, #tpu.memory_space<vmem>>, vector<1488x1xf32>
    %6 = vector.broadcast %5 : vector<1488x1xf32> to vector<1488x49xf32>
    %7 = arith.addf %4, %6 : vector<1488x49xf32>
    %cst = arith.constant 0.000000e+00 : f32
    %8 = vector.broadcast %cst : f32 to vector<1488x49xf32>
    %9 = arith.maximumf %7, %8 : vector<1488x49xf32>
    %c0_6 = arith.constant 0 : index
    %c0_7 = arith.constant 0 : index
    %10 = vector.load %arg4[%c0_6, %c0_7] : memref<248x1488xf32, #tpu.memory_space<vmem>>, vector<248x1488xf32>
    %cst_8 = arith.constant dense<0.000000e+00> : vector<248x49xf32>
    %11 = tpu.matmul %10, %9, %cst_8 {dimension_numbers = #tpu.dot_dimension_numbers<[1], [0], [0], [1], [0, 0, 1, 1], [], []>} : vector<248x1488xf32>, vector<1488x49xf32>, vector<248x49xf32> -> vector<248x49xf32>
    %c0_9 = arith.constant 0 : index
    %c0_10 = arith.constant 0 : index
    %c0_11 = arith.constant 0 : index
    %12 = vector.load %arg5[%c0_9, %c0_10, %c0_11] : memref<1x248x49xf32, #tpu.memory_space<vmem>>, vector<1x248x49xf32>
    %13 = vector.shape_cast %12 : vector<1x248x49xf32> to vector<248x49xf32>
    %14 = vector.shape_cast %11 : vector<248x49xf32> to vector<1x248x49xf32>
    tpu.vector_store %arg5[%c0_9, %c0_10, %c0_11], %14 {strides = array<i32>} : memref<1x248x49xf32, #tpu.memory_space<vmem>>, vector<1x248x49xf32>,
    return
  }
  func.func @transform_0(%arg0: i32) -> (i32, i32, i32) {
    %c0_i32 = arith.constant 0 : i32
    %c0_i32_0 = arith.constant 0 : i32
    %c0_i32_1 = arith.constant 0 : i32
    return %arg0, %c0_i32, %c0_i32_0 : i32, i32, i32
  }
  func.func @transform_1(%arg0: i32) -> (i32, i32) {
    %c0_i32 = arith.constant 0 : i32
    %c0_i32_0 = arith.constant 0 : i32
    %c0_i32_1 = arith.constant 0 : i32
    return %c0_i32, %c0_i32_0 : i32, i32
  }
  func.func @transform_2(%arg0: i32) -> (i32, i32) {
    %c0_i32 = arith.constant 0 : i32
    %c0_i32_0 = arith.constant 0 : i32
    %c0_i32_1 = arith.constant 0 : i32
    return %c0_i32, %c0_i32_0 : i32, i32
  }
  func.func @transform_3(%arg0: i32) -> (i32, i32) {
    %c0_i32 = arith.constant 0 : i32
    %c0_i32_0 = arith.constant 0 : i32
    %c0_i32_1 = arith.constant 0 : i32
    return %c0_i32, %c0_i32_0 : i32, i32
  }
  func.func @transform_4(%arg0: i32) -> (i32, i32, i32) {
    %c0_i32 = arith.constant 0 : i32
    %c0_i32_0 = arith.constant 0 : i32
    %c0_i32_1 = arith.constant 0 : i32
    return %arg0, %c0_i32, %c0_i32_0 : i32, i32, i32
  }
}

</mosaic_0001>

<llo_original>
// kernel: bn_relu_conv2d_1x1.1
$region0: #{bn_relu_conv2d_1x1.1}
  #allocation0 [shape = 'u32[]', space=smem, size = 0x4, offset = 0x4, fixed_abs, tag = 'smem constant byte address 0x4 - core index']
  #allocation1 [shape = 'u32[144,128]{1,0:T(1,128)}', space=vmem, size = 0x12000, scoped, tag = 'internal scratch']
  %s0 = inlined_call_operand.vmem [shape: f32[1,1488,49], index: 0, kind: input, shape index: {}]
  %s1 = inlined_call_operand.vmem [shape: f32[1488,1], index: 1, kind: input, shape index: {}]
  %s2 = inlined_call_operand.vmem [shape: f32[1488,1], index: 2, kind: input, shape index: {}]
  %s3 = inlined_call_operand.vmem [shape: f32[248,1488], index: 3, kind: input, shape index: {}]
  %s4 = inlined_call_operand.vmem [shape: f32[1,248,49], index: 4, kind: output, shape index: {}]
  %s5 = sld [smem:[#allocation0]]
  $region26: #{bn_relu_conv2d_1x1.1} parent=0
    _
  %s7 = ssub.s32 1, %s5
  %s8 = scalar_select 0, %s7, %s5
  // Predicated region
  $region2: #{bn_relu_conv2d_1x1.1} parent=0 // pred_check
    _
  $region3: #{bn_relu_conv2d_1x1.1} parent=0 // pred_check_branch
    %10 = sbr.rel (0) target = $region5
  $region4: #{bn_relu_conv2d_1x1.1} parent=0 // pred_region
    _
  $region5: #{bn_relu_conv2d_1x1.1} parent=0 // pred_fallthru
    _
  // Predicated region
  $region6: #{bn_relu_conv2d_1x1.1} parent=0 // pred_check
    _
  $region7: #{bn_relu_conv2d_1x1.1} parent=0 // pred_check_branch
    %12 = sbr.rel (0) target = $region9
  $region8: #{bn_relu_conv2d_1x1.1} parent=0 // pred_region
    _
  $region9: #{bn_relu_conv2d_1x1.1} parent=0 // pred_fallthru
    _
  // Predicated region
  $region10: #{bn_relu_conv2d_1x1.1} parent=0 // pred_check
    _
  $region11: #{bn_relu_conv2d_1x1.1} parent=0 // pred_check_branch
    %14 = sbr.rel (0) target = $region13
  $region12: #{bn_relu_conv2d_1x1.1} parent=0 // pred_region
    _
  $region13: #{bn_relu_conv2d_1x1.1} parent=0 // pred_fallthru
    _
  // Predicated region
  $region14: #{bn_relu_conv2d_1x1.1} parent=0 // pred_check
    _
  $region15: #{bn_relu_conv2d_1x1.1} parent=0 // pred_check_branch
    %16 = sbr.rel (0) target = $region17
  $region16: #{bn_relu_conv2d_1x1.1} parent=0 // pred_region
    _
  $region17: #{bn_relu_conv2d_1x1.1} parent=0 // pred_fallthru
    _
  %v17 = vld [vmem:[%s0] sm:$0xff]
  %v18 = vld [vmem:[%s0 + $0x8] sm:$0xff]
  %v19 = vld [vmem:[%s0 + $0x10] sm:$0xff]
  %v20 = vld [vmem:[%s0 + $0x18] sm:$0xff]
  %v21 = vld [vmem:[%s0 + $0x20] sm:$0xff]
  %v22 = vld [vmem:[%s0 + $0x28] sm:$0xff]
  %v23 = vld [vmem:[%s0 + $0x30] sm:$0xff]
  %v24 = vld [vmem:[%s0 + $0x38] sm:$0xff]
  %v25 = vld [vmem:[%s0 + $0x40] sm:$0xff]
  %v26 = vld [vmem:[%s0 + $0x48] sm:$0xff]
  %v27 = vld [vmem:[%s0 + $0x50] sm:$0xff]
  %v28 = vld [vmem:[%s0 + $0x58] sm:$0xff]
  %v29 = vld [vmem:[%s0 + $0x60] sm:$0xff]
  %v30 = vld [vmem:[%s0 + $0x68] sm:$0xff]
  %v31 = vld [vmem:[%s0 + $0x70] sm:$0xff]
  %v32 = vld [vmem:[%s0 + $0x78] sm:$0xff]
  %v33 = vld [vmem:[%s0 + $0x80] sm:$0xff]
  %v34 = vld [vmem:[%s0 + $0x88] sm:$0xff]
  %v35 = vld [vmem:[%s0 + $0x90] sm:$0xff]
  %v36 = vld [vmem:[%s0 + $0x98] sm:$0xff]
  %v37 = vld [vmem:[%s0 + $0xa0] sm:$0xff]
  %v38 = vld [vmem:[%s0 + $0xa8] sm:$0xff]
  %v39 = vld [vmem:[%s0 + $0xb0] sm:$0xff]
  %v40 = vld [vmem:[%s0 + $0xb8] sm:$0xff]
  %v41 = vld [vmem:[%s0 + $0xc0] sm:$0xff]
  %v42 = vld [vmem:[%s0 + $0xc8] sm:$0xff]
  %v43 = vld [vmem:[%s0 + $0xd0] sm:$0xff]
  %v44 = vld [vmem:[%s0 + $0xd8] sm:$0xff]
  %v45 = vld [vmem:[%s0 + $0xe0] sm:$0xff]
  %v46 = vld [vmem:[%s0 + $0xe8] sm:$0xff]
  %v47 = vld [vmem:[%s0 + $0xf0] sm:$0xff]
  %v48 = vld [vmem:[%s0 + $0xf8] sm:$0xff]
  %v49 = vld [vmem:[%s0 + $0x100] sm:$0xff]
  %v50 = vld [vmem:[%s0 + $0x108] sm:$0xff]
  %v51 = vld [vmem:[%s0 + $0x110] sm:$0xff]
  %v52 = vld [vmem:[%s0 + $0x118] sm:$0xff]
  %v53 = vld [vmem:[%s0 + $0x120] sm:$0xff]
  %v54 = vld [vmem:[%s0 + $0x128] sm:$0xff]
  %v55 = vld [vmem:[%s0 + $0x130] sm:$0xff]
  %v56 = vld [vmem:[%s0 + $0x138] sm:$0xff]
  %v57 = vld [vmem:[%s0 + $0x140] sm:$0xff]
  %v58 = vld [vmem:[%s0 + $0x148] sm:$0xff]
  %v59 = vld [vmem:[%s0 + $0x150] sm:$0xff]
  %v60 = vld [vmem:[%s0 + $0x158] sm:$0xff]
  %v61 = vld [vmem:[%s0 + $0x160] sm:$0xff]
  %v62 = vld [vmem:[%s0 + $0x168] sm:$0xff]
  %v63 = vld [vmem:[%s0 + $0x170] sm:$0xff]
  %v64 = vld [vmem:[%s0 + $0x178] sm:$0xff]
  %v65 = vld [vmem:[%s0 + $0x180] sm:$0xff]
  %v66 = vld [vmem:[%s0 + $0x188] sm:$0xff]
  %v67 = vld [vmem:[%s0 + $0x190] sm:$0xff]
  %v68 = vld [vmem:[%s0 + $0x198] sm:$0xff]
  %v69 = vld [vmem:[%s0 + $0x1a0] sm:$0xff]
  %v70 = vld [vmem:[%s0 + $0x1a8] sm:$0xff]
  %v71 = vld [vmem:[%s0 + $0x1b0] sm:$0xff]
  %v72 = vld [vmem:[%s0 + $0x1b8] sm:$0xff]
  %v73 = vld [vmem:[%s0 + $0x1c0] sm:$0xff]
  %v74 = vld [vmem:[%s0 + $0x1c8] sm:$0xff]
  %v75 = vld [vmem:[%s0 + $0x1d0] sm:$0xff]
  %v76 = vld [vmem:[%s0 + $0x1d8] sm:$0xff]
  %v77 = vld [vmem:[%s0 + $0x1e0] sm:$0xff]
  %v78 = vld [vmem:[%s0 + $0x1e8] sm:$0xff]
  %v79 = vld [vmem:[%s0 + $0x1f0] sm:$0xff]
  %v80 = vld [vmem:[%s0 + $0x1f8] sm:$0xff]
  %v81 = vld [vmem:[%s0 + $0x200] sm:$0xff]
  %v82 = vld [vmem:[%s0 + $0x208] sm:$0xff]
  %v83 = vld [vmem:[%s0 + $0x210] sm:$0xff]
  %v84 = vld [vmem:[%s0 + $0x218] sm:$0xff]
  %v85 = vld [vmem:[%s0 + $0x220] sm:$0xff]
  %v86 = vld [vmem:[%s0 + $0x228] sm:$0xff]
  %v87 = vld [vmem:[%s0 + $0x230] sm:$0xff]
  %v88 = vld [vmem:[%s0 + $0x238] sm:$0xff]
  %v89 = vld [vmem:[%s0 + $0x240] sm:$0xff]
  %v90 = vld [vmem:[%s0 + $0x248] sm:$0xff]
  %v91 = vld [vmem:[%s0 + $0x250] sm:$0xff]
  %v92 = vld [vmem:[%s0 + $0x258] sm:$0xff]
  %v93 = vld [vmem:[%s0 + $0x260] sm:$0xff]
  %v94 = vld [vmem:[%s0 + $0x268] sm:$0xff]
  %v95 = vld [vmem:[%s0 + $0x270] sm:$0xff]
  %v96 = vld [vmem:[%s0 + $0x278] sm:$0xff]
  %v97 = vld [vmem:[%s0 + $0x280] sm:$0xff]
  %v98 = vld [vmem:[%s0 + $0x288] sm:$0xff]
  %v99 = vld [vmem:[%s0 + $0x290] sm:$0xff]
  %v100 = vld [vmem:[%s0 + $0x298] sm:$0xff]
  %v101 = vld [vmem:[%s0 + $0x2a0] sm:$0xff]
  %v102 = vld [vmem:[%s0 + $0x2a8] sm:$0xff]
  %v103 = vld [vmem:[%s0 + $0x2b0] sm:$0xff]
  %v104 = vld [vmem:[%s0 + $0x2b8] sm:$0xff]
  %v105 = vld [vmem:[%s0 + $0x2c0] sm:$0xff]
  %v106 = vld [vmem:[%s0 + $0x2c8] sm:$0xff]
  %v107 = vld [vmem:[%s0 + $0x2d0] sm:$0xff]
  %v108 = vld [vmem:[%s0 + $0x2d8] sm:$0xff]
  %v109 = vld [vmem:[%s0 + $0x2e0] sm:$0xff]
  %v110 = vld [vmem:[%s0 + $0x2e8] sm:$0xff]
  %v111 = vld [vmem:[%s0 + $0x2f0] sm:$0xff]
  %v112 = vld [vmem:[%s0 + $0x2f8] sm:$0xff]
  %v113 = vld [vmem:[%s0 + $0x300] sm:$0xff]
  %v114 = vld [vmem:[%s0 + $0x308] sm:$0xff]
  %v115 = vld [vmem:[%s0 + $0x310] sm:$0xff]
  %v116 = vld [vmem:[%s0 + $0x318] sm:$0xff]
  %v117 = vld [vmem:[%s0 + $0x320] sm:$0xff]
  %v118 = vld [vmem:[%s0 + $0x328] sm:$0xff]
  %v119 = vld [vmem:[%s0 + $0x330] sm:$0xff]
  %v120 = vld [vmem:[%s0 + $0x338] sm:$0xff]
  %v121 = vld [vmem:[%s0 + $0x340] sm:$0xff]
  %v122 = vld [vmem:[%s0 + $0x348] sm:$0xff]
  %v123 = vld [vmem:[%s0 + $0x350] sm:$0xff]
  %v124 = vld [vmem:[%s0 + $0x358] sm:$0xff]
  %v125 = vld [vmem:[%s0 + $0x360] sm:$0xff]
  %v126 = vld [vmem:[%s0 + $0x368] sm:$0xff]
  %v127 = vld [vmem:[%s0 + $0x370] sm:$0xff]
  %v128 = vld [vmem:[%s0 + $0x378] sm:$0xff]
  %v129 = vld [vmem:[%s0 + $0x380] sm:$0xff]
  %v130 = vld [vmem:[%s0 + $0x388] sm:$0xff]
  %v131 = vld [vmem:[%s0 + $0x390] sm:$0xff]
  %v132 = vld [vmem:[%s0 + $0x398] sm:$0xff]
  %v133 = vld [vmem:[%s0 + $0x3a0] sm:$0xff]
  %v134 = vld [vmem:[%s0 + $0x3a8] sm:$0xff]
  %v135 = vld [vmem:[%s0 + $0x3b0] sm:$0xff]
  %v136 = vld [vmem:[%s0 + $0x3b8] sm:$0xff]
  %v137 = vld [vmem:[%s0 + $0x3c0] sm:$0xff]
  %v138 = vld [vmem:[%s0 + $0x3c8] sm:$0xff]
  %v139 = vld [vmem:[%s0 + $0x3d0] sm:$0xff]
  %v140 = vld [vmem:[%s0 + $0x3d8] sm:$0xff]
  %v141 = vld [vmem:[%s0 + $0x3e0] sm:$0xff]
  %v142 = vld [vmem:[%s0 + $0x3e8] sm:$0xff]
  %v143 = vld [vmem:[%s0 + $0x3f0] sm:$0xff]
  %v144 = vld [vmem:[%s0 + $0x3f8] sm:$0xff]
  %v145 = vld [vmem:[%s0 + $0x400] sm:$0xff]
  %v146 = vld [vmem:[%s0 + $0x408] sm:$0xff]
  %v147 = vld [vmem:[%s0 + $0x410] sm:$0xff]
  %v148 = vld [vmem:[%s0 + $0x418] sm:$0xff]
  %v149 = vld [vmem:[%s0 + $0x420] sm:$0xff]
  %v150 = vld [vmem:[%s0 + $0x428] sm:$0xff]
  %v151 = vld [vmem:[%s0 + $0x430] sm:$0xff]
  %v152 = vld [vmem:[%s0 + $0x438] sm:$0xff]
  %v153 = vld [vmem:[%s0 + $0x440] sm:$0xff]
  %v154 = vld [vmem:[%s0 + $0x448] sm:$0xff]
  %v155 = vld [vmem:[%s0 + $0x450] sm:$0xff]
  %v156 = vld [vmem:[%s0 + $0x458] sm:$0xff]
  %v157 = vld [vmem:[%s0 + $0x460] sm:$0xff]
  %v158 = vld [vmem:[%s0 + $0x468] sm:$0xff]
  %v159 = vld [vmem:[%s0 + $0x470] sm:$0xff]
  %v160 = vld [vmem:[%s0 + $0x478] sm:$0xff]
  %v161 = vld [vmem:[%s0 + $0x480] sm:$0xff]
  %v162 = vld [vmem:[%s0 + $0x488] sm:$0xff]
  %v163 = vld [vmem:[%s0 + $0x490] sm:$0xff]
  %v164 = vld [vmem:[%s0 + $0x498] sm:$0xff]
  %v165 = vld [vmem:[%s0 + $0x4a0] sm:$0xff]
  %v166 = vld [vmem:[%s0 + $0x4a8] sm:$0xff]
  %v167 = vld [vmem:[%s0 + $0x4b0] sm:$0xff]
  %v168 = vld [vmem:[%s0 + $0x4b8] sm:$0xff]
  %v169 = vld [vmem:[%s0 + $0x4c0] sm:$0xff]
  %v170 = vld [vmem:[%s0 + $0x4c8] sm:$0xff]
  %v171 = vld [vmem:[%s0 + $0x4d0] sm:$0xff]
  %v172 = vld [vmem:[%s0 + $0x4d8] sm:$0xff]
  %v173 = vld [vmem:[%s0 + $0x4e0] sm:$0xff]
  %v174 = vld [vmem:[%s0 + $0x4e8] sm:$0xff]
  %v175 = vld [vmem:[%s0 + $0x4f0] sm:$0xff]
  %v176 = vld [vmem:[%s0 + $0x4f8] sm:$0xff]
  %v177 = vld [vmem:[%s0 + $0x500] sm:$0xff]
  %v178 = vld [vmem:[%s0 + $0x508] sm:$0xff]
  %v179 = vld [vmem:[%s0 + $0x510] sm:$0xff]
  %v180 = vld [vmem:[%s0 + $0x518] sm:$0xff]
  %v181 = vld [vmem:[%s0 + $0x520] sm:$0xff]
  %v182 = vld [vmem:[%s0 + $0x528] sm:$0xff]
  %v183 = vld [vmem:[%s0 + $0x530] sm:$0xff]
  %v184 = vld [vmem:[%s0 + $0x538] sm:$0xff]
  %v185 = vld [vmem:[%s0 + $0x540] sm:$0xff]
  %v186 = vld [vmem:[%s0 + $0x548] sm:$0xff]
  %v187 = vld [vmem:[%s0 + $0x550] sm:$0xff]
  %v188 = vld [vmem:[%s0 + $0x558] sm:$0xff]
  %v189 = vld [vmem:[%s0 + $0x560] sm:$0xff]
  %v190 = vld [vmem:[%s0 + $0x568] sm:$0xff]
  %v191 = vld [vmem:[%s0 + $0x570] sm:$0xff]
  %v192 = vld [vmem:[%s0 + $0x578] sm:$0xff]
  %v193 = vld [vmem:[%s0 + $0x580] sm:$0xff]
  %v194 = vld [vmem:[%s0 + $0x588] sm:$0xff]
  %v195 = vld [vmem:[%s0 + $0x590] sm:$0xff]
  %v196 = vld [vmem:[%s0 + $0x598] sm:$0xff]
  %v197 = vld [vmem:[%s0 + $0x5a0] sm:$0xff]
  %v198 = vld [vmem:[%s0 + $0x5a8] sm:$0xff]
  %v199 = vld [vmem:[%s0 + $0x5b0] sm:$0xff]
  %v200 = vld [vmem:[%s0 + $0x5b8] sm:$0xff]
  %v201 = vld [vmem:[%s0 + $0x5c0] sm:$0xff]
  %v202 = vld [vmem:[%s0 + $0x5c8] sm:$0xff]
  %v203 = vld [vmem:[%s1] sm:$0xff]
  %v204 = vld [vmem:[%s1 + $0x8] sm:$0xff]
  %v205 = vld [vmem:[%s1 + $0x10] sm:$0xff]
  %v206 = vld [vmem:[%s1 + $0x18] sm:$0xff]
  %v207 = vld [vmem:[%s1 + $0x20] sm:$0xff]
  %v208 = vld [vmem:[%s1 + $0x28] sm:$0xff]
  %v209 = vld [vmem:[%s1 + $0x30] sm:$0xff]
  %v210 = vld [vmem:[%s1 + $0x38] sm:$0xff]
  %v211 = vld [vmem:[%s1 + $0x40] sm:$0xff]
  %v212 = vld [vmem:[%s1 + $0x48] sm:$0xff]
  %v213 = vld [vmem:[%s1 + $0x50] sm:$0xff]
  %v214 = vld [vmem:[%s1 + $0x58] sm:$0xff]
  %v215 = vld [vmem:[%s1 + $0x60] sm:$0xff]
  %v216 = vld [vmem:[%s1 + $0x68] sm:$0xff]
  %v217 = vld [vmem:[%s1 + $0x70] sm:$0xff]
  %v218 = vld [vmem:[%s1 + $0x78] sm:$0xff]
  %v219 = vld [vmem:[%s1 + $0x80] sm:$0xff]
  %v220 = vld [vmem:[%s1 + $0x88] sm:$0xff]
  %v221 = vld [vmem:[%s1 + $0x90] sm:$0xff]
  %v222 = vld [vmem:[%s1 + $0x98] sm:$0xff]
  %v223 = vld [vmem:[%s1 + $0xa0] sm:$0xff]
  %v224 = vld [vmem:[%s1 + $0xa8] sm:$0xff]
  %v225 = vld [vmem:[%s1 + $0xb0] sm:$0xff]
  %v226 = vld [vmem:[%s1 + $0xb8] sm:$0xff]
  %v227 = vld [vmem:[%s1 + $0xc0] sm:$0xff]
  %v228 = vld [vmem:[%s1 + $0xc8] sm:$0xff]
  %v229 = vld [vmem:[%s1 + $0xd0] sm:$0xff]
  %v230 = vld [vmem:[%s1 + $0xd8] sm:$0xff]
  %v231 = vld [vmem:[%s1 + $0xe0] sm:$0xff]
  %v232 = vld [vmem:[%s1 + $0xe8] sm:$0xff]
  %v233 = vld [vmem:[%s1 + $0xf0] sm:$0xff]
  %v234 = vld [vmem:[%s1 + $0xf8] sm:$0xff]
  %v235 = vld [vmem:[%s1 + $0x100] sm:$0xff]
  %v236 = vld [vmem:[%s1 + $0x108] sm:$0xff]
  %v237 = vld [vmem:[%s1 + $0x110] sm:$0xff]
  %v238 = vld [vmem:[%s1 + $0x118] sm:$0xff]
  %v239 = vld [vmem:[%s1 + $0x120] sm:$0xff]
  %v240 = vld [vmem:[%s1 + $0x128] sm:$0xff]
  %v241 = vld [vmem:[%s1 + $0x130] sm:$0xff]
  %v242 = vld [vmem:[%s1 + $0x138] sm:$0xff]
  %v243 = vld [vmem:[%s1 + $0x140] sm:$0xff]
  %v244 = vld [vmem:[%s1 + $0x148] sm:$0xff]
  %v245 = vld [vmem:[%s1 + $0x150] sm:$0xff]
  %v246 = vld [vmem:[%s1 + $0x158] sm:$0xff]
  %v247 = vld [vmem:[%s1 + $0x160] sm:$0xff]
  %v248 = vld [vmem:[%s1 + $0x168] sm:$0xff]
  %v249 = vld [vmem:[%s1 + $0x170] sm:$0xff]
  %v250 = vld [vmem:[%s1 + $0x178] sm:$0xff]
  %v251 = vld [vmem:[%s1 + $0x180] sm:$0xff]
  %v252 = vld [vmem:[%s1 + $0x188] sm:$0xff]
  %v253 = vld [vmem:[%s1 + $0x190] sm:$0xff]
  %v254 = vld [vmem:[%s1 + $0x198] sm:$0xff]
  %v255 = vld [vmem:[%s1 + $0x1a0] sm:$0xff]
  %v256 = vld [vmem:[%s1 + $0x1a8] sm:$0xff]
  %v257 = vld [vmem:[%s1 + $0x1b0] sm:$0xff]
  %v258 = vld [vmem:[%s1 + $0x1b8] sm:$0xff]
  %v259 = vld [vmem:[%s1 + $0x1c0] sm:$0xff]
  %v260 = vld [vmem:[%s1 + $0x1c8] sm:$0xff]
  %v261 = vld [vmem:[%s1 + $0x1d0] sm:$0xff]
  %v262 = vld [vmem:[%s1 + $0x1d8] sm:$0xff]
  %v263 = vld [vmem:[%s1 + $0x1e0] sm:$0xff]
  %v264 = vld [vmem:[%s1 + $0x1e8] sm:$0xff]
  %v265 = vld [vmem:[%s1 + $0x1f0] sm:$0xff]
  %v266 = vld [vmem:[%s1 + $0x1f8] sm:$0xff]
  %v267 = vld [vmem:[%s1 + $0x200] sm:$0xff]
  %v268 = vld [vmem:[%s1 + $0x208] sm:$0xff]
  %v269 = vld [vmem:[%s1 + $0x210] sm:$0xff]
  %v270 = vld [vmem:[%s1 + $0x218] sm:$0xff]
  %v271 = vld [vmem:[%s1 + $0x220] sm:$0xff]
  %v272 = vld [vmem:[%s1 + $0x228] sm:$0xff]
  %v273 = vld [vmem:[%s1 + $0x230] sm:$0xff]
  %v274 = vld [vmem:[%s1 + $0x238] sm:$0xff]
  %v275 = vld [vmem:[%s1 + $0x240] sm:$0xff]
  %v276 = vld [vmem:[%s1 + $0x248] sm:$0xff]
  %v277 = vld [vmem:[%s1 + $0x250] sm:$0xff]
  %v278 = vld [vmem:[%s1 + $0x258] sm:$0xff]
  %v279 = vld [vmem:[%s1 + $0x260] sm:$0xff]
  %v280 = vld [vmem:[%s1 + $0x268] sm:$0xff]
  %v281 = vld [vmem:[%s1 + $0x270] sm:$0xff]
  %v282 = vld [vmem:[%s1 + $0x278] sm:$0xff]
  %v283 = vld [vmem:[%s1 + $0x280] sm:$0xff]
  %v284 = vld [vmem:[%s1 + $0x288] sm:$0xff]
  %v285 = vld [vmem:[%s1 + $0x290] sm:$0xff]
  %v286 = vld [vmem:[%s1 + $0x298] sm:$0xff]
  %v287 = vld [vmem:[%s1 + $0x2a0] sm:$0xff]
  %v288 = vld [vmem:[%s1 + $0x2a8] sm:$0xff]
  %v289 = vld [vmem:[%s1 + $0x2b0] sm:$0xff]
  %v290 = vld [vmem:[%s1 + $0x2b8] sm:$0xff]
  %v291 = vld [vmem:[%s1 + $0x2c0] sm:$0xff]
  %v292 = vld [vmem:[%s1 + $0x2c8] sm:$0xff]
  %v293 = vld [vmem:[%s1 + $0x2d0] sm:$0xff]
  %v294 = vld [vmem:[%s1 + $0x2d8] sm:$0xff]
  %v295 = vld [vmem:[%s1 + $0x2e0] sm:$0xff]
  %v296 = vld [vmem:[%s1 + $0x2e8] sm:$0xff]
  %v297 = vld [vmem:[%s1 + $0x2f0] sm:$0xff]
  %v298 = vld [vmem:[%s1 + $0x2f8] sm:$0xff]
  %v299 = vld [vmem:[%s1 + $0x300] sm:$0xff]
  %v300 = vld [vmem:[%s1 + $0x308] sm:$0xff]
  %v301 = vld [vmem:[%s1 + $0x310] sm:$0xff]
  %v302 = vld [vmem:[%s1 + $0x318] sm:$0xff]
  %v303 = vld [vmem:[%s1 + $0x320] sm:$0xff]
  %v304 = vld [vmem:[%s1 + $0x328] sm:$0xff]
  %v305 = vld [vmem:[%s1 + $0x330] sm:$0xff]
  %v306 = vld [vmem:[%s1 + $0x338] sm:$0xff]
  %v307 = vld [vmem:[%s1 + $0x340] sm:$0xff]
  %v308 = vld [vmem:[%s1 + $0x348] sm:$0xff]
  %v309 = vld [vmem:[%s1 + $0x350] sm:$0xff]
  %v310 = vld [vmem:[%s1 + $0x358] sm:$0xff]
  %v311 = vld [vmem:[%s1 + $0x360] sm:$0xff]
  %v312 = vld [vmem:[%s1 + $0x368] sm:$0xff]
  %v313 = vld [vmem:[%s1 + $0x370] sm:$0xff]
  %v314 = vld [vmem:[%s1 + $0x378] sm:$0xff]
  %v315 = vld [vmem:[%s1 + $0x380] sm:$0xff]
  %v316 = vld [vmem:[%s1 + $0x388] sm:$0xff]
  %v317 = vld [vmem:[%s1 + $0x390] sm:$0xff]
  %v318 = vld [vmem:[%s1 + $0x398] sm:$0xff]
  %v319 = vld [vmem:[%s1 + $0x3a0] sm:$0xff]
  %v320 = vld [vmem:[%s1 + $0x3a8] sm:$0xff]
  %v321 = vld [vmem:[%s1 + $0x3b0] sm:$0xff]
  %v322 = vld [vmem:[%s1 + $0x3b8] sm:$0xff]
  %v323 = vld [vmem:[%s1 + $0x3c0] sm:$0xff]
  %v324 = vld [vmem:[%s1 + $0x3c8] sm:$0xff]
  %v325 = vld [vmem:[%s1 + $0x3d0] sm:$0xff]
  %v326 = vld [vmem:[%s1 + $0x3d8] sm:$0xff]
  %v327 = vld [vmem:[%s1 + $0x3e0] sm:$0xff]
  %v328 = vld [vmem:[%s1 + $0x3e8] sm:$0xff]
  %v329 = vld [vmem:[%s1 + $0x3f0] sm:$0xff]
  %v330 = vld [vmem:[%s1 + $0x3f8] sm:$0xff]
  %v331 = vld [vmem:[%s1 + $0x400] sm:$0xff]
  %v332 = vld [vmem:[%s1 + $0x408] sm:$0xff]
  %v333 = vld [vmem:[%s1 + $0x410] sm:$0xff]
  %v334 = vld [vmem:[%s1 + $0x418] sm:$0xff]
  %v335 = vld [vmem:[%s1 + $0x420] sm:$0xff]
  %v336 = vld [vmem:[%s1 + $0x428] sm:$0xff]
  %v337 = vld [vmem:[%s1 + $0x430] sm:$0xff]
  %v338 = vld [vmem:[%s1 + $0x438] sm:$0xff]
  %v339 = vld [vmem:[%s1 + $0x440] sm:$0xff]
  %v340 = vld [vmem:[%s1 + $0x448] sm:$0xff]
  %v341 = vld [vmem:[%s1 + $0x450] sm:$0xff]
  %v342 = vld [vmem:[%s1 + $0x458] sm:$0xff]
  %v343 = vld [vmem:[%s1 + $0x460] sm:$0xff]
  %v344 = vld [vmem:[%s1 + $0x468] sm:$0xff]
  %v345 = vld [vmem:[%s1 + $0x470] sm:$0xff]
  %v346 = vld [vmem:[%s1 + $0x478] sm:$0xff]
  %v347 = vld [vmem:[%s1 + $0x480] sm:$0xff]
  %v348 = vld [vmem:[%s1 + $0x488] sm:$0xff]
  %v349 = vld [vmem:[%s1 + $0x490] sm:$0xff]
  %v350 = vld [vmem:[%s1 + $0x498] sm:$0xff]
  %v351 = vld [vmem:[%s1 + $0x4a0] sm:$0xff]
  %v352 = vld [vmem:[%s1 + $0x4a8] sm:$0xff]
  %v353 = vld [vmem:[%s1 + $0x4b0] sm:$0xff]
  %v354 = vld [vmem:[%s1 + $0x4b8] sm:$0xff]
  %v355 = vld [vmem:[%s1 + $0x4c0] sm:$0xff]
  %v356 = vld [vmem:[%s1 + $0x4c8] sm:$0xff]
  %v357 = vld [vmem:[%s1 + $0x4d0] sm:$0xff]
  %v358 = vld [vmem:[%s1 + $0x4d8] sm:$0xff]
  %v359 = vld [vmem:[%s1 + $0x4e0] sm:$0xff]
  %v360 = vld [vmem:[%s1 + $0x4e8] sm:$0xff]
  %v361 = vld [vmem:[%s1 + $0x4f0] sm:$0xff]
  %v362 = vld [vmem:[%s1 + $0x4f8] sm:$0xff]
  %v363 = vld [vmem:[%s1 + $0x500] sm:$0xff]
  %v364 = vld [vmem:[%s1 + $0x508] sm:$0xff]
  %v365 = vld [vmem:[%s1 + $0x510] sm:$0xff]
  %v366 = vld [vmem:[%s1 + $0x518] sm:$0xff]
  %v367 = vld [vmem:[%s1 + $0x520] sm:$0xff]
  %v368 = vld [vmem:[%s1 + $0x528] sm:$0xff]
  %v369 = vld [vmem:[%s1 + $0x530] sm:$0xff]
  %v370 = vld [vmem:[%s1 + $0x538] sm:$0xff]
  %v371 = vld [vmem:[%s1 + $0x540] sm:$0xff]
  %v372 = vld [vmem:[%s1 + $0x548] sm:$0xff]
  %v373 = vld [vmem:[%s1 + $0x550] sm:$0xff]
  %v374 = vld [vmem:[%s1 + $0x558] sm:$0xff]
  %v375 = vld [vmem:[%s1 + $0x560] sm:$0xff]
  %v376 = vld [vmem:[%s1 + $0x568] sm:$0xff]
  %v377 = vld [vmem:[%s1 + $0x570] sm:$0xff]
  %v378 = vld [vmem:[%s1 + $0x578] sm:$0xff]
  %v379 = vld [vmem:[%s1 + $0x580] sm:$0xff]
  %v380 = vld [vmem:[%s1 + $0x588] sm:$0xff]
  %v381 = vld [vmem:[%s1 + $0x590] sm:$0xff]
  %v382 = vld [vmem:[%s1 + $0x598] sm:$0xff]
  %v383 = vld [vmem:[%s1 + $0x5a0] sm:$0xff]
  %v384 = vld [vmem:[%s1 + $0x5a8] sm:$0xff]
  %v385 = vld [vmem:[%s1 + $0x5b0] sm:$0xff]
  %v386 = vld [vmem:[%s1 + $0x5b8] sm:$0xff]
  %v387 = vld [vmem:[%s1 + $0x5c0] sm:$0xff]
  %v388 = vld [vmem:[%s1 + $0x5c8] sm:$0xff]
  %390 = vset.pattern.permute.xlu0 0
  %391 = vperm.xlu0 %390, %v203
  %v392 = vpop.permute.xlu0 %391
  %395 = vset.pattern.permute.xlu0 0
  %396 = vperm.xlu0 %395, %v204
  %v397 = vpop.permute.xlu0 %396
  %400 = vset.pattern.permute.xlu0 0
  %401 = vperm.xlu0 %400, %v205
  %v402 = vpop.permute.xlu0 %401
  %405 = vset.pattern.permute.xlu0 0
  %406 = vperm.xlu0 %405, %v206
  %v407 = vpop.permute.xlu0 %406
  %410 = vset.pattern.permute.xlu0 0
  %411 = vperm.xlu0 %410, %v207
  %v412 = vpop.permute.xlu0 %411
  %415 = vset.pattern.permute.xlu0 0
  %416 = vperm.xlu0 %415, %v208
  %v417 = vpop.permute.xlu0 %416
  %420 = vset.pattern.permute.xlu0 0
  %421 = vperm.xlu0 %420, %v209
  %v422 = vpop.permute.xlu0 %421
  %425 = vset.pattern.permute.xlu0 0
  %426 = vperm.xlu0 %425, %v210
  %v427 = vpop.permute.xlu0 %426
  %430 = vset.pattern.permute.xlu0 0
  %431 = vperm.xlu0 %430, %v211
  %v432 = vpop.permute.xlu0 %431
  %435 = vset.pattern.permute.xlu0 0
  %436 = vperm.xlu0 %435, %v212
  %v437 = vpop.permute.xlu0 %436
  %440 = vset.pattern.permute.xlu0 0
  %441 = vperm.xlu0 %440, %v213
  %v442 = vpop.permute.xlu0 %441
  %445 = vset.pattern.permute.xlu0 0
  %446 = vperm.xlu0 %445, %v214
  %v447 = vpop.permute.xlu0 %446
  %450 = vset.pattern.permute.xlu0 0
  %451 = vperm.xlu0 %450, %v215
  %v452 = vpop.permute.xlu0 %451
  %455 = vset.pattern.permute.xlu0 0
  %456 = vperm.xlu0 %455, %v216
  %v457 = vpop.permute.xlu0 %456
  %460 = vset.pattern.permute.xlu0 0
  %461 = vperm.xlu0 %460, %v217
  %v462 = vpop.permute.xlu0 %461
  %465 = vset.pattern.permute.xlu0 0
  %466 = vperm.xlu0 %465, %v218
  %v467 = vpop.permute.xlu0 %466
  %470 = vset.pattern.permute.xlu0 0
  %471 = vperm.xlu0 %470, %v219
  %v472 = vpop.permute.xlu0 %471
  %475 = vset.pattern.permute.xlu0 0
  %476 = vperm.xlu0 %475, %v220
  %v477 = vpop.permute.xlu0 %476
  %480 = vset.pattern.permute.xlu0 0
  %481 = vperm.xlu0 %480, %v221
  %v482 = vpop.permute.xlu0 %481
  %485 = vset.pattern.permute.xlu0 0
  %486 = vperm.xlu0 %485, %v222
  %v487 = vpop.permute.xlu0 %486
  %490 = vset.pattern.permute.xlu0 0
  %491 = vperm.xlu0 %490, %v223
  %v492 = vpop.permute.xlu0 %491
  %495 = vset.pattern.permute.xlu0 0
  %496 = vperm.xlu0 %495, %v224
  %v497 = vpop.permute.xlu0 %496
  %500 = vset.pattern.permute.xlu0 0
  %501 = vperm.xlu0 %500, %v225
  %v502 = vpop.permute.xlu0 %501
  %505 = vset.pattern.permute.xlu0 0
  %506 = vperm.xlu0 %505, %v226
  %v507 = vpop.permute.xlu0 %506
  %510 = vset.pattern.permute.xlu0 0
  %511 = vperm.xlu0 %510, %v227
  %v512 = vpop.permute.xlu0 %511
  %515 = vset.pattern.permute.xlu0 0
  %516 = vperm.xlu0 %515, %v228
  %v517 = vpop.permute.xlu0 %516
  %520 = vset.pattern.permute.xlu0 0
  %521 = vperm.xlu0 %520, %v229
  %v522 = vpop.permute.xlu0 %521
  %525 = vset.pattern.permute.xlu0 0
  %526 = vperm.xlu0 %525, %v230
  %v527 = vpop.permute.xlu0 %526
  %530 = vset.pattern.permute.xlu0 0
  %531 = vperm.xlu0 %530, %v231
  %v532 = vpop.permute.xlu0 %531
  %535 = vset.pattern.permute.xlu0 0
  %536 = vperm.xlu0 %535, %v232
  %v537 = vpop.permute.xlu0 %536
  %540 = vset.pattern.permute.xlu0 0
  %541 = vperm.xlu0 %540, %v233
  %v542 = vpop.permute.xlu0 %541
  %545 = vset.pattern.permute.xlu0 0
  %546 = vperm.xlu0 %545, %v234
  %v547 = vpop.permute.xlu0 %546
  %550 = vset.pattern.permute.xlu0 0
  %551 = vperm.xlu0 %550, %v235
  %v552 = vpop.permute.xlu0 %551
  %555 = vset.pattern.permute.xlu0 0
  %556 = vperm.xlu0 %555, %v236
  %v557 = vpop.permute.xlu0 %556
  %560 = vset.pattern.permute.xlu0 0
  %561 = vperm.xlu0 %560, %v237
  %v562 = vpop.permute.xlu0 %561
  %565 = vset.pattern.permute.xlu0 0
  %566 = vperm.xlu0 %565, %v238
  %v567 = vpop.permute.xlu0 %566
  %570 = vset.pattern.permute.xlu0 0
  %571 = vperm.xlu0 %570, %v239
  %v572 = vpop.permute.xlu0 %571
  %575 = vset.pattern.permute.xlu0 0
  %576 = vperm.xlu0 %575, %v240
  %v577 = vpop.permute.xlu0 %576
  %580 = vset.pattern.permute.xlu0 0
  %581 = vperm.xlu0 %580, %v241
  %v582 = vpop.permute.xlu0 %581
  %585 = vset.pattern.permute.xlu0 0
  %586 = vperm.xlu0 %585, %v242
  %v587 = vpop.permute.xlu0 %586
  %590 = vset.pattern.permute.xlu0 0
  %591 = vperm.xlu0 %590, %v243
  %v592 = vpop.permute.xlu0 %591
  %595 = vset.pattern.permute.xlu0 0
  %596 = vperm.xlu0 %595, %v244
  %v597 = vpop.permute.xlu0 %596
  %600 = vset.pattern.permute.xlu0 0
  %601 = vperm.xlu0 %600, %v245
  %v602 = vpop.permute.xlu0 %601
  %605 = vset.pattern.permute.xlu0 0
  %606 = vperm.xlu0 %605, %v246
  %v607 = vpop.permute.xlu0 %606
  %610 = vset.pattern.permute.xlu0 0
  %611 = vperm.xlu0 %610, %v247
  %v612 = vpop.permute.xlu0 %611
  %615 = vset.pattern.permute.xlu0 0
  %616 = vperm.xlu0 %615, %v248
  %v617 = vpop.permute.xlu0 %616
  %620 = vset.pattern.permute.xlu0 0
  %621 = vperm.xlu0 %620, %v249
  %v622 = vpop.permute.xlu0 %621
  %625 = vset.pattern.permute.xlu0 0
  %626 = vperm.xlu0 %625, %v250
  %v627 = vpop.permute.xlu0 %626
  %630 = vset.pattern.permute.xlu0 0
  %631 = vperm.xlu0 %630, %v251
  %v632 = vpop.permute.xlu0 %631
  %635 = vset.pattern.permute.xlu0 0
  %636 = vperm.xlu0 %635, %v252
  %v637 = vpop.permute.xlu0 %636
  %640 = vset.pattern.permute.xlu0 0
  %641 = vperm.xlu0 %640, %v253
  %v642 = vpop.permute.xlu0 %641
  %645 = vset.pattern.permute.xlu0 0
  %646 = vperm.xlu0 %645, %v254
  %v647 = vpop.permute.xlu0 %646
  %650 = vset.pattern.permute.xlu0 0
  %651 = vperm.xlu0 %650, %v255
  %v652 = vpop.permute.xlu0 %651
  %655 = vset.pattern.permute.xlu0 0
  %656 = vperm.xlu0 %655, %v256
  %v657 = vpop.permute.xlu0 %656
  %660 = vset.pattern.permute.xlu0 0
  %661 = vperm.xlu0 %660, %v257
  %v662 = vpop.permute.xlu0 %661
  %665 = vset.pattern.permute.xlu0 0
  %666 = vperm.xlu0 %665, %v258
  %v667 = vpop.permute.xlu0 %666
  %670 = vset.pattern.permute.xlu0 0
  %671 = vperm.xlu0 %670, %v259
  %v672 = vpop.permute.xlu0 %671
  %675 = vset.pattern.permute.xlu0 0
  %676 = vperm.xlu0 %675, %v260
  %v677 = vpop.permute.xlu0 %676
  %680 = vset.pattern.permute.xlu0 0
  %681 = vperm.xlu0 %680, %v261
  %v682 = vpop.permute.xlu0 %681
  %685 = vset.pattern.permute.xlu0 0
  %686 = vperm.xlu0 %685, %v262
  %v687 = vpop.permute.xlu0 %686
  %690 = vset.pattern.permute.xlu0 0
  %691 = vperm.xlu0 %690, %v263
  %v692 = vpop.permute.xlu0 %691
  %695 = vset.pattern.permute.xlu0 0
  %696 = vperm.xlu0 %695, %v264
  %v697 = vpop.permute.xlu0 %696
  %700 = vset.pattern.permute.xlu0 0
  %701 = vperm.xlu0 %700, %v265
  %v702 = vpop.permute.xlu0 %701
  %705 = vset.pattern.permute.xlu0 0
  %706 = vperm.xlu0 %705, %v266
  %v707 = vpop.permute.xlu0 %706
  %710 = vset.pattern.permute.xlu0 0
  %711 = vperm.xlu0 %710, %v267
  %v712 = vpop.permute.xlu0 %711
  %715 = vset.pattern.permute.xlu0 0
  %716 = vperm.xlu0 %715, %v268
  %v717 = vpop.permute.xlu0 %716
  %720 = vset.pattern.permute.xlu0 0
  %721 = vperm.xlu0 %720, %v269
  %v722 = vpop.permute.xlu0 %721
  %725 = vset.pattern.permute.xlu0 0
  %726 = vperm.xlu0 %725, %v270
  %v727 = vpop.permute.xlu0 %726
  %730 = vset.pattern.permute.xlu0 0
  %731 = vperm.xlu0 %730, %v271
  %v732 = vpop.permute.xlu0 %731
  %735 = vset.pattern.permute.xlu0 0
  %736 = vperm.xlu0 %735, %v272
  %v737 = vpop.permute.xlu0 %736
  %740 = vset.pattern.permute.xlu0 0
  %741 = vperm.xlu0 %740, %v273
  %v742 = vpop.permute.xlu0 %741
  %745 = vset.pattern.permute.xlu0 0
  %746 = vperm.xlu0 %745, %v274
  %v747 = vpop.permute.xlu0 %746
  %750 = vset.pattern.permute.xlu0 0
  %751 = vperm.xlu0 %750, %v275
  %v752 = vpop.permute.xlu0 %751
  %755 = vset.pattern.permute.xlu0 0
  %756 = vperm.xlu0 %755, %v276
  %v757 = vpop.permute.xlu0 %756
  %760 = vset.pattern.permute.xlu0 0
  %761 = vperm.xlu0 %760, %v277
  %v762 = vpop.permute.xlu0 %761
  %765 = vset.pattern.permute.xlu0 0
  %766 = vperm.xlu0 %765, %v278
  %v767 = vpop.permute.xlu0 %766
  %770 = vset.pattern.permute.xlu0 0
  %771 = vperm.xlu0 %770, %v279
  %v772 = vpop.permute.xlu0 %771
  %775 = vset.pattern.permute.xlu0 0
  %776 = vperm.xlu0 %775, %v280
  %v777 = vpop.permute.xlu0 %776
  %780 = vset.pattern.permute.xlu0 0
  %781 = vperm.xlu0 %780, %v281
  %v782 = vpop.permute.xlu0 %781
  %785 = vset.pattern.permute.xlu0 0
  %786 = vperm.xlu0 %785, %v282
  %v787 = vpop.permute.xlu0 %786
  %790 = vset.pattern.permute.xlu0 0
  %791 = vperm.xlu0 %790, %v283
  %v792 = vpop.permute.xlu0 %791
  %795 = vset.pattern.permute.xlu0 0
  %796 = vperm.xlu0 %795, %v284
  %v797 = vpop.permute.xlu0 %796
  %800 = vset.pattern.permute.xlu0 0
  %801 = vperm.xlu0 %800, %v285
  %v802 = vpop.permute.xlu0 %801
  %805 = vset.pattern.permute.xlu0 0
  %806 = vperm.xlu0 %805, %v286
  %v807 = vpop.permute.xlu0 %806
  %810 = vset.pattern.permute.xlu0 0
  %811 = vperm.xlu0 %810, %v287
  %v812 = vpop.permute.xlu0 %811
  %815 = vset.pattern.permute.xlu0 0
  %816 = vperm.xlu0 %815, %v288
  %v817 = vpop.permute.xlu0 %816
  %820 = vset.pattern.permute.xlu0 0
  %821 = vperm.xlu0 %820, %v289
  %v822 = vpop.permute.xlu0 %821
  %825 = vset.pattern.permute.xlu0 0
  %826 = vperm.xlu0 %825, %v290
  %v827 = vpop.permute.xlu0 %826
  %830 = vset.pattern.permute.xlu0 0
  %831 = vperm.xlu0 %830, %v291
  %v832 = vpop.permute.xlu0 %831
  %835 = vset.pattern.permute.xlu0 0
  %836 = vperm.xlu0 %835, %v292
  %v837 = vpop.permute.xlu0 %836
  %840 = vset.pattern.permute.xlu0 0
  %841 = vperm.xlu0 %840, %v293
  %v842 = vpop.permute.xlu0 %841
  %845 = vset.pattern.permute.xlu0 0
  %846 = vperm.xlu0 %845, %v294
  %v847 = vpop.permute.xlu0 %846
  %850 = vset.pattern.permute.xlu0 0
  %851 = vperm.xlu0 %850, %v295
  %v852 = vpop.permute.xlu0 %851
  %855 = vset.pattern.permute.xlu0 0
  %856 = vperm.xlu0 %855, %v296
  %v857 = vpop.permute.xlu0 %856
  %860 = vset.pattern.permute.xlu0 0
  %861 = vperm.xlu0 %860, %v297
  %v862 = vpop.permute.xlu0 %861
  %865 = vset.pattern.permute.xlu0 0
  %866 = vperm.xlu0 %865, %v298
  %v867 = vpop.permute.xlu0 %866
  %870 = vset.pattern.permute.xlu0 0
  %871 = vperm.xlu0 %870, %v299
  %v872 = vpop.permute.xlu0 %871
  %875 = vset.pattern.permute.xlu0 0
  %876 = vperm.xlu0 %875, %v300
  %v877 = vpop.permute.xlu0 %876
  %880 = vset.pattern.permute.xlu0 0
  %881 = vperm.xlu0 %880, %v301
  %v882 = vpop.permute.xlu0 %881
  %885 = vset.pattern.permute.xlu0 0
  %886 = vperm.xlu0 %885, %v302
  %v887 = vpop.permute.xlu0 %886
  %890 = vset.pattern.permute.xlu0 0
  %891 = vperm.xlu0 %890, %v303
  %v892 = vpop.permute.xlu0 %891
  %895 = vset.pattern.permute.xlu0 0
  %896 = vperm.xlu0 %895, %v304
  %v897 = vpop.permute.xlu0 %896
  %900 = vset.pattern.permute.xlu0 0
  %901 = vperm.xlu0 %900, %v305
  %v902 = vpop.permute.xlu0 %901
  %905 = vset.pattern.permute.xlu0 0
  %906 = vperm.xlu0 %905, %v306
  %v907 = vpop.permute.xlu0 %906
  %910 = vset.pattern.permute.xlu0 0
  %911 = vperm.xlu0 %910, %v307
  %v912 = vpop.permute.xlu0 %911
  %915 = vset.pattern.permute.xlu0 0
  %916 = vperm.xlu0 %915, %v308
  %v917 = vpop.permute.xlu0 %916
  %920 = vset.pattern.permute.xlu0 0
  %921 = vperm.xlu0 %920, %v309
  %v922 = vpop.permute.xlu0 %921
  %925 = vset.pattern.permute.xlu0 0
  %926 = vperm.xlu0 %925, %v310
  %v927 = vpop.permute.xlu0 %926
  %930 = vset.pattern.permute.xlu0 0
  %931 = vperm.xlu0 %930, %v311
  %v932 = vpop.permute.xlu0 %931
  %935 = vset.pattern.permute.xlu0 0
  %936 = vperm.xlu0 %935, %v312
  %v937 = vpop.permute.xlu0 %936
  %940 = vset.pattern.permute.xlu0 0
  %941 = vperm.xlu0 %940, %v313
  %v942 = vpop.permute.xlu0 %941
  %945 = vset.pattern.permute.xlu0 0
  %946 = vperm.xlu0 %945, %v314
  %v947 = vpop.permute.xlu0 %946
  %950 = vset.pattern.permute.xlu0 0
  %951 = vperm.xlu0 %950, %v315
  %v952 = vpop.permute.xlu0 %951
  %955 = vset.pattern.permute.xlu0 0
  %956 = vperm.xlu0 %955, %v316
  %v957 = vpop.permute.xlu0 %956
  %960 = vset.pattern.permute.xlu0 0
  %961 = vperm.xlu0 %960, %v317
  %v962 = vpop.permute.xlu0 %961
  %965 = vset.pattern.permute.xlu0 0
  %966 = vperm.xlu0 %965, %v318
  %v967 = vpop.permute.xlu0 %966
  %970 = vset.pattern.permute.xlu0 0
  %971 = vperm.xlu0 %970, %v319
  %v972 = vpop.permute.xlu0 %971
  %975 = vset.pattern.permute.xlu0 0
  %976 = vperm.xlu0 %975, %v320
  %v977 = vpop.permute.xlu0 %976
  %980 = vset.pattern.permute.xlu0 0
  %981 = vperm.xlu0 %980, %v321
  %v982 = vpop.permute.xlu0 %981
  %985 = vset.pattern.permute.xlu0 0
  %986 = vperm.xlu0 %985, %v322
  %v987 = vpop.permute.xlu0 %986
  %990 = vset.pattern.permute.xlu0 0
  %991 = vperm.xlu0 %990, %v323
  %v992 = vpop.permute.xlu0 %991
  %995 = vset.pattern.permute.xlu0 0
  %996 = vperm.xlu0 %995, %v324
  %v997 = vpop.permute.xlu0 %996
  %1000 = vset.pattern.permute.xlu0 0
  %1001 = vperm.xlu0 %1000, %v325
  %v1002 = vpop.permute.xlu0 %1001
  %1005 = vset.pattern.permute.xlu0 0
  %1006 = vperm.xlu0 %1005, %v326
  %v1007 = vpop.permute.xlu0 %1006
  %1010 = vset.pattern.permute.xlu0 0
  %1011 = vperm.xlu0 %1010, %v327
  %v1012 = vpop.permute.xlu0 %1011
  %1015 = vset.pattern.permute.xlu0 0
  %1016 = vperm.xlu0 %1015, %v328
  %v1017 = vpop.permute.xlu0 %1016
  %1020 = vset.pattern.permute.xlu0 0
  %1021 = vperm.xlu0 %1020, %v329
  %v1022 = vpop.permute.xlu0 %1021
  %1025 = vset.pattern.permute.xlu0 0
  %1026 = vperm.xlu0 %1025, %v330
  %v1027 = vpop.permute.xlu0 %1026
  %1030 = vset.pattern.permute.xlu0 0
  %1031 = vperm.xlu0 %1030, %v331
  %v1032 = vpop.permute.xlu0 %1031
  %1035 = vset.pattern.permute.xlu0 0
  %1036 = vperm.xlu0 %1035, %v332
  %v1037 = vpop.permute.xlu0 %1036
  %1040 = vset.pattern.permute.xlu0 0
  %1041 = vperm.xlu0 %1040, %v333
  %v1042 = vpop.permute.xlu0 %1041
  %1045 = vset.pattern.permute.xlu0 0
  %1046 = vperm.xlu0 %1045, %v334
  %v1047 = vpop.permute.xlu0 %1046
  %1050 = vset.pattern.permute.xlu0 0
  %1051 = vperm.xlu0 %1050, %v335
  %v1052 = vpop.permute.xlu0 %1051
  %1055 = vset.pattern.permute.xlu0 0
  %1056 = vperm.xlu0 %1055, %v336
  %v1057 = vpop.permute.xlu0 %1056
  %1060 = vset.pattern.permute.xlu0 0
  %1061 = vperm.xlu0 %1060, %v337
  %v1062 = vpop.permute.xlu0 %1061
  %1065 = vset.pattern.permute.xlu0 0
  %1066 = vperm.xlu0 %1065, %v338
  %v1067 = vpop.permute.xlu0 %1066
  %1070 = vset.pattern.permute.xlu0 0
  %1071 = vperm.xlu0 %1070, %v339
  %v1072 = vpop.permute.xlu0 %1071
  %1075 = vset.pattern.permute.xlu0 0
  %1076 = vperm.xlu0 %1075, %v340
  %v1077 = vpop.permute.xlu0 %1076
  %1080 = vset.pattern.permute.xlu0 0
  %1081 = vperm.xlu0 %1080, %v341
  %v1082 = vpop.permute.xlu0 %1081
  %1085 = vset.pattern.permute.xlu0 0
  %1086 = vperm.xlu0 %1085, %v342
  %v1087 = vpop.permute.xlu0 %1086
  %1090 = vset.pattern.permute.xlu0 0
  %1091 = vperm.xlu0 %1090, %v343
  %v1092 = vpop.permute.xlu0 %1091
  %1095 = vset.pattern.permute.xlu0 0
  %1096 = vperm.xlu0 %1095, %v344
  %v1097 = vpop.permute.xlu0 %1096
  %1100 = vset.pattern.permute.xlu0 0
  %1101 = vperm.xlu0 %1100, %v345
  %v1102 = vpop.permute.xlu0 %1101
  %1105 = vset.pattern.permute.xlu0 0
  %1106 = vperm.xlu0 %1105, %v346
  %v1107 = vpop.permute.xlu0 %1106
  %1110 = vset.pattern.permute.xlu0 0
  %1111 = vperm.xlu0 %1110, %v347
  %v1112 = vpop.permute.xlu0 %1111
  %1115 = vset.pattern.permute.xlu0 0
  %1116 = vperm.xlu0 %1115, %v348
  %v1117 = vpop.permute.xlu0 %1116
  %1120 = vset.pattern.permute.xlu0 0
  %1121 = vperm.xlu0 %1120, %v349
  %v1122 = vpop.permute.xlu0 %1121
  %1125 = vset.pattern.permute.xlu0 0
  %1126 = vperm.xlu0 %1125, %v350
  %v1127 = vpop.permute.xlu0 %1126
  %1130 = vset.pattern.permute.xlu0 0
  %1131 = vperm.xlu0 %1130, %v351
  %v1132 = vpop.permute.xlu0 %1131
  %1135 = vset.pattern.permute.xlu0 0
  %1136 = vperm.xlu0 %1135, %v352
  %v1137 = vpop.permute.xlu0 %1136
  %1140 = vset.pattern.permute.xlu0 0
  %1141 = vperm.xlu0 %1140, %v353
  %v1142 = vpop.permute.xlu0 %1141
  %1145 = vset.pattern.permute.xlu0 0
  %1146 = vperm.xlu0 %1145, %v354
  %v1147 = vpop.permute.xlu0 %1146
  %1150 = vset.pattern.permute.xlu0 0
  %1151 = vperm.xlu0 %1150, %v355
  %v1152 = vpop.permute.xlu0 %1151
  %1155 = vset.pattern.permute.xlu0 0
  %1156 = vperm.xlu0 %1155, %v356
  %v1157 = vpop.permute.xlu0 %1156
  %1160 = vset.pattern.permute.xlu0 0
  %1161 = vperm.xlu0 %1160, %v357
  %v1162 = vpop.permute.xlu0 %1161
  %1165 = vset.pattern.permute.xlu0 0
  %1166 = vperm.xlu0 %1165, %v358
  %v1167 = vpop.permute.xlu0 %1166
  %1170 = vset.pattern.permute.xlu0 0
  %1171 = vperm.xlu0 %1170, %v359
  %v1172 = vpop.permute.xlu0 %1171
  %1175 = vset.pattern.permute.xlu0 0
  %1176 = vperm.xlu0 %1175, %v360
  %v1177 = vpop.permute.xlu0 %1176
  %1180 = vset.pattern.permute.xlu0 0
  %1181 = vperm.xlu0 %1180, %v361
  %v1182 = vpop.permute.xlu0 %1181
  %1185 = vset.pattern.permute.xlu0 0
  %1186 = vperm.xlu0 %1185, %v362
  %v1187 = vpop.permute.xlu0 %1186
  %1190 = vset.pattern.permute.xlu0 0
  %1191 = vperm.xlu0 %1190, %v363
  %v1192 = vpop.permute.xlu0 %1191
  %1195 = vset.pattern.permute.xlu0 0
  %1196 = vperm.xlu0 %1195, %v364
  %v1197 = vpop.permute.xlu0 %1196
  %1200 = vset.pattern.permute.xlu0 0
  %1201 = vperm.xlu0 %1200, %v365
  %v1202 = vpop.permute.xlu0 %1201
  %1205 = vset.pattern.permute.xlu0 0
  %1206 = vperm.xlu0 %1205, %v366
  %v1207 = vpop.permute.xlu0 %1206
  %1210 = vset.pattern.permute.xlu0 0
  %1211 = vperm.xlu0 %1210, %v367
  %v1212 = vpop.permute.xlu0 %1211
  %1215 = vset.pattern.permute.xlu0 0
  %1216 = vperm.xlu0 %1215, %v368
  %v1217 = vpop.permute.xlu0 %1216
  %1220 = vset.pattern.permute.xlu0 0
  %1221 = vperm.xlu0 %1220, %v369
  %v1222 = vpop.permute.xlu0 %1221
  %1225 = vset.pattern.permute.xlu0 0
  %1226 = vperm.xlu0 %1225, %v370
  %v1227 = vpop.permute.xlu0 %1226
  %1230 = vset.pattern.permute.xlu0 0
  %1231 = vperm.xlu0 %1230, %v371
  %v1232 = vpop.permute.xlu0 %1231
  %1235 = vset.pattern.permute.xlu0 0
  %1236 = vperm.xlu0 %1235, %v372
  %v1237 = vpop.permute.xlu0 %1236
  %1240 = vset.pattern.permute.xlu0 0
  %1241 = vperm.xlu0 %1240, %v373
  %v1242 = vpop.permute.xlu0 %1241
  %1245 = vset.pattern.permute.xlu0 0
  %1246 = vperm.xlu0 %1245, %v374
  %v1247 = vpop.permute.xlu0 %1246
  %1250 = vset.pattern.permute.xlu0 0
  %1251 = vperm.xlu0 %1250, %v375
  %v1252 = vpop.permute.xlu0 %1251
  %1255 = vset.pattern.permute.xlu0 0
  %1256 = vperm.xlu0 %1255, %v376
  %v1257 = vpop.permute.xlu0 %1256
  %1260 = vset.pattern.permute.xlu0 0
  %1261 = vperm.xlu0 %1260, %v377
  %v1262 = vpop.permute.xlu0 %1261
  %1265 = vset.pattern.permute.xlu0 0
  %1266 = vperm.xlu0 %1265, %v378
  %v1267 = vpop.permute.xlu0 %1266
  %1270 = vset.pattern.permute.xlu0 0
  %1271 = vperm.xlu0 %1270, %v379
  %v1272 = vpop.permute.xlu0 %1271
  %1275 = vset.pattern.permute.xlu0 0
  %1276 = vperm.xlu0 %1275, %v380
  %v1277 = vpop.permute.xlu0 %1276
  %1280 = vset.pattern.permute.xlu0 0
  %1281 = vperm.xlu0 %1280, %v381
  %v1282 = vpop.permute.xlu0 %1281
  %1285 = vset.pattern.permute.xlu0 0
  %1286 = vperm.xlu0 %1285, %v382
  %v1287 = vpop.permute.xlu0 %1286
  %1290 = vset.pattern.permute.xlu0 0
  %1291 = vperm.xlu0 %1290, %v383
  %v1292 = vpop.permute.xlu0 %1291
  %1295 = vset.pattern.permute.xlu0 0
  %1296 = vperm.xlu0 %1295, %v384
  %v1297 = vpop.permute.xlu0 %1296
  %1300 = vset.pattern.permute.xlu0 0
  %1301 = vperm.xlu0 %1300, %v385
  %v1302 = vpop.permute.xlu0 %1301
  %1305 = vset.pattern.permute.xlu0 0
  %1306 = vperm.xlu0 %1305, %v386
  %v1307 = vpop.permute.xlu0 %1306
  %1310 = vset.pattern.permute.xlu0 0
  %1311 = vperm.xlu0 %1310, %v387
  %v1312 = vpop.permute.xlu0 %1311
  %1315 = vset.pattern.permute.xlu0 0
  %1316 = vperm.xlu0 %1315, %v388
  %v1317 = vpop.permute.xlu0 %1316
  %v1319 = vmul.f32 %v17, %v392
  %v1320 = vmul.f32 %v18, %v397
  %v1321 = vmul.f32 %v19, %v402
  %v1322 = vmul.f32 %v20, %v407
  %v1323 = vmul.f32 %v21, %v412
  %v1324 = vmul.f32 %v22, %v417
  %v1325 = vmul.f32 %v23, %v422
  %v1326 = vmul.f32 %v24, %v427
  %v1327 = vmul.f32 %v25, %v432
  %v1328 = vmul.f32 %v26, %v437
  %v1329 = vmul.f32 %v27, %v442
  %v1330 = vmul.f32 %v28, %v447
  %v1331 = vmul.f32 %v29, %v452
  %v1332 = vmul.f32 %v30, %v457
  %v1333 = vmul.f32 %v31, %v462
  %v1334 = vmul.f32 %v32, %v467
  %v1335 = vmul.f32 %v33, %v472
  %v1336 = vmul.f32 %v34, %v477
  %v1337 = vmul.f32 %v35, %v482
  %v1338 = vmul.f32 %v36, %v487
  %v1339 = vmul.f32 %v37, %v492
  %v1340 = vmul.f32 %v38, %v497
  %v1341 = vmul.f32 %v39, %v502
  %v1342 = vmul.f32 %v40, %v507
  %v1343 = vmul.f32 %v41, %v512
  %v1344 = vmul.f32 %v42, %v517
  %v1345 = vmul.f32 %v43, %v522
  %v1346 = vmul.f32 %v44, %v527
  %v1347 = vmul.f32 %v45, %v532
  %v1348 = vmul.f32 %v46, %v537
  %v1349 = vmul.f32 %v47, %v542
  %v1350 = vmul.f32 %v48, %v547
  %v1351 = vmul.f32 %v49, %v552
  %v1352 = vmul.f32 %v50, %v557
  %v1353 = vmul.f32 %v51, %v562
  %v1354 = vmul.f32 %v52, %v567
  %v1355 = vmul.f32 %v53, %v572
  %v1356 = vmul.f32 %v54, %v577
  %v1357 = vmul.f32 %v55, %v582
  %v1358 = vmul.f32 %v56, %v587
  %v1359 = vmul.f32 %v57, %v592
  %v1360 = vmul.f32 %v58, %v597
  %v1361 = vmul.f32 %v59, %v602
  %v1362 = vmul.f32 %v60, %v607
  %v1363 = vmul.f32 %v61, %v612
  %v1364 = vmul.f32 %v62, %v617
  %v1365 = vmul.f32 %v63, %v622
  %v1366 = vmul.f32 %v64, %v627
  %v1367 = vmul.f32 %v65, %v632
  %v1368 = vmul.f32 %v66, %v637
  %v1369 = vmul.f32 %v67, %v642
  %v1370 = vmul.f32 %v68, %v647
  %v1371 = vmul.f32 %v69, %v652
  %v1372 = vmul.f32 %v70, %v657
  %v1373 = vmul.f32 %v71, %v662
  %v1374 = vmul.f32 %v72, %v667
  %v1375 = vmul.f32 %v73, %v672
  %v1376 = vmul.f32 %v74, %v677
  %v1377 = vmul.f32 %v75, %v682
  %v1378 = vmul.f32 %v76, %v687
  %v1379 = vmul.f32 %v77, %v692
  %v1380 = vmul.f32 %v78, %v697
  %v1381 = vmul.f32 %v79, %v702
  %v1382 = vmul.f32 %v80, %v707
  %v1383 = vmul.f32 %v81, %v712
  %v1384 = vmul.f32 %v82, %v717
  %v1385 = vmul.f32 %v83, %v722
  %v1386 = vmul.f32 %v84, %v727
  %v1387 = vmul.f32 %v85, %v732
  %v1388 = vmul.f32 %v86, %v737
  %v1389 = vmul.f32 %v87, %v742
  %v1390 = vmul.f32 %v88, %v747
  %v1391 = vmul.f32 %v89, %v752
  %v1392 = vmul.f32 %v90, %v757
  %v1393 = vmul.f32 %v91, %v762
  %v1394 = vmul.f32 %v92, %v767
  %v1395 = vmul.f32 %v93, %v772
  %v1396 = vmul.f32 %v94, %v777
  %v1397 = vmul.f32 %v95, %v782
  %v1398 = vmul.f32 %v96, %v787
  %v1399 = vmul.f32 %v97, %v792
  %v1400 = vmul.f32 %v98, %v797
  %v1401 = vmul.f32 %v99, %v802
  %v1402 = vmul.f32 %v100, %v807
  %v1403 = vmul.f32 %v101, %v812
  %v1404 = vmul.f32 %v102, %v817
  %v1405 = vmul.f32 %v103, %v822
  %v1406 = vmul.f32 %v104, %v827
  %v1407 = vmul.f32 %v105, %v832
  %v1408 = vmul.f32 %v106, %v837
  %v1409 = vmul.f32 %v107, %v842
  %v1410 = vmul.f32 %v108, %v847
  %v1411 = vmul.f32 %v109, %v852
  %v1412 = vmul.f32 %v110, %v857
  %v1413 = vmul.f32 %v111, %v862
  %v1414 = vmul.f32 %v112, %v867
  %v1415 = vmul.f32 %v113, %v872
  %v1416 = vmul.f32 %v114, %v877
  %v1417 = vmul.f32 %v115, %v882
  %v1418 = vmul.f32 %v116, %v887
  %v1419 = vmul.f32 %v117, %v892
  %v1420 = vmul.f32 %v118, %v897
  %v1421 = vmul.f32 %v119, %v902
  %v1422 = vmul.f32 %v120, %v907
  %v1423 = vmul.f32 %v121, %v912
  %v1424 = vmul.f32 %v122, %v917
  %v1425 = vmul.f32 %v123, %v922
  %v1426 = vmul.f32 %v124, %v927
  %v1427 = vmul.f32 %v125, %v932
  %v1428 = vmul.f32 %v126, %v937
  %v1429 = vmul.f32 %v127, %v942
  %v1430 = vmul.f32 %v128, %v947
  %v1431 = vmul.f32 %v129, %v952
  %v1432 = vmul.f32 %v130, %v957
  %v1433 = vmul.f32 %v131, %v962
  %v1434 = vmul.f32 %v132, %v967
  %v1435 = vmul.f32 %v133, %v972
  %v1436 = vmul.f32 %v134, %v977
  %v1437 = vmul.f32 %v135, %v982
  %v1438 = vmul.f32 %v136, %v987
  %v1439 = vmul.f32 %v137, %v992
  %v1440 = vmul.f32 %v138, %v997
  %v1441 = vmul.f32 %v139, %v1002
  %v1442 = vmul.f32 %v140, %v1007
  %v1443 = vmul.f32 %v141, %v1012
  %v1444 = vmul.f32 %v142, %v1017
  %v1445 = vmul.f32 %v143, %v1022
  %v1446 = vmul.f32 %v144, %v1027
  %v1447 = vmul.f32 %v145, %v1032
  %v1448 = vmul.f32 %v146, %v1037
  %v1449 = vmul.f32 %v147, %v1042
  %v1450 = vmul.f32 %v148, %v1047
  %v1451 = vmul.f32 %v149, %v1052
  %v1452 = vmul.f32 %v150, %v1057
  %v1453 = vmul.f32 %v151, %v1062
  %v1454 = vmul.f32 %v152, %v1067
  %v1455 = vmul.f32 %v153, %v1072
  %v1456 = vmul.f32 %v154, %v1077
  %v1457 = vmul.f32 %v155, %v1082
  %v1458 = vmul.f32 %v156, %v1087
  %v1459 = vmul.f32 %v157, %v1092
  %v1460 = vmul.f32 %v158, %v1097
  %v1461 = vmul.f32 %v159, %v1102
  %v1462 = vmul.f32 %v160, %v1107
  %v1463 = vmul.f32 %v161, %v1112
  %v1464 = vmul.f32 %v162, %v1117
  %v1465 = vmul.f32 %v163, %v1122
  %v1466 = vmul.f32 %v164, %v1127
  %v1467 = vmul.f32 %v165, %v1132
  %v1468 = vmul.f32 %v166, %v1137
  %v1469 = vmul.f32 %v167, %v1142
  %v1470 = vmul.f32 %v168, %v1147
  %v1471 = vmul.f32 %v169, %v1152
  %v1472 = vmul.f32 %v170, %v1157
  %v1473 = vmul.f32 %v171, %v1162
  %v1474 = vmul.f32 %v172, %v1167
  %v1475 = vmul.f32 %v173, %v1172
  %v1476 = vmul.f32 %v174, %v1177
  %v1477 = vmul.f32 %v175, %v1182
  %v1478 = vmul.f32 %v176, %v1187
  %v1479 = vmul.f32 %v177, %v1192
  %v1480 = vmul.f32 %v178, %v1197
  %v1481 = vmul.f32 %v179, %v1202
  %v1482 = vmul.f32 %v180, %v1207
  %v1483 = vmul.f32 %v181, %v1212
  %v1484 = vmul.f32 %v182, %v1217
  %v1485 = vmul.f32 %v183, %v1222
  %v1486 = vmul.f32 %v184, %v1227
  %v1487 = vmul.f32 %v185, %v1232
  %v1488 = vmul.f32 %v186, %v1237
  %v1489 = vmul.f32 %v187, %v1242
  %v1490 = vmul.f32 %v188, %v1247
  %v1491 = vmul.f32 %v189, %v1252
  %v1492 = vmul.f32 %v190, %v1257
  %v1493 = vmul.f32 %v191, %v1262
  %v1494 = vmul.f32 %v192, %v1267
  %v1495 = vmul.f32 %v193, %v1272
  %v1496 = vmul.f32 %v194, %v1277
  %v1497 = vmul.f32 %v195, %v1282
  %v1498 = vmul.f32 %v196, %v1287
  %v1499 = vmul.f32 %v197, %v1292
  %v1500 = vmul.f32 %v198, %v1297
  %v1501 = vmul.f32 %v199, %v1302
  %v1502 = vmul.f32 %v200, %v1307
  %v1503 = vmul.f32 %v201, %v1312
  %v1504 = vmul.f32 %v202, %v1317
  %v1505 = vld [vmem:[%s2] sm:$0xff]
  %v1506 = vld [vmem:[%s2 + $0x8] sm:$0xff]
  %v1507 = vld [vmem:[%s2 + $0x10] sm:$0xff]
  %v1508 = vld [vmem:[%s2 + $0x18] sm:$0xff]
  %v1509 = vld [vmem:[%s2 + $0x20] sm:$0xff]
  %v1510 = vld [vmem:[%s2 + $0x28] sm:$0xff]
  %v1511 = vld [vmem:[%s2 + $0x30] sm:$0xff]
  %v1512 = vld [vmem:[%s2 + $0x38] sm:$0xff]
  %v1513 = vld [vmem:[%s2 + $0x40] sm:$0xff]
  %v1514 = vld [vmem:[%s2 + $0x48] sm:$0xff]
  %v1515 = vld [vmem:[%s2 + $0x50] sm:$0xff]
  %v1516 = vld [vmem:[%s2 + $0x58] sm:$0xff]
  %v1517 = vld [vmem:[%s2 + $0x60] sm:$0xff]
  %v1518 = vld [vmem:[%s2 + $0x68] sm:$0xff]
  %v1519 = vld [vmem:[%s2 + $0x70] sm:$0xff]
  %v1520 = vld [vmem:[%s2 + $0x78] sm:$0xff]
  %v1521 = vld [vmem:[%s2 + $0x80] sm:$0xff]
  %v1522 = vld [vmem:[%s2 + $0x88] sm:$0xff]
  %v1523 = vld [vmem:[%s2 + $0x90] sm:$0xff]
  %v1524 = vld [vmem:[%s2 + $0x98] sm:$0xff]
  %v1525 = vld [vmem:[%s2 + $0xa0] sm:$0xff]
  %v1526 = vld [vmem:[%s2 + $0xa8] sm:$0xff]
  %v1527 = vld [vmem:[%s2 + $0xb0] sm:$0xff]
  %v1528 = vld [vmem:[%s2 + $0xb8] sm:$0xff]
  %v1529 = vld [vmem:[%s2 + $0xc0] sm:$0xff]
  %v1530 = vld [vmem:[%s2 + $0xc8] sm:$0xff]
  %v1531 = vld [vmem:[%s2 + $0xd0] sm:$0xff]
  %v1532 = vld [vmem:[%s2 + $0xd8] sm:$0xff]
  %v1533 = vld [vmem:[%s2 + $0xe0] sm:$0xff]
  %v1534 = vld [vmem:[%s2 + $0xe8] sm:$0xff]
  %v1535 = vld [vmem:[%s2 + $0xf0] sm:$0xff]
  %v1536 = vld [vmem:[%s2 + $0xf8] sm:$0xff]
  %v1537 = vld [vmem:[%s2 + $0x100] sm:$0xff]
  %v1538 = vld [vmem:[%s2 + $0x108] sm:$0xff]
  %v1539 = vld [vmem:[%s2 + $0x110] sm:$0xff]
  %v1540 = vld [vmem:[%s2 + $0x118] sm:$0xff]
  %v1541 = vld [vmem:[%s2 + $0x120] sm:$0xff]
  %v1542 = vld [vmem:[%s2 + $0x128] sm:$0xff]
  %v1543 = vld [vmem:[%s2 + $0x130] sm:$0xff]
  %v1544 = vld [vmem:[%s2 + $0x138] sm:$0xff]
  %v1545 = vld [vmem:[%s2 + $0x140] sm:$0xff]
  %v1546 = vld [vmem:[%s2 + $0x148] sm:$0xff]
  %v1547 = vld [vmem:[%s2 + $0x150] sm:$0xff]
  %v1548 = vld [vmem:[%s2 + $0x158] sm:$0xff]
  %v1549 = vld [vmem:[%s2 + $0x160] sm:$0xff]
  %v1550 = vld [vmem:[%s2 + $0x168] sm:$0xff]
  %v1551 = vld [vmem:[%s2 + $0x170] sm:$0xff]
  %v1552 = vld [vmem:[%s2 + $0x178] sm:$0xff]
  %v1553 = vld [vmem:[%s2 + $0x180] sm:$0xff]
  %v1554 = vld [vmem:[%s2 + $0x188] sm:$0xff]
  %v1555 = vld [vmem:[%s2 + $0x190] sm:$0xff]
  %v1556 = vld [vmem:[%s2 + $0x198] sm:$0xff]
  %v1557 = vld [vmem:[%s2 + $0x1a0] sm:$0xff]
  %v1558 = vld [vmem:[%s2 + $0x1a8] sm:$0xff]
  %v1559 = vld [vmem:[%s2 + $0x1b0] sm:$0xff]
  %v1560 = vld [vmem:[%s2 + $0x1b8] sm:$0xff]
  %v1561 = vld [vmem:[%s2 + $0x1c0] sm:$0xff]
  %v1562 = vld [vmem:[%s2 + $0x1c8] sm:$0xff]
  %v1563 = vld [vmem:[%s2 + $0x1d0] sm:$0xff]
  %v1564 = vld [vmem:[%s2 + $0x1d8] sm:$0xff]
  %v1565 = vld [vmem:[%s2 + $0x1e0] sm:$0xff]
  %v1566 = vld [vmem:[%s2 + $0x1e8] sm:$0xff]
  %v1567 = vld [vmem:[%s2 + $0x1f0] sm:$0xff]
  %v1568 = vld [vmem:[%s2 + $0x1f8] sm:$0xff]
  %v1569 = vld [vmem:[%s2 + $0x200] sm:$0xff]
  %v1570 = vld [vmem:[%s2 + $0x208] sm:$0xff]
  %v1571 = vld [vmem:[%s2 + $0x210] sm:$0xff]
  %v1572 = vld [vmem:[%s2 + $0x218] sm:$0xff]
  %v1573 = vld [vmem:[%s2 + $0x220] sm:$0xff]
  %v1574 = vld [vmem:[%s2 + $0x228] sm:$0xff]
  %v1575 = vld [vmem:[%s2 + $0x230] sm:$0xff]
  %v1576 = vld [vmem:[%s2 + $0x238] sm:$0xff]
  %v1577 = vld [vmem:[%s2 + $0x240] sm:$0xff]
  %v1578 = vld [vmem:[%s2 + $0x248] sm:$0xff]
  %v1579 = vld [vmem:[%s2 + $0x250] sm:$0xff]
  %v1580 = vld [vmem:[%s2 + $0x258] sm:$0xff]
  %v1581 = vld [vmem:[%s2 + $0x260] sm:$0xff]
  %v1582 = vld [vmem:[%s2 + $0x268] sm:$0xff]
  %v1583 = vld [vmem:[%s2 + $0x270] sm:$0xff]
  %v1584 = vld [vmem:[%s2 + $0x278] sm:$0xff]
  %v1585 = vld [vmem:[%s2 + $0x280] sm:$0xff]
  %v1586 = vld [vmem:[%s2 + $0x288] sm:$0xff]
  %v1587 = vld [vmem:[%s2 + $0x290] sm:$0xff]
  %v1588 = vld [vmem:[%s2 + $0x298] sm:$0xff]
  %v1589 = vld [vmem:[%s2 + $0x2a0] sm:$0xff]
  %v1590 = vld [vmem:[%s2 + $0x2a8] sm:$0xff]
  %v1591 = vld [vmem:[%s2 + $0x2b0] sm:$0xff]
  %v1592 = vld [vmem:[%s2 + $0x2b8] sm:$0xff]
  %v1593 = vld [vmem:[%s2 + $0x2c0] sm:$0xff]
  %v1594 = vld [vmem:[%s2 + $0x2c8] sm:$0xff]
  %v1595 = vld [vmem:[%s2 + $0x2d0] sm:$0xff]
  %v1596 = vld [vmem:[%s2 + $0x2d8] sm:$0xff]
  %v1597 = vld [vmem:[%s2 + $0x2e0] sm:$0xff]
  %v1598 = vld [vmem:[%s2 + $0x2e8] sm:$0xff]
  %v1599 = vld [vmem:[%s2 + $0x2f0] sm:$0xff]
  %v1600 = vld [vmem:[%s2 + $0x2f8] sm:$0xff]
  %v1601 = vld [vmem:[%s2 + $0x300] sm:$0xff]
  %v1602 = vld [vmem:[%s2 + $0x308] sm:$0xff]
  %v1603 = vld [vmem:[%s2 + $0x310] sm:$0xff]
  %v1604 = vld [vmem:[%s2 + $0x318] sm:$0xff]
  %v1605 = vld [vmem:[%s2 + $0x320] sm:$0xff]
  %v1606 = vld [vmem:[%s2 + $0x328] sm:$0xff]
  %v1607 = vld [vmem:[%s2 + $0x330] sm:$0xff]
  %v1608 = vld [vmem:[%s2 + $0x338] sm:$0xff]
  %v1609 = vld [vmem:[%s2 + $0x340] sm:$0xff]
  %v1610 = vld [vmem:[%s2 + $0x348] sm:$0xff]
  %v1611 = vld [vmem:[%s2 + $0x350] sm:$0xff]
  %v1612 = vld [vmem:[%s2 + $0x358] sm:$0xff]
  %v1613 = vld [vmem:[%s2 + $0x360] sm:$0xff]
  %v1614 = vld [vmem:[%s2 + $0x368] sm:$0xff]
  %v1615 = vld [vmem:[%s2 + $0x370] sm:$0xff]
  %v1616 = vld [vmem:[%s2 + $0x378] sm:$0xff]
  %v1617 = vld [vmem:[%s2 + $0x380] sm:$0xff]
  %v1618 = vld [vmem:[%s2 + $0x388] sm:$0xff]
  %v1619 = vld [vmem:[%s2 + $0x390] sm:$0xff]
  %v1620 = vld [vmem:[%s2 + $0x398] sm:$0xff]
  %v1621 = vld [vmem:[%s2 + $0x3a0] sm:$0xff]
  %v1622 = vld [vmem:[%s2 + $0x3a8] sm:$0xff]
  %v1623 = vld [vmem:[%s2 + $0x3b0] sm:$0xff]
  %v1624 = vld [vmem:[%s2 + $0x3b8] sm:$0xff]
  %v1625 = vld [vmem:[%s2 + $0x3c0] sm:$0xff]
  %v1626 = vld [vmem:[%s2 + $0x3c8] sm:$0xff]
  %v1627 = vld [vmem:[%s2 + $0x3d0] sm:$0xff]
  %v1628 = vld [vmem:[%s2 + $0x3d8] sm:$0xff]
  %v1629 = vld [vmem:[%s2 + $0x3e0] sm:$0xff]
  %v1630 = vld [vmem:[%s2 + $0x3e8] sm:$0xff]
  %v1631 = vld [vmem:[%s2 + $0x3f0] sm:$0xff]
  %v1632 = vld [vmem:[%s2 + $0x3f8] sm:$0xff]
  %v1633 = vld [vmem:[%s2 + $0x400] sm:$0xff]
  %v1634 = vld [vmem:[%s2 + $0x408] sm:$0xff]
  %v1635 = vld [vmem:[%s2 + $0x410] sm:$0xff]
  %v1636 = vld [vmem:[%s2 + $0x418] sm:$0xff]
  %v1637 = vld [vmem:[%s2 + $0x420] sm:$0xff]
  %v1638 = vld [vmem:[%s2 + $0x428] sm:$0xff]
  %v1639 = vld [vmem:[%s2 + $0x430] sm:$0xff]
  %v1640 = vld [vmem:[%s2 + $0x438] sm:$0xff]
  %v1641 = vld [vmem:[%s2 + $0x440] sm:$0xff]
  %v1642 = vld [vmem:[%s2 + $0x448] sm:$0xff]
  %v1643 = vld [vmem:[%s2 + $0x450] sm:$0xff]
  %v1644 = vld [vmem:[%s2 + $0x458] sm:$0xff]
  %v1645 = vld [vmem:[%s2 + $0x460] sm:$0xff]
  %v1646 = vld [vmem:[%s2 + $0x468] sm:$0xff]
  %v1647 = vld [vmem:[%s2 + $0x470] sm:$0xff]
  %v1648 = vld [vmem:[%s2 + $0x478] sm:$0xff]
  %v1649 = vld [vmem:[%s2 + $0x480] sm:$0xff]
  %v1650 = vld [vmem:[%s2 + $0x488] sm:$0xff]
  %v1651 = vld [vmem:[%s2 + $0x490] sm:$0xff]
  %v1652 = vld [vmem:[%s2 + $0x498] sm:$0xff]
  %v1653 = vld [vmem:[%s2 + $0x4a0] sm:$0xff]
  %v1654 = vld [vmem:[%s2 + $0x4a8] sm:$0xff]
  %v1655 = vld [vmem:[%s2 + $0x4b0] sm:$0xff]
  %v1656 = vld [vmem:[%s2 + $0x4b8] sm:$0xff]
  %v1657 = vld [vmem:[%s2 + $0x4c0] sm:$0xff]
  %v1658 = vld [vmem:[%s2 + $0x4c8] sm:$0xff]
  %v1659 = vld [vmem:[%s2 + $0x4d0] sm:$0xff]
  %v1660 = vld [vmem:[%s2 + $0x4d8] sm:$0xff]
  %v1661 = vld [vmem:[%s2 + $0x4e0] sm:$0xff]
  %v1662 = vld [vmem:[%s2 + $0x4e8] sm:$0xff]
  %v1663 = vld [vmem:[%s2 + $0x4f0] sm:$0xff]
  %v1664 = vld [vmem:[%s2 + $0x4f8] sm:$0xff]
  %v1665 = vld [vmem:[%s2 + $0x500] sm:$0xff]
  %v1666 = vld [vmem:[%s2 + $0x508] sm:$0xff]
  %v1667 = vld [vmem:[%s2 + $0x510] sm:$0xff]
  %v1668 = vld [vmem:[%s2 + $0x518] sm:$0xff]
  %v1669 = vld [vmem:[%s2 + $0x520] sm:$0xff]
  %v1670 = vld [vmem:[%s2 + $0x528] sm:$0xff]
  %v1671 = vld [vmem:[%s2 + $0x530] sm:$0xff]
  %v1672 = vld [vmem:[%s2 + $0x538] sm:$0xff]
  %v1673 = vld [vmem:[%s2 + $0x540] sm:$0xff]
  %v1674 = vld [vmem:[%s2 + $0x548] sm:$0xff]
  %v1675 = vld [vmem:[%s2 + $0x550] sm:$0xff]
  %v1676 = vld [vmem:[%s2 + $0x558] sm:$0xff]
  %v1677 = vld [vmem:[%s2 + $0x560] sm:$0xff]
  %v1678 = vld [vmem:[%s2 + $0x568] sm:$0xff]
  %v1679 = vld [vmem:[%s2 + $0x570] sm:$0xff]
  %v1680 = vld [vmem:[%s2 + $0x578] sm:$0xff]
  %v1681 = vld [vmem:[%s2 + $0x580] sm:$0xff]
  %v1682 = vld [vmem:[%s2 + $0x588] sm:$0xff]
  %v1683 = vld [vmem:[%s2 + $0x590] sm:$0xff]
  %v1684 = vld [vmem:[%s2 + $0x598] sm:$0xff]
  %v1685 = vld [vmem:[%s2 + $0x5a0] sm:$0xff]
  %v1686 = vld [vmem:[%s2 + $0x5a8] sm:$0xff]
  %v1687 = vld [vmem:[%s2 + $0x5b0] sm:$0xff]
  %v1688 = vld [vmem:[%s2 + $0x5b8] sm:$0xff]
  %v1689 = vld [vmem:[%s2 + $0x5c0] sm:$0xff]
  %v1690 = vld [vmem:[%s2 + $0x5c8] sm:$0xff]
  %1692 = vset.pattern.permute.xlu0 0
  %1693 = vperm.xlu0 %1692, %v1505
  %v1694 = vpop.permute.xlu0 %1693
  %1697 = vset.pattern.permute.xlu0 0
  %1698 = vperm.xlu0 %1697, %v1506
  %v1699 = vpop.permute.xlu0 %1698
  %1702 = vset.pattern.permute.xlu0 0
  %1703 = vperm.xlu0 %1702, %v1507
  %v1704 = vpop.permute.xlu0 %1703
  %1707 = vset.pattern.permute.xlu0 0
  %1708 = vperm.xlu0 %1707, %v1508
  %v1709 = vpop.permute.xlu0 %1708
  %1712 = vset.pattern.permute.xlu0 0
  %1713 = vperm.xlu0 %1712, %v1509
  %v1714 = vpop.permute.xlu0 %1713
  %1717 = vset.pattern.permute.xlu0 0
  %1718 = vperm.xlu0 %1717, %v1510
  %v1719 = vpop.permute.xlu0 %1718
  %1722 = vset.pattern.permute.xlu0 0
  %1723 = vperm.xlu0 %1722, %v1511
  %v1724 = vpop.permute.xlu0 %1723
  %1727 = vset.pattern.permute.xlu0 0
  %1728 = vperm.xlu0 %1727, %v1512
  %v1729 = vpop.permute.xlu0 %1728
  %1732 = vset.pattern.permute.xlu0 0
  %1733 = vperm.xlu0 %1732, %v1513
  %v1734 = vpop.permute.xlu0 %1733
  %1737 = vset.pattern.permute.xlu0 0
  %1738 = vperm.xlu0 %1737, %v1514
  %v1739 = vpop.permute.xlu0 %1738
  %1742 = vset.pattern.permute.xlu0 0
  %1743 = vperm.xlu0 %1742, %v1515
  %v1744 = vpop.permute.xlu0 %1743
  %1747 = vset.pattern.permute.xlu0 0
  %1748 = vperm.xlu0 %1747, %v1516
  %v1749 = vpop.permute.xlu0 %1748
  %1752 = vset.pattern.permute.xlu0 0
  %1753 = vperm.xlu0 %1752, %v1517
  %v1754 = vpop.permute.xlu0 %1753
  %1757 = vset.pattern.permute.xlu0 0
  %1758 = vperm.xlu0 %1757, %v1518
  %v1759 = vpop.permute.xlu0 %1758
  %1762 = vset.pattern.permute.xlu0 0
  %1763 = vperm.xlu0 %1762, %v1519
  %v1764 = vpop.permute.xlu0 %1763
  %1767 = vset.pattern.permute.xlu0 0
  %1768 = vperm.xlu0 %1767, %v1520
  %v1769 = vpop.permute.xlu0 %1768
  %1772 = vset.pattern.permute.xlu0 0
  %1773 = vperm.xlu0 %1772, %v1521
  %v1774 = vpop.permute.xlu0 %1773
  %1777 = vset.pattern.permute.xlu0 0
  %1778 = vperm.xlu0 %1777, %v1522
  %v1779 = vpop.permute.xlu0 %1778
  %1782 = vset.pattern.permute.xlu0 0
  %1783 = vperm.xlu0 %1782, %v1523
  %v1784 = vpop.permute.xlu0 %1783
  %1787 = vset.pattern.permute.xlu0 0
  %1788 = vperm.xlu0 %1787, %v1524
  %v1789 = vpop.permute.xlu0 %1788
  %1792 = vset.pattern.permute.xlu0 0
  %1793 = vperm.xlu0 %1792, %v1525
  %v1794 = vpop.permute.xlu0 %1793
  %1797 = vset.pattern.permute.xlu0 0
  %1798 = vperm.xlu0 %1797, %v1526
  %v1799 = vpop.permute.xlu0 %1798
  %1802 = vset.pattern.permute.xlu0 0
  %1803 = vperm.xlu0 %1802, %v1527
  %v1804 = vpop.permute.xlu0 %1803
  %1807 = vset.pattern.permute.xlu0 0
  %1808 = vperm.xlu0 %1807, %v1528
  %v1809 = vpop.permute.xlu0 %1808
  %1812 = vset.pattern.permute.xlu0 0
  %1813 = vperm.xlu0 %1812, %v1529
  %v1814 = vpop.permute.xlu0 %1813
  %1817 = vset.pattern.permute.xlu0 0
  %1818 = vperm.xlu0 %1817, %v1530
  %v1819 = vpop.permute.xlu0 %1818
  %1822 = vset.pattern.permute.xlu0 0
  %1823 = vperm.xlu0 %1822, %v1531
  %v1824 = vpop.permute.xlu0 %1823
  %1827 = vset.pattern.permute.xlu0 0
  %1828 = vperm.xlu0 %1827, %v1532
  %v1829 = vpop.permute.xlu0 %1828
  %1832 = vset.pattern.permute.xlu0 0
  %1833 = vperm.xlu0 %1832, %v1533
  %v1834 = vpop.permute.xlu0 %1833
  %1837 = vset.pattern.permute.xlu0 0
  %1838 = vperm.xlu0 %1837, %v1534
  %v1839 = vpop.permute.xlu0 %1838
  %1842 = vset.pattern.permute.xlu0 0
  %1843 = vperm.xlu0 %1842, %v1535
  %v1844 = vpop.permute.xlu0 %1843
  %1847 = vset.pattern.permute.xlu0 0
  %1848 = vperm.xlu0 %1847, %v1536
  %v1849 = vpop.permute.xlu0 %1848
  %1852 = vset.pattern.permute.xlu0 0
  %1853 = vperm.xlu0 %1852, %v1537
  %v1854 = vpop.permute.xlu0 %1853
  %1857 = vset.pattern.permute.xlu0 0
  %1858 = vperm.xlu0 %1857, %v1538
  %v1859 = vpop.permute.xlu0 %1858
  %1862 = vset.pattern.permute.xlu0 0
  %1863 = vperm.xlu0 %1862, %v1539
  %v1864 = vpop.permute.xlu0 %1863
  %1867 = vset.pattern.permute.xlu0 0
  %1868 = vperm.xlu0 %1867, %v1540
  %v1869 = vpop.permute.xlu0 %1868
  %1872 = vset.pattern.permute.xlu0 0
  %1873 = vperm.xlu0 %1872, %v1541
  %v1874 = vpop.permute.xlu0 %1873
  %1877 = vset.pattern.permute.xlu0 0
  %1878 = vperm.xlu0 %1877, %v1542
  %v1879 = vpop.permute.xlu0 %1878
  %1882 = vset.pattern.permute.xlu0 0
  %1883 = vperm.xlu0 %1882, %v1543
  %v1884 = vpop.permute.xlu0 %1883
  %1887 = vset.pattern.permute.xlu0 0
  %1888 = vperm.xlu0 %1887, %v1544
  %v1889 = vpop.permute.xlu0 %1888
  %1892 = vset.pattern.permute.xlu0 0
  %1893 = vperm.xlu0 %1892, %v1545
  %v1894 = vpop.permute.xlu0 %1893
  %1897 = vset.pattern.permute.xlu0 0
  %1898 = vperm.xlu0 %1897, %v1546
  %v1899 = vpop.permute.xlu0 %1898
  %1902 = vset.pattern.permute.xlu0 0
  %1903 = vperm.xlu0 %1902, %v1547
  %v1904 = vpop.permute.xlu0 %1903
  %1907 = vset.pattern.permute.xlu0 0
  %1908 = vperm.xlu0 %1907, %v1548
  %v1909 = vpop.permute.xlu0 %1908
  %1912 = vset.pattern.permute.xlu0 0
  %1913 = vperm.xlu0 %1912, %v1549
  %v1914 = vpop.permute.xlu0 %1913
  %1917 = vset.pattern.permute.xlu0 0
  %1918 = vperm.xlu0 %1917, %v1550
  %v1919 = vpop.permute.xlu0 %1918
  %1922 = vset.pattern.permute.xlu0 0
  %1923 = vperm.xlu0 %1922, %v1551
  %v1924 = vpop.permute.xlu0 %1923
  %1927 = vset.pattern.permute.xlu0 0
  %1928 = vperm.xlu0 %1927, %v1552
  %v1929 = vpop.permute.xlu0 %1928
  %1932 = vset.pattern.permute.xlu0 0
  %1933 = vperm.xlu0 %1932, %v1553
  %v1934 = vpop.permute.xlu0 %1933
  %1937 = vset.pattern.permute.xlu0 0
  %1938 = vperm.xlu0 %1937, %v1554
  %v1939 = vpop.permute.xlu0 %1938
  %1942 = vset.pattern.permute.xlu0 0
  %1943 = vperm.xlu0 %1942, %v1555
  %v1944 = vpop.permute.xlu0 %1943
  %1947 = vset.pattern.permute.xlu0 0
  %1948 = vperm.xlu0 %1947, %v1556
  %v1949 = vpop.permute.xlu0 %1948
  %1952 = vset.pattern.permute.xlu0 0
  %1953 = vperm.xlu0 %1952, %v1557
  %v1954 = vpop.permute.xlu0 %1953
  %1957 = vset.pattern.permute.xlu0 0
  %1958 = vperm.xlu0 %1957, %v1558
  %v1959 = vpop.permute.xlu0 %1958
  %1962 = vset.pattern.permute.xlu0 0
  %1963 = vperm.xlu0 %1962, %v1559
  %v1964 = vpop.permute.xlu0 %1963
  %1967 = vset.pattern.permute.xlu0 0
  %1968 = vperm.xlu0 %1967, %v1560
  %v1969 = vpop.permute.xlu0 %1968
  %1972 = vset.pattern.permute.xlu0 0
  %1973 = vperm.xlu0 %1972, %v1561
  %v1974 = vpop.permute.xlu0 %1973
  %1977 = vset.pattern.permute.xlu0 0
  %1978 = vperm.xlu0 %1977, %v1562
  %v1979 = vpop.permute.xlu0 %1978
  %1982 = vset.pattern.permute.xlu0 0
  %1983 = vperm.xlu0 %1982, %v1563
  %v1984 = vpop.permute.xlu0 %1983
  %1987 = vset.pattern.permute.xlu0 0
  %1988 = vperm.xlu0 %1987, %v1564
  %v1989 = vpop.permute.xlu0 %1988
  %1992 = vset.pattern.permute.xlu0 0
  %1993 = vperm.xlu0 %1992, %v1565
  %v1994 = vpop.permute.xlu0 %1993
  %1997 = vset.pattern.permute.xlu0 0
  %1998 = vperm.xlu0 %1997, %v1566
  %v1999 = vpop.permute.xlu0 %1998
  %2002 = vset.pattern.permute.xlu0 0
  %2003 = vperm.xlu0 %2002, %v1567
  %v2004 = vpop.permute.xlu0 %2003
  %2007 = vset.pattern.permute.xlu0 0
  %2008 = vperm.xlu0 %2007, %v1568
  %v2009 = vpop.permute.xlu0 %2008
  %2012 = vset.pattern.permute.xlu0 0
  %2013 = vperm.xlu0 %2012, %v1569
  %v2014 = vpop.permute.xlu0 %2013
  %2017 = vset.pattern.permute.xlu0 0
  %2018 = vperm.xlu0 %2017, %v1570
  %v2019 = vpop.permute.xlu0 %2018
  %2022 = vset.pattern.permute.xlu0 0
  %2023 = vperm.xlu0 %2022, %v1571
  %v2024 = vpop.permute.xlu0 %2023
  %2027 = vset.pattern.permute.xlu0 0
  %2028 = vperm.xlu0 %2027, %v1572
  %v2029 = vpop.permute.xlu0 %2028
  %2032 = vset.pattern.permute.xlu0 0
  %2033 = vperm.xlu0 %2032, %v1573
  %v2034 = vpop.permute.xlu0 %2033
  %2037 = vset.pattern.permute.xlu0 0
  %2038 = vperm.xlu0 %2037, %v1574
  %v2039 = vpop.permute.xlu0 %2038
  %2042 = vset.pattern.permute.xlu0 0
  %2043 = vperm.xlu0 %2042, %v1575
  %v2044 = vpop.permute.xlu0 %2043
  %2047 = vset.pattern.permute.xlu0 0
  %2048 = vperm.xlu0 %2047, %v1576
  %v2049 = vpop.permute.xlu0 %2048
  %2052 = vset.pattern.permute.xlu0 0
  %2053 = vperm.xlu0 %2052, %v1577
  %v2054 = vpop.permute.xlu0 %2053
  %2057 = vset.pattern.permute.xlu0 0
  %2058 = vperm.xlu0 %2057, %v1578
  %v2059 = vpop.permute.xlu0 %2058
  %2062 = vset.pattern.permute.xlu0 0
  %2063 = vperm.xlu0 %2062, %v1579
  %v2064 = vpop.permute.xlu0 %2063
  %2067 = vset.pattern.permute.xlu0 0
  %2068 = vperm.xlu0 %2067, %v1580
  %v2069 = vpop.permute.xlu0 %2068
  %2072 = vset.pattern.permute.xlu0 0
  %2073 = vperm.xlu0 %2072, %v1581
  %v2074 = vpop.permute.xlu0 %2073
  %2077 = vset.pattern.permute.xlu0 0
  %2078 = vperm.xlu0 %2077, %v1582
  %v2079 = vpop.permute.xlu0 %2078
  %2082 = vset.pattern.permute.xlu0 0
  %2083 = vperm.xlu0 %2082, %v1583
  %v2084 = vpop.permute.xlu0 %2083
  %2087 = vset.pattern.permute.xlu0 0
  %2088 = vperm.xlu0 %2087, %v1584
  %v2089 = vpop.permute.xlu0 %2088
  %2092 = vset.pattern.permute.xlu0 0
  %2093 = vperm.xlu0 %2092, %v1585
  %v2094 = vpop.permute.xlu0 %2093
  %2097 = vset.pattern.permute.xlu0 0
  %2098 = vperm.xlu0 %2097, %v1586
  %v2099 = vpop.permute.xlu0 %2098
  %2102 = vset.pattern.permute.xlu0 0
  %2103 = vperm.xlu0 %2102, %v1587
  %v2104 = vpop.permute.xlu0 %2103
  %2107 = vset.pattern.permute.xlu0 0
  %2108 = vperm.xlu0 %2107, %v1588
  %v2109 = vpop.permute.xlu0 %2108
  %2112 = vset.pattern.permute.xlu0 0
  %2113 = vperm.xlu0 %2112, %v1589
  %v2114 = vpop.permute.xlu0 %2113
  %2117 = vset.pattern.permute.xlu0 0
  %2118 = vperm.xlu0 %2117, %v1590
  %v2119 = vpop.permute.xlu0 %2118
  %2122 = vset.pattern.permute.xlu0 0
  %2123 = vperm.xlu0 %2122, %v1591
  %v2124 = vpop.permute.xlu0 %2123
  %2127 = vset.pattern.permute.xlu0 0
  %2128 = vperm.xlu0 %2127, %v1592
  %v2129 = vpop.permute.xlu0 %2128
  %2132 = vset.pattern.permute.xlu0 0
  %2133 = vperm.xlu0 %2132, %v1593
  %v2134 = vpop.permute.xlu0 %2133
  %2137 = vset.pattern.permute.xlu0 0
  %2138 = vperm.xlu0 %2137, %v1594
  %v2139 = vpop.permute.xlu0 %2138
  %2142 = vset.pattern.permute.xlu0 0
  %2143 = vperm.xlu0 %2142, %v1595
  %v2144 = vpop.permute.xlu0 %2143
  %2147 = vset.pattern.permute.xlu0 0
  %2148 = vperm.xlu0 %2147, %v1596
  %v2149 = vpop.permute.xlu0 %2148
  %2152 = vset.pattern.permute.xlu0 0
  %2153 = vperm.xlu0 %2152, %v1597
  %v2154 = vpop.permute.xlu0 %2153
  %2157 = vset.pattern.permute.xlu0 0
  %2158 = vperm.xlu0 %2157, %v1598
  %v2159 = vpop.permute.xlu0 %2158
  %2162 = vset.pattern.permute.xlu0 0
  %2163 = vperm.xlu0 %2162, %v1599
  %v2164 = vpop.permute.xlu0 %2163
  %2167 = vset.pattern.permute.xlu0 0
  %2168 = vperm.xlu0 %2167, %v1600
  %v2169 = vpop.permute.xlu0 %2168
  %2172 = vset.pattern.permute.xlu0 0
  %2173 = vperm.xlu0 %2172, %v1601
  %v2174 = vpop.permute.xlu0 %2173
  %2177 = vset.pattern.permute.xlu0 0
  %2178 = vperm.xlu0 %2177, %v1602
  %v2179 = vpop.permute.xlu0 %2178
  %2182 = vset.pattern.permute.xlu0 0
  %2183 = vperm.xlu0 %2182, %v1603
  %v2184 = vpop.permute.xlu0 %2183
  %2187 = vset.pattern.permute.xlu0 0
  %2188 = vperm.xlu0 %2187, %v1604
  %v2189 = vpop.permute.xlu0 %2188
  %2192 = vset.pattern.permute.xlu0 0
  %2193 = vperm.xlu0 %2192, %v1605
  %v2194 = vpop.permute.xlu0 %2193
  %2197 = vset.pattern.permute.xlu0 0
  %2198 = vperm.xlu0 %2197, %v1606
  %v2199 = vpop.permute.xlu0 %2198
  %2202 = vset.pattern.permute.xlu0 0
  %2203 = vperm.xlu0 %2202, %v1607
  %v2204 = vpop.permute.xlu0 %2203
  %2207 = vset.pattern.permute.xlu0 0
  %2208 = vperm.xlu0 %2207, %v1608
  %v2209 = vpop.permute.xlu0 %2208
  %2212 = vset.pattern.permute.xlu0 0
  %2213 = vperm.xlu0 %2212, %v1609
  %v2214 = vpop.permute.xlu0 %2213
  %2217 = vset.pattern.permute.xlu0 0
  %2218 = vperm.xlu0 %2217, %v1610
  %v2219 = vpop.permute.xlu0 %2218
  %2222 = vset.pattern.permute.xlu0 0
  %2223 = vperm.xlu0 %2222, %v1611
  %v2224 = vpop.permute.xlu0 %2223
  %2227 = vset.pattern.permute.xlu0 0
  %2228 = vperm.xlu0 %2227, %v1612
  %v2229 = vpop.permute.xlu0 %2228
  %2232 = vset.pattern.permute.xlu0 0
  %2233 = vperm.xlu0 %2232, %v1613
  %v2234 = vpop.permute.xlu0 %2233
  %2237 = vset.pattern.permute.xlu0 0
  %2238 = vperm.xlu0 %2237, %v1614
  %v2239 = vpop.permute.xlu0 %2238
  %2242 = vset.pattern.permute.xlu0 0
  %2243 = vperm.xlu0 %2242, %v1615
  %v2244 = vpop.permute.xlu0 %2243
  %2247 = vset.pattern.permute.xlu0 0
  %2248 = vperm.xlu0 %2247, %v1616
  %v2249 = vpop.permute.xlu0 %2248
  %2252 = vset.pattern.permute.xlu0 0
  %2253 = vperm.xlu0 %2252, %v1617
  %v2254 = vpop.permute.xlu0 %2253
  %2257 = vset.pattern.permute.xlu0 0
  %2258 = vperm.xlu0 %2257, %v1618
  %v2259 = vpop.permute.xlu0 %2258
  %2262 = vset.pattern.permute.xlu0 0
  %2263 = vperm.xlu0 %2262, %v1619
  %v2264 = vpop.permute.xlu0 %2263
  %2267 = vset.pattern.permute.xlu0 0
  %2268 = vperm.xlu0 %2267, %v1620
  %v2269 = vpop.permute.xlu0 %2268
  %2272 = vset.pattern.permute.xlu0 0
  %2273 = vperm.xlu0 %2272, %v1621
  %v2274 = vpop.permute.xlu0 %2273
  %2277 = vset.pattern.permute.xlu0 0
  %2278 = vperm.xlu0 %2277, %v1622
  %v2279 = vpop.permute.xlu0 %2278
  %2282 = vset.pattern.permute.xlu0 0
  %2283 = vperm.xlu0 %2282, %v1623
  %v2284 = vpop.permute.xlu0 %2283
  %2287 = vset.pattern.permute.xlu0 0
  %2288 = vperm.xlu0 %2287, %v1624
  %v2289 = vpop.permute.xlu0 %2288
  %2292 = vset.pattern.permute.xlu0 0
  %2293 = vperm.xlu0 %2292, %v1625
  %v2294 = vpop.permute.xlu0 %2293
  %2297 = vset.pattern.permute.xlu0 0
  %2298 = vperm.xlu0 %2297, %v1626
  %v2299 = vpop.permute.xlu0 %2298
  %2302 = vset.pattern.permute.xlu0 0
  %2303 = vperm.xlu0 %2302, %v1627
  %v2304 = vpop.permute.xlu0 %2303
  %2307 = vset.pattern.permute.xlu0 0
  %2308 = vperm.xlu0 %2307, %v1628
  %v2309 = vpop.permute.xlu0 %2308
  %2312 = vset.pattern.permute.xlu0 0
  %2313 = vperm.xlu0 %2312, %v1629
  %v2314 = vpop.permute.xlu0 %2313
  %2317 = vset.pattern.permute.xlu0 0
  %2318 = vperm.xlu0 %2317, %v1630
  %v2319 = vpop.permute.xlu0 %2318
  %2322 = vset.pattern.permute.xlu0 0
  %2323 = vperm.xlu0 %2322, %v1631
  %v2324 = vpop.permute.xlu0 %2323
  %2327 = vset.pattern.permute.xlu0 0
  %2328 = vperm.xlu0 %2327, %v1632
  %v2329 = vpop.permute.xlu0 %2328
  %2332 = vset.pattern.permute.xlu0 0
  %2333 = vperm.xlu0 %2332, %v1633
  %v2334 = vpop.permute.xlu0 %2333
  %2337 = vset.pattern.permute.xlu0 0
  %2338 = vperm.xlu0 %2337, %v1634
  %v2339 = vpop.permute.xlu0 %2338
  %2342 = vset.pattern.permute.xlu0 0
  %2343 = vperm.xlu0 %2342, %v1635
  %v2344 = vpop.permute.xlu0 %2343
  %2347 = vset.pattern.permute.xlu0 0
  %2348 = vperm.xlu0 %2347, %v1636
  %v2349 = vpop.permute.xlu0 %2348
  %2352 = vset.pattern.permute.xlu0 0
  %2353 = vperm.xlu0 %2352, %v1637
  %v2354 = vpop.permute.xlu0 %2353
  %2357 = vset.pattern.permute.xlu0 0
  %2358 = vperm.xlu0 %2357, %v1638
  %v2359 = vpop.permute.xlu0 %2358
  %2362 = vset.pattern.permute.xlu0 0
  %2363 = vperm.xlu0 %2362, %v1639
  %v2364 = vpop.permute.xlu0 %2363
  %2367 = vset.pattern.permute.xlu0 0
  %2368 = vperm.xlu0 %2367, %v1640
  %v2369 = vpop.permute.xlu0 %2368
  %2372 = vset.pattern.permute.xlu0 0
  %2373 = vperm.xlu0 %2372, %v1641
  %v2374 = vpop.permute.xlu0 %2373
  %2377 = vset.pattern.permute.xlu0 0
  %2378 = vperm.xlu0 %2377, %v1642
  %v2379 = vpop.permute.xlu0 %2378
  %2382 = vset.pattern.permute.xlu0 0
  %2383 = vperm.xlu0 %2382, %v1643
  %v2384 = vpop.permute.xlu0 %2383
  %2387 = vset.pattern.permute.xlu0 0
  %2388 = vperm.xlu0 %2387, %v1644
  %v2389 = vpop.permute.xlu0 %2388
  %2392 = vset.pattern.permute.xlu0 0
  %2393 = vperm.xlu0 %2392, %v1645
  %v2394 = vpop.permute.xlu0 %2393
  %2397 = vset.pattern.permute.xlu0 0
  %2398 = vperm.xlu0 %2397, %v1646
  %v2399 = vpop.permute.xlu0 %2398
  %2402 = vset.pattern.permute.xlu0 0
  %2403 = vperm.xlu0 %2402, %v1647
  %v2404 = vpop.permute.xlu0 %2403
  %2407 = vset.pattern.permute.xlu0 0
  %2408 = vperm.xlu0 %2407, %v1648
  %v2409 = vpop.permute.xlu0 %2408
  %2412 = vset.pattern.permute.xlu0 0
  %2413 = vperm.xlu0 %2412, %v1649
  %v2414 = vpop.permute.xlu0 %2413
  %2417 = vset.pattern.permute.xlu0 0
  %2418 = vperm.xlu0 %2417, %v1650
  %v2419 = vpop.permute.xlu0 %2418
  %2422 = vset.pattern.permute.xlu0 0
  %2423 = vperm.xlu0 %2422, %v1651
  %v2424 = vpop.permute.xlu0 %2423
  %2427 = vset.pattern.permute.xlu0 0
  %2428 = vperm.xlu0 %2427, %v1652
  %v2429 = vpop.permute.xlu0 %2428
  %2432 = vset.pattern.permute.xlu0 0
  %2433 = vperm.xlu0 %2432, %v1653
  %v2434 = vpop.permute.xlu0 %2433
  %2437 = vset.pattern.permute.xlu0 0
  %2438 = vperm.xlu0 %2437, %v1654
  %v2439 = vpop.permute.xlu0 %2438
  %2442 = vset.pattern.permute.xlu0 0
  %2443 = vperm.xlu0 %2442, %v1655
  %v2444 = vpop.permute.xlu0 %2443
  %2447 = vset.pattern.permute.xlu0 0
  %2448 = vperm.xlu0 %2447, %v1656
  %v2449 = vpop.permute.xlu0 %2448
  %2452 = vset.pattern.permute.xlu0 0
  %2453 = vperm.xlu0 %2452, %v1657
  %v2454 = vpop.permute.xlu0 %2453
  %2457 = vset.pattern.permute.xlu0 0
  %2458 = vperm.xlu0 %2457, %v1658
  %v2459 = vpop.permute.xlu0 %2458
  %2462 = vset.pattern.permute.xlu0 0
  %2463 = vperm.xlu0 %2462, %v1659
  %v2464 = vpop.permute.xlu0 %2463
  %2467 = vset.pattern.permute.xlu0 0
  %2468 = vperm.xlu0 %2467, %v1660
  %v2469 = vpop.permute.xlu0 %2468
  %2472 = vset.pattern.permute.xlu0 0
  %2473 = vperm.xlu0 %2472, %v1661
  %v2474 = vpop.permute.xlu0 %2473
  %2477 = vset.pattern.permute.xlu0 0
  %2478 = vperm.xlu0 %2477, %v1662
  %v2479 = vpop.permute.xlu0 %2478
  %2482 = vset.pattern.permute.xlu0 0
  %2483 = vperm.xlu0 %2482, %v1663
  %v2484 = vpop.permute.xlu0 %2483
  %2487 = vset.pattern.permute.xlu0 0
  %2488 = vperm.xlu0 %2487, %v1664
  %v2489 = vpop.permute.xlu0 %2488
  %2492 = vset.pattern.permute.xlu0 0
  %2493 = vperm.xlu0 %2492, %v1665
  %v2494 = vpop.permute.xlu0 %2493
  %2497 = vset.pattern.permute.xlu0 0
  %2498 = vperm.xlu0 %2497, %v1666
  %v2499 = vpop.permute.xlu0 %2498
  %2502 = vset.pattern.permute.xlu0 0
  %2503 = vperm.xlu0 %2502, %v1667
  %v2504 = vpop.permute.xlu0 %2503
  %2507 = vset.pattern.permute.xlu0 0
  %2508 = vperm.xlu0 %2507, %v1668
  %v2509 = vpop.permute.xlu0 %2508
  %2512 = vset.pattern.permute.xlu0 0
  %2513 = vperm.xlu0 %2512, %v1669
  %v2514 = vpop.permute.xlu0 %2513
  %2517 = vset.pattern.permute.xlu0 0
  %2518 = vperm.xlu0 %2517, %v1670
  %v2519 = vpop.permute.xlu0 %2518
  %2522 = vset.pattern.permute.xlu0 0
  %2523 = vperm.xlu0 %2522, %v1671
  %v2524 = vpop.permute.xlu0 %2523
  %2527 = vset.pattern.permute.xlu0 0
  %2528 = vperm.xlu0 %2527, %v1672
  %v2529 = vpop.permute.xlu0 %2528
  %2532 = vset.pattern.permute.xlu0 0
  %2533 = vperm.xlu0 %2532, %v1673
  %v2534 = vpop.permute.xlu0 %2533
  %2537 = vset.pattern.permute.xlu0 0
  %2538 = vperm.xlu0 %2537, %v1674
  %v2539 = vpop.permute.xlu0 %2538
  %2542 = vset.pattern.permute.xlu0 0
  %2543 = vperm.xlu0 %2542, %v1675
  %v2544 = vpop.permute.xlu0 %2543
  %2547 = vset.pattern.permute.xlu0 0
  %2548 = vperm.xlu0 %2547, %v1676
  %v2549 = vpop.permute.xlu0 %2548
  %2552 = vset.pattern.permute.xlu0 0
  %2553 = vperm.xlu0 %2552, %v1677
  %v2554 = vpop.permute.xlu0 %2553
  %2557 = vset.pattern.permute.xlu0 0
  %2558 = vperm.xlu0 %2557, %v1678
  %v2559 = vpop.permute.xlu0 %2558
  %2562 = vset.pattern.permute.xlu0 0
  %2563 = vperm.xlu0 %2562, %v1679
  %v2564 = vpop.permute.xlu0 %2563
  %2567 = vset.pattern.permute.xlu0 0
  %2568 = vperm.xlu0 %2567, %v1680
  %v2569 = vpop.permute.xlu0 %2568
  %2572 = vset.pattern.permute.xlu0 0
  %2573 = vperm.xlu0 %2572, %v1681
  %v2574 = vpop.permute.xlu0 %2573
  %2577 = vset.pattern.permute.xlu0 0
  %2578 = vperm.xlu0 %2577, %v1682
  %v2579 = vpop.permute.xlu0 %2578
  %2582 = vset.pattern.permute.xlu0 0
  %2583 = vperm.xlu0 %2582, %v1683
  %v2584 = vpop.permute.xlu0 %2583
  %2587 = vset.pattern.permute.xlu0 0
  %2588 = vperm.xlu0 %2587, %v1684
  %v2589 = vpop.permute.xlu0 %2588
  %2592 = vset.pattern.permute.xlu0 0
  %2593 = vperm.xlu0 %2592, %v1685
  %v2594 = vpop.permute.xlu0 %2593
  %2597 = vset.pattern.permute.xlu0 0
  %2598 = vperm.xlu0 %2597, %v1686
  %v2599 = vpop.permute.xlu0 %2598
  %2602 = vset.pattern.permute.xlu0 0
  %2603 = vperm.xlu0 %2602, %v1687
  %v2604 = vpop.permute.xlu0 %2603
  %2607 = vset.pattern.permute.xlu0 0
  %2608 = vperm.xlu0 %2607, %v1688
  %v2609 = vpop.permute.xlu0 %2608
  %2612 = vset.pattern.permute.xlu0 0
  %2613 = vperm.xlu0 %2612, %v1689
  %v2614 = vpop.permute.xlu0 %2613
  %2617 = vset.pattern.permute.xlu0 0
  %2618 = vperm.xlu0 %2617, %v1690
  %v2619 = vpop.permute.xlu0 %2618
  %v2621 = vadd.f32 %v1319, %v1694
  %v2622 = vadd.f32 %v1320, %v1699
  %v2623 = vadd.f32 %v1321, %v1704
  %v2624 = vadd.f32 %v1322, %v1709
  %v2625 = vadd.f32 %v1323, %v1714
  %v2626 = vadd.f32 %v1324, %v1719
  %v2627 = vadd.f32 %v1325, %v1724
  %v2628 = vadd.f32 %v1326, %v1729
  %v2629 = vadd.f32 %v1327, %v1734
  %v2630 = vadd.f32 %v1328, %v1739
  %v2631 = vadd.f32 %v1329, %v1744
  %v2632 = vadd.f32 %v1330, %v1749
  %v2633 = vadd.f32 %v1331, %v1754
  %v2634 = vadd.f32 %v1332, %v1759
  %v2635 = vadd.f32 %v1333, %v1764
  %v2636 = vadd.f32 %v1334, %v1769
  %v2637 = vadd.f32 %v1335, %v1774
  %v2638 = vadd.f32 %v1336, %v1779
  %v2639 = vadd.f32 %v1337, %v1784
  %v2640 = vadd.f32 %v1338, %v1789
  %v2641 = vadd.f32 %v1339, %v1794
  %v2642 = vadd.f32 %v1340, %v1799
  %v2643 = vadd.f32 %v1341, %v1804
  %v2644 = vadd.f32 %v1342, %v1809
  %v2645 = vadd.f32 %v1343, %v1814
  %v2646 = vadd.f32 %v1344, %v1819
  %v2647 = vadd.f32 %v1345, %v1824
  %v2648 = vadd.f32 %v1346, %v1829
  %v2649 = vadd.f32 %v1347, %v1834
  %v2650 = vadd.f32 %v1348, %v1839
  %v2651 = vadd.f32 %v1349, %v1844
  %v2652 = vadd.f32 %v1350, %v1849
  %v2653 = vadd.f32 %v1351, %v1854
  %v2654 = vadd.f32 %v1352, %v1859
  %v2655 = vadd.f32 %v1353, %v1864
  %v2656 = vadd.f32 %v1354, %v1869
  %v2657 = vadd.f32 %v1355, %v1874
  %v2658 = vadd.f32 %v1356, %v1879
  %v2659 = vadd.f32 %v1357, %v1884
  %v2660 = vadd.f32 %v1358, %v1889
  %v2661 = vadd.f32 %v1359, %v1894
  %v2662 = vadd.f32 %v1360, %v1899
  %v2663 = vadd.f32 %v1361, %v1904
  %v2664 = vadd.f32 %v1362, %v1909
  %v2665 = vadd.f32 %v1363, %v1914
  %v2666 = vadd.f32 %v1364, %v1919
  %v2667 = vadd.f32 %v1365, %v1924
  %v2668 = vadd.f32 %v1366, %v1929
  %v2669 = vadd.f32 %v1367, %v1934
  %v2670 = vadd.f32 %v1368, %v1939
  %v2671 = vadd.f32 %v1369, %v1944
  %v2672 = vadd.f32 %v1370, %v1949
  %v2673 = vadd.f32 %v1371, %v1954
  %v2674 = vadd.f32 %v1372, %v1959
  %v2675 = vadd.f32 %v1373, %v1964
  %v2676 = vadd.f32 %v1374, %v1969
  %v2677 = vadd.f32 %v1375, %v1974
  %v2678 = vadd.f32 %v1376, %v1979
  %v2679 = vadd.f32 %v1377, %v1984
  %v2680 = vadd.f32 %v1378, %v1989
  %v2681 = vadd.f32 %v1379, %v1994
  %v2682 = vadd.f32 %v1380, %v1999
  %v2683 = vadd.f32 %v1381, %v2004
  %v2684 = vadd.f32 %v1382, %v2009
  %v2685 = vadd.f32 %v1383, %v2014
  %v2686 = vadd.f32 %v1384, %v2019
  %v2687 = vadd.f32 %v1385, %v2024
  %v2688 = vadd.f32 %v1386, %v2029
  %v2689 = vadd.f32 %v1387, %v2034
  %v2690 = vadd.f32 %v1388, %v2039
  %v2691 = vadd.f32 %v1389, %v2044
  %v2692 = vadd.f32 %v1390, %v2049
  %v2693 = vadd.f32 %v1391, %v2054
  %v2694 = vadd.f32 %v1392, %v2059
  %v2695 = vadd.f32 %v1393, %v2064
  %v2696 = vadd.f32 %v1394, %v2069
  %v2697 = vadd.f32 %v1395, %v2074
  %v2698 = vadd.f32 %v1396, %v2079
  %v2699 = vadd.f32 %v1397, %v2084
  %v2700 = vadd.f32 %v1398, %v2089
  %v2701 = vadd.f32 %v1399, %v2094
  %v2702 = vadd.f32 %v1400, %v2099
  %v2703 = vadd.f32 %v1401, %v2104
  %v2704 = vadd.f32 %v1402, %v2109
  %v2705 = vadd.f32 %v1403, %v2114
  %v2706 = vadd.f32 %v1404, %v2119
  %v2707 = vadd.f32 %v1405, %v2124
  %v2708 = vadd.f32 %v1406, %v2129
  %v2709 = vadd.f32 %v1407, %v2134
  %v2710 = vadd.f32 %v1408, %v2139
  %v2711 = vadd.f32 %v1409, %v2144
  %v2712 = vadd.f32 %v1410, %v2149
  %v2713 = vadd.f32 %v1411, %v2154
  %v2714 = vadd.f32 %v1412, %v2159
  %v2715 = vadd.f32 %v1413, %v2164
  %v2716 = vadd.f32 %v1414, %v2169
  %v2717 = vadd.f32 %v1415, %v2174
  %v2718 = vadd.f32 %v1416, %v2179
  %v2719 = vadd.f32 %v1417, %v2184
  %v2720 = vadd.f32 %v1418, %v2189
  %v2721 = vadd.f32 %v1419, %v2194
  %v2722 = vadd.f32 %v1420, %v2199
  %v2723 = vadd.f32 %v1421, %v2204
  %v2724 = vadd.f32 %v1422, %v2209
  %v2725 = vadd.f32 %v1423, %v2214
  %v2726 = vadd.f32 %v1424, %v2219
  %v2727 = vadd.f32 %v1425, %v2224
  %v2728 = vadd.f32 %v1426, %v2229
  %v2729 = vadd.f32 %v1427, %v2234
  %v2730 = vadd.f32 %v1428, %v2239
  %v2731 = vadd.f32 %v1429, %v2244
  %v2732 = vadd.f32 %v1430, %v2249
  %v2733 = vadd.f32 %v1431, %v2254
  %v2734 = vadd.f32 %v1432, %v2259
  %v2735 = vadd.f32 %v1433, %v2264
  %v2736 = vadd.f32 %v1434, %v2269
  %v2737 = vadd.f32 %v1435, %v2274
  %v2738 = vadd.f32 %v1436, %v2279
  %v2739 = vadd.f32 %v1437, %v2284
  %v2740 = vadd.f32 %v1438, %v2289
  %v2741 = vadd.f32 %v1439, %v2294
  %v2742 = vadd.f32 %v1440, %v2299
  %v2743 = vadd.f32 %v1441, %v2304
  %v2744 = vadd.f32 %v1442, %v2309
  %v2745 = vadd.f32 %v1443, %v2314
  %v2746 = vadd.f32 %v1444, %v2319
  %v2747 = vadd.f32 %v1445, %v2324
  %v2748 = vadd.f32 %v1446, %v2329
  %v2749 = vadd.f32 %v1447, %v2334
  %v2750 = vadd.f32 %v1448, %v2339
  %v2751 = vadd.f32 %v1449, %v2344
  %v2752 = vadd.f32 %v1450, %v2349
  %v2753 = vadd.f32 %v1451, %v2354
  %v2754 = vadd.f32 %v1452, %v2359
  %v2755 = vadd.f32 %v1453, %v2364
  %v2756 = vadd.f32 %v1454, %v2369
  %v2757 = vadd.f32 %v1455, %v2374
  %v2758 = vadd.f32 %v1456, %v2379
  %v2759 = vadd.f32 %v1457, %v2384
  %v2760 = vadd.f32 %v1458, %v2389
  %v2761 = vadd.f32 %v1459, %v2394
  %v2762 = vadd.f32 %v1460, %v2399
  %v2763 = vadd.f32 %v1461, %v2404
  %v2764 = vadd.f32 %v1462, %v2409
  %v2765 = vadd.f32 %v1463, %v2414
  %v2766 = vadd.f32 %v1464, %v2419
  %v2767 = vadd.f32 %v1465, %v2424
  %v2768 = vadd.f32 %v1466, %v2429
  %v2769 = vadd.f32 %v1467, %v2434
  %v2770 = vadd.f32 %v1468, %v2439
  %v2771 = vadd.f32 %v1469, %v2444
  %v2772 = vadd.f32 %v1470, %v2449
  %v2773 = vadd.f32 %v1471, %v2454
  %v2774 = vadd.f32 %v1472, %v2459
  %v2775 = vadd.f32 %v1473, %v2464
  %v2776 = vadd.f32 %v1474, %v2469
  %v2777 = vadd.f32 %v1475, %v2474
  %v2778 = vadd.f32 %v1476, %v2479
  %v2779 = vadd.f32 %v1477, %v2484
  %v2780 = vadd.f32 %v1478, %v2489
  %v2781 = vadd.f32 %v1479, %v2494
  %v2782 = vadd.f32 %v1480, %v2499
  %v2783 = vadd.f32 %v1481, %v2504
  %v2784 = vadd.f32 %v1482, %v2509
  %v2785 = vadd.f32 %v1483, %v2514
  %v2786 = vadd.f32 %v1484, %v2519
  %v2787 = vadd.f32 %v1485, %v2524
  %v2788 = vadd.f32 %v1486, %v2529
  %v2789 = vadd.f32 %v1487, %v2534
  %v2790 = vadd.f32 %v1488, %v2539
  %v2791 = vadd.f32 %v1489, %v2544
  %v2792 = vadd.f32 %v1490, %v2549
  %v2793 = vadd.f32 %v1491, %v2554
  %v2794 = vadd.f32 %v1492, %v2559
  %v2795 = vadd.f32 %v1493, %v2564
  %v2796 = vadd.f32 %v1494, %v2569
  %v2797 = vadd.f32 %v1495, %v2574
  %v2798 = vadd.f32 %v1496, %v2579
  %v2799 = vadd.f32 %v1497, %v2584
  %v2800 = vadd.f32 %v1498, %v2589
  %v2801 = vadd.f32 %v1499, %v2594
  %v2802 = vadd.f32 %v1500, %v2599
  %v2803 = vadd.f32 %v1501, %v2604
  %v2804 = vadd.f32 %v1502, %v2609
  %v2805 = vadd.f32 %v1503, %v2614
  %v2806 = vadd.f32 %v1504, %v2619
  %v2807 = vmax.f32 %v2621, 0.0
  %v2808 = vmax.f32 %v2622, 0.0
  %v2809 = vmax.f32 %v2623, 0.0
  %v2810 = vmax.f32 %v2624, 0.0
  %v2811 = vmax.f32 %v2625, 0.0
  %v2812 = vmax.f32 %v2626, 0.0
  %v2813 = vmax.f32 %v2627, 0.0
  %v2814 = vmax.f32 %v2628, 0.0
  %v2815 = vmax.f32 %v2629, 0.0
  %v2816 = vmax.f32 %v2630, 0.0
  %v2817 = vmax.f32 %v2631, 0.0
  %v2818 = vmax.f32 %v2632, 0.0
  %v2819 = vmax.f32 %v2633, 0.0
  %v2820 = vmax.f32 %v2634, 0.0
  %v2821 = vmax.f32 %v2635, 0.0
  %v2822 = vmax.f32 %v2636, 0.0
  %v2823 = vmax.f32 %v2637, 0.0
  %v2824 = vmax.f32 %v2638, 0.0
  %v2825 = vmax.f32 %v2639, 0.0
  %v2826 = vmax.f32 %v2640, 0.0
  %v2827 = vmax.f32 %v2641, 0.0
  %v2828 = vmax.f32 %v2642, 0.0
  %v2829 = vmax.f32 %v2643, 0.0
  %v2830 = vmax.f32 %v2644, 0.0
  %v2831 = vmax.f32 %v2645, 0.0
  %v2832 = vmax.f32 %v2646, 0.0
  %v2833 = vmax.f32 %v2647, 0.0
  %v2834 = vmax.f32 %v2648, 0.0
  %v2835 = vmax.f32 %v2649, 0.0
  %v2836 = vmax.f32 %v2650, 0.0
  %v2837 = vmax.f32 %v2651, 0.0
  %v2838 = vmax.f32 %v2652, 0.0
  %v2839 = vmax.f32 %v2653, 0.0
  %v2840 = vmax.f32 %v2654, 0.0
  %v2841 = vmax.f32 %v2655, 0.0
  %v2842 = vmax.f32 %v2656, 0.0
  %v2843 = vmax.f32 %v2657, 0.0
  %v2844 = vmax.f32 %v2658, 0.0
  %v2845 = vmax.f32 %v2659, 0.0
  %v2846 = vmax.f32 %v2660, 0.0
  %v2847 = vmax.f32 %v2661, 0.0
  %v2848 = vmax.f32 %v2662, 0.0
  %v2849 = vmax.f32 %v2663, 0.0
  %v2850 = vmax.f32 %v2664, 0.0
  %v2851 = vmax.f32 %v2665, 0.0
  %v2852 = vmax.f32 %v2666, 0.0
  %v2853 = vmax.f32 %v2667, 0.0
  %v2854 = vmax.f32 %v2668, 0.0
  %v2855 = vmax.f32 %v2669, 0.0
  %v2856 = vmax.f32 %v2670, 0.0
  %v2857 = vmax.f32 %v2671, 0.0
  %v2858 = vmax.f32 %v2672, 0.0
  %v2859 = vmax.f32 %v2673, 0.0
  %v2860 = vmax.f32 %v2674, 0.0
  %v2861 = vmax.f32 %v2675, 0.0
  %v2862 = vmax.f32 %v2676, 0.0
  %v2863 = vmax.f32 %v2677, 0.0
  %v2864 = vmax.f32 %v2678, 0.0
  %v2865 = vmax.f32 %v2679, 0.0
  %v2866 = vmax.f32 %v2680, 0.0
  %v2867 = vmax.f32 %v2681, 0.0
  %v2868 = vmax.f32 %v2682, 0.0
  %v2869 = vmax.f32 %v2683, 0.0
  %v2870 = vmax.f32 %v2684, 0.0
  %v2871 = vmax.f32 %v2685, 0.0
  %v2872 = vmax.f32 %v2686, 0.0
  %v2873 = vmax.f32 %v2687, 0.0
  %v2874 = vmax.f32 %v2688, 0.0
  %v2875 = vmax.f32 %v2689, 0.0
  %v2876 = vmax.f32 %v2690, 0.0
  %v2877 = vmax.f32 %v2691, 0.0
  %v2878 = vmax.f32 %v2692, 0.0
  %v2879 = vmax.f32 %v2693, 0.0
  %v2880 = vmax.f32 %v2694, 0.0
  %v2881 = vmax.f32 %v2695, 0.0
  %v2882 = vmax.f32 %v2696, 0.0
  %v2883 = vmax.f32 %v2697, 0.0
  %v2884 = vmax.f32 %v2698, 0.0
  %v2885 = vmax.f32 %v2699, 0.0
  %v2886 = vmax.f32 %v2700, 0.0
  %v2887 = vmax.f32 %v2701, 0.0
  %v2888 = vmax.f32 %v2702, 0.0
  %v2889 = vmax.f32 %v2703, 0.0
  %v2890 = vmax.f32 %v2704, 0.0
  %v2891 = vmax.f32 %v2705, 0.0
  %v2892 = vmax.f32 %v2706, 0.0
  %v2893 = vmax.f32 %v2707, 0.0
  %v2894 = vmax.f32 %v2708, 0.0
  %v2895 = vmax.f32 %v2709, 0.0
  %v2896 = vmax.f32 %v2710, 0.0
  %v2897 = vmax.f32 %v2711, 0.0
  %v2898 = vmax.f32 %v2712, 0.0
  %v2899 = vmax.f32 %v2713, 0.0
  %v2900 = vmax.f32 %v2714, 0.0
  %v2901 = vmax.f32 %v2715, 0.0
  %v2902 = vmax.f32 %v2716, 0.0
  %v2903 = vmax.f32 %v2717, 0.0
  %v2904 = vmax.f32 %v2718, 0.0
  %v2905 = vmax.f32 %v2719, 0.0
  %v2906 = vmax.f32 %v2720, 0.0
  %v2907 = vmax.f32 %v2721, 0.0
  %v2908 = vmax.f32 %v2722, 0.0
  %v2909 = vmax.f32 %v2723, 0.0
  %v2910 = vmax.f32 %v2724, 0.0
  %v2911 = vmax.f32 %v2725, 0.0
  %v2912 = vmax.f32 %v2726, 0.0
  %v2913 = vmax.f32 %v2727, 0.0
  %v2914 = vmax.f32 %v2728, 0.0
  %v2915 = vmax.f32 %v2729, 0.0
  %v2916 = vmax.f32 %v2730, 0.0
  %v2917 = vmax.f32 %v2731, 0.0
  %v2918 = vmax.f32 %v2732, 0.0
  %v2919 = vmax.f32 %v2733, 0.0
  %v2920 = vmax.f32 %v2734, 0.0
  %v2921 = vmax.f32 %v2735, 0.0
  %v2922 = vmax.f32 %v2736, 0.0
  %v2923 = vmax.f32 %v2737, 0.0
  %v2924 = vmax.f32 %v2738, 0.0
  %v2925 = vmax.f32 %v2739, 0.0
  %v2926 = vmax.f32 %v2740, 0.0
  %v2927 = vmax.f32 %v2741, 0.0
  %v2928 = vmax.f32 %v2742, 0.0
  %v2929 = vmax.f32 %v2743, 0.0
  %v2930 = vmax.f32 %v2744, 0.0
  %v2931 = vmax.f32 %v2745, 0.0
  %v2932 = vmax.f32 %v2746, 0.0
  %v2933 = vmax.f32 %v2747, 0.0
  %v2934 = vmax.f32 %v2748, 0.0
  %v2935 = vmax.f32 %v2749, 0.0
  %v2936 = vmax.f32 %v2750, 0.0
  %v2937 = vmax.f32 %v2751, 0.0
  %v2938 = vmax.f32 %v2752, 0.0
  %v2939 = vmax.f32 %v2753, 0.0
  %v2940 = vmax.f32 %v2754, 0.0
  %v2941 = vmax.f32 %v2755, 0.0
  %v2942 = vmax.f32 %v2756, 0.0
  %v2943 = vmax.f32 %v2757, 0.0
  %v2944 = vmax.f32 %v2758, 0.0
  %v2945 = vmax.f32 %v2759, 0.0
  %v2946 = vmax.f32 %v2760, 0.0
  %v2947 = vmax.f32 %v2761, 0.0
  %v2948 = vmax.f32 %v2762, 0.0
  %v2949 = vmax.f32 %v2763, 0.0
  %v2950 = vmax.f32 %v2764, 0.0
  %v2951 = vmax.f32 %v2765, 0.0
  %v2952 = vmax.f32 %v2766, 0.0
  %v2953 = vmax.f32 %v2767, 0.0
  %v2954 = vmax.f32 %v2768, 0.0
  %v2955 = vmax.f32 %v2769, 0.0
  %v2956 = vmax.f32 %v2770, 0.0
  %v2957 = vmax.f32 %v2771, 0.0
  %v2958 = vmax.f32 %v2772, 0.0
  %v2959 = vmax.f32 %v2773, 0.0
  %v2960 = vmax.f32 %v2774, 0.0
  %v2961 = vmax.f32 %v2775, 0.0
  %v2962 = vmax.f32 %v2776, 0.0
  %v2963 = vmax.f32 %v2777, 0.0
  %v2964 = vmax.f32 %v2778, 0.0
  %v2965 = vmax.f32 %v2779, 0.0
  %v2966 = vmax.f32 %v2780, 0.0
  %v2967 = vmax.f32 %v2781, 0.0
  %v2968 = vmax.f32 %v2782, 0.0
  %v2969 = vmax.f32 %v2783, 0.0
  %v2970 = vmax.f32 %v2784, 0.0
  %v2971 = vmax.f32 %v2785, 0.0
  %v2972 = vmax.f32 %v2786, 0.0
  %v2973 = vmax.f32 %v2787, 0.0
  %v2974 = vmax.f32 %v2788, 0.0
  %v2975 = vmax.f32 %v2789, 0.0
  %v2976 = vmax.f32 %v2790, 0.0
  %v2977 = vmax.f32 %v2791, 0.0
  %v2978 = vmax.f32 %v2792, 0.0
  %v2979 = vmax.f32 %v2793, 0.0
  %v2980 = vmax.f32 %v2794, 0.0
  %v2981 = vmax.f32 %v2795, 0.0
  %v2982 = vmax.f32 %v2796, 0.0
  %v2983 = vmax.f32 %v2797, 0.0
  %v2984 = vmax.f32 %v2798, 0.0
  %v2985 = vmax.f32 %v2799, 0.0
  %v2986 = vmax.f32 %v2800, 0.0
  %v2987 = vmax.f32 %v2801, 0.0
  %v2988 = vmax.f32 %v2802, 0.0
  %v2989 = vmax.f32 %v2803, 0.0
  %v2990 = vmax.f32 %v2804, 0.0
  %v2991 = vmax.f32 %v2805, 0.0
  %v2992 = vmax.f32 %v2806, 0.0
  %v2993 = vld [vmem:[%s3] sm:$0xff]
  %v2994 = vld [vmem:[%s3 + $0x8] sm:$0xff]
  %v2995 = vld [vmem:[%s3 + $0x10] sm:$0xff]
  %v2996 = vld [vmem:[%s3 + $0x18] sm:$0xff]
  %v2997 = vld [vmem:[%s3 + $0x20] sm:$0xff]
  %v2998 = vld [vmem:[%s3 + $0x28] sm:$0xff]
  %v2999 = vld [vmem:[%s3 + $0x30] sm:$0xff]
  %v3000 = vld [vmem:[%s3 + $0x38] sm:$0xff]
  %v3001 = vld [vmem:[%s3 + $0x40] sm:$0xff]
  %v3002 = vld [vmem:[%s3 + $0x48] sm:$0xff]
  %v3003 = vld [vmem:[%s3 + $0x50] sm:$0xff]
  %v3004 = vld [vmem:[%s3 + $0x58] sm:$0xff]
  %v3005 = vld [vmem:[%s3 + $0x60] sm:$0xff]
  %v3006 = vld [vmem:[%s3 + $0x68] sm:$0xff]
  %v3007 = vld [vmem:[%s3 + $0x70] sm:$0xff]
  %v3008 = vld [vmem:[%s3 + $0x78] sm:$0xff]
  %v3009 = vld [vmem:[%s3 + $0x80] sm:$0xff]
  %v3010 = vld [vmem:[%s3 + $0x88] sm:$0xff]
  %v3011 = vld [vmem:[%s3 + $0x90] sm:$0xff]
  %v3012 = vld [vmem:[%s3 + $0x98] sm:$0xff]
  %v3013 = vld [vmem:[%s3 + $0xa0] sm:$0xff]
  %v3014 = vld [vmem:[%s3 + $0xa8] sm:$0xff]
  %v3015 = vld [vmem:[%s3 + $0xb0] sm:$0xff]
  %v3016 = vld [vmem:[%s3 + $0xb8] sm:$0xff]
  %v3017 = vld [vmem:[%s3 + $0xc0] sm:$0xff]
  %v3018 = vld [vmem:[%s3 + $0xc8] sm:$0xff]
  %v3019 = vld [vmem:[%s3 + $0xd0] sm:$0xff]
  %v3020 = vld [vmem:[%s3 + $0xd8] sm:$0xff]
  %v3021 = vld [vmem:[%s3 + $0xe0] sm:$0xff]
  %v3022 = vld [vmem:[%s3 + $0xe8] sm:$0xff]
  %v3023 = vld [vmem:[%s3 + $0xf0] sm:$0xff]
  %v3024 = vld [vmem:[%s3 + $0xf8] sm:$0xff]
  %v3025 = vld [vmem:[%s3 + $0x100] sm:$0xff]
  %v3026 = vld [vmem:[%s3 + $0x108] sm:$0xff]
  %v3027 = vld [vmem:[%s3 + $0x110] sm:$0xff]
  %v3028 = vld [vmem:[%s3 + $0x118] sm:$0xff]
  %v3029 = vld [vmem:[%s3 + $0x120] sm:$0xff]
  %v3030 = vld [vmem:[%s3 + $0x128] sm:$0xff]
  %v3031 = vld [vmem:[%s3 + $0x130] sm:$0xff]
  %v3032 = vld [vmem:[%s3 + $0x138] sm:$0xff]
  %v3033 = vld [vmem:[%s3 + $0x140] sm:$0xff]
  %v3034 = vld [vmem:[%s3 + $0x148] sm:$0xff]
  %v3035 = vld [vmem:[%s3 + $0x150] sm:$0xff]
  %v3036 = vld [vmem:[%s3 + $0x158] sm:$0xff]
  %v3037 = vld [vmem:[%s3 + $0x160] sm:$0xff]
  %v3038 = vld [vmem:[%s3 + $0x168] sm:$0xff]
  %v3039 = vld [vmem:[%s3 + $0x170] sm:$0xff]
  %v3040 = vld [vmem:[%s3 + $0x178] sm:$0xff]
  %v3041 = vld [vmem:[%s3 + $0x180] sm:$0xff]
  %v3042 = vld [vmem:[%s3 + $0x188] sm:$0xff]
  %v3043 = vld [vmem:[%s3 + $0x190] sm:$0xff]
  %v3044 = vld [vmem:[%s3 + $0x198] sm:$0xff]
  %v3045 = vld [vmem:[%s3 + $0x1a0] sm:$0xff]
  %v3046 = vld [vmem:[%s3 + $0x1a8] sm:$0xff]
  %v3047 = vld [vmem:[%s3 + $0x1b0] sm:$0xff]
  %v3048 = vld [vmem:[%s3 + $0x1b8] sm:$0xff]
  %v3049 = vld [vmem:[%s3 + $0x1c0] sm:$0xff]
  %v3050 = vld [vmem:[%s3 + $0x1c8] sm:$0xff]
  %v3051 = vld [vmem:[%s3 + $0x1d0] sm:$0xff]
  %v3052 = vld [vmem:[%s3 + $0x1d8] sm:$0xff]
  %v3053 = vld [vmem:[%s3 + $0x1e0] sm:$0xff]
  %v3054 = vld [vmem:[%s3 + $0x1e8] sm:$0xff]
  %v3055 = vld [vmem:[%s3 + $0x1f0] sm:$0xff]
  %v3056 = vld [vmem:[%s3 + $0x1f8] sm:$0xff]
  %v3057 = vld [vmem:[%s3 + $0x200] sm:$0xff]
  %v3058 = vld [vmem:[%s3 + $0x208] sm:$0xff]
  %v3059 = vld [vmem:[%s3 + $0x210] sm:$0xff]
  %v3060 = vld [vmem:[%s3 + $0x218] sm:$0xff]
  %v3061 = vld [vmem:[%s3 + $0x220] sm:$0xff]
  %v3062 = vld [vmem:[%s3 + $0x228] sm:$0xff]
  %v3063 = vld [vmem:[%s3 + $0x230] sm:$0xff]
  %v3064 = vld [vmem:[%s3 + $0x238] sm:$0xff]
  %v3065 = vld [vmem:[%s3 + $0x240] sm:$0xff]
  %v3066 = vld [vmem:[%s3 + $0x248] sm:$0xff]
  %v3067 = vld [vmem:[%s3 + $0x250] sm:$0xff]
  %v3068 = vld [vmem:[%s3 + $0x258] sm:$0xff]
  %v3069 = vld [vmem:[%s3 + $0x260] sm:$0xff]
  %v3070 = vld [vmem:[%s3 + $0x268] sm:$0xff]
  %v3071 = vld [vmem:[%s3 + $0x270] sm:$0xff]
  %v3072 = vld [vmem:[%s3 + $0x278] sm:$0xff]
  %v3073 = vld [vmem:[%s3 + $0x280] sm:$0xff]
  %v3074 = vld [vmem:[%s3 + $0x288] sm:$0xff]
  %v3075 = vld [vmem:[%s3 + $0x290] sm:$0xff]
  %v3076 = vld [vmem:[%s3 + $0x298] sm:$0xff]
  %v3077 = vld [vmem:[%s3 + $0x2a0] sm:$0xff]
  %v3078 = vld [vmem:[%s3 + $0x2a8] sm:$0xff]
  %v3079 = vld [vmem:[%s3 + $0x2b0] sm:$0xff]
  %v3080 = vld [vmem:[%s3 + $0x2b8] sm:$0xff]
  %v3081 = vld [vmem:[%s3 + $0x2c0] sm:$0xff]
  %v3082 = vld [vmem:[%s3 + $0x2c8] sm:$0xff]
  %v3083 = vld [vmem:[%s3 + $0x2d0] sm:$0xff]
  %v3084 = vld [vmem:[%s3 + $0x2d8] sm:$0xff]
  %v3085 = vld [vmem:[%s3 + $0x2e0] sm:$0xff]
  %v3086 = vld [vmem:[%s3 + $0x2e8] sm:$0xff]
  %v3087 = vld [vmem:[%s3 + $0x2f0] sm:$0xff]
  %v3088 = vld [vmem:[%s3 + $0x2f8] sm:$0xff]
  %v3089 = vld [vmem:[%s3 + $0x300] sm:$0xff]
  %v3090 = vld [vmem:[%s3 + $0x308] sm:$0xff]
  %v3091 = vld [vmem:[%s3 + $0x310] sm:$0xff]
  %v3092 = vld [vmem:[%s3 + $0x318] sm:$0xff]
  %v3093 = vld [vmem:[%s3 + $0x320] sm:$0xff]
  %v3094 = vld [vmem:[%s3 + $0x328] sm:$0xff]
  %v3095 = vld [vmem:[%s3 + $0x330] sm:$0xff]
  %v3096 = vld [vmem:[%s3 + $0x338] sm:$0xff]
  %v3097 = vld [vmem:[%s3 + $0x340] sm:$0xff]
  %v3098 = vld [vmem:[%s3 + $0x348] sm:$0xff]
  %v3099 = vld [vmem:[%s3 + $0x350] sm:$0xff]
  %v3100 = vld [vmem:[%s3 + $0x358] sm:$0xff]
  %v3101 = vld [vmem:[%s3 + $0x360] sm:$0xff]
  %v3102 = vld [vmem:[%s3 + $0x368] sm:$0xff]
  %v3103 = vld [vmem:[%s3 + $0x370] sm:$0xff]
  %v3104 = vld [vmem:[%s3 + $0x378] sm:$0xff]
  %v3105 = vld [vmem:[%s3 + $0x380] sm:$0xff]
  %v3106 = vld [vmem:[%s3 + $0x388] sm:$0xff]
  %v3107 = vld [vmem:[%s3 + $0x390] sm:$0xff]
  %v3108 = vld [vmem:[%s3 + $0x398] sm:$0xff]
  %v3109 = vld [vmem:[%s3 + $0x3a0] sm:$0xff]
  %v3110 = vld [vmem:[%s3 + $0x3a8] sm:$0xff]
  %v3111 = vld [vmem:[%s3 + $0x3b0] sm:$0xff]
  %v3112 = vld [vmem:[%s3 + $0x3b8] sm:$0xff]
  %v3113 = vld [vmem:[%s3 + $0x3c0] sm:$0xff]
  %v3114 = vld [vmem:[%s3 + $0x3c8] sm:$0xff]
  %v3115 = vld [vmem:[%s3 + $0x3d0] sm:$0xff]
  %v3116 = vld [vmem:[%s3 + $0x3d8] sm:$0xff]
  %v3117 = vld [vmem:[%s3 + $0x3e0] sm:$0xff]
  %v3118 = vld [vmem:[%s3 + $0x3e8] sm:$0xff]
  %v3119 = vld [vmem:[%s3 + $0x3f0] sm:$0xff]
  %v3120 = vld [vmem:[%s3 + $0x3f8] sm:$0xff]
  %v3121 = vld [vmem:[%s3 + $0x400] sm:$0xff]
  %v3122 = vld [vmem:[%s3 + $0x408] sm:$0xff]
  %v3123 = vld [vmem:[%s3 + $0x410] sm:$0xff]
  %v3124 = vld [vmem:[%s3 + $0x418] sm:$0xff]
  %v3125 = vld [vmem:[%s3 + $0x420] sm:$0xff]
  %v3126 = vld [vmem:[%s3 + $0x428] sm:$0xff]
  %v3127 = vld [vmem:[%s3 + $0x430] sm:$0xff]
  %v3128 = vld [vmem:[%s3 + $0x438] sm:$0xff]
  %v3129 = vld [vmem:[%s3 + $0x440] sm:$0xff]
  %v3130 = vld [vmem:[%s3 + $0x448] sm:$0xff]
  %v3131 = vld [vmem:[%s3 + $0x450] sm:$0xff]
  %v3132 = vld [vmem:[%s3 + $0x458] sm:$0xff]
  %v3133 = vld [vmem:[%s3 + $0x460] sm:$0xff]
  %v3134 = vld [vmem:[%s3 + $0x468] sm:$0xff]
  %v3135 = vld [vmem:[%s3 + $0x470] sm:$0xff]
  %v3136 = vld [vmem:[%s3 + $0x478] sm:$0xff]
  %v3137 = vld [vmem:[%s3 + $0x480] sm:$0xff]
  %v3138 = vld [vmem:[%s3 + $0x488] sm:$0xff]
  %v3139 = vld [vmem:[%s3 + $0x490] sm:$0xff]
  %v3140 = vld [vmem:[%s3 + $0x498] sm:$0xff]
  %v3141 = vld [vmem:[%s3 + $0x4a0] sm:$0xff]
  %v3142 = vld [vmem:[%s3 + $0x4a8] sm:$0xff]
  %v3143 = vld [vmem:[%s3 + $0x4b0] sm:$0xff]
  %v3144 = vld [vmem:[%s3 + $0x4b8] sm:$0xff]
  %v3145 = vld [vmem:[%s3 + $0x4c0] sm:$0xff]
  %v3146 = vld [vmem:[%s3 + $0x4c8] sm:$0xff]
  %v3147 = vld [vmem:[%s3 + $0x4d0] sm:$0xff]
  %v3148 = vld [vmem:[%s3 + $0x4d8] sm:$0xff]
  %v3149 = vld [vmem:[%s3 + $0x4e0] sm:$0xff]
  %v3150 = vld [vmem:[%s3 + $0x4e8] sm:$0xff]
  %v3151 = vld [vmem:[%s3 + $0x4f0] sm:$0xff]
  %v3152 = vld [vmem:[%s3 + $0x4f8] sm:$0xff]
  %v3153 = vld [vmem:[%s3 + $0x500] sm:$0xff]
  %v3154 = vld [vmem:[%s3 + $0x508] sm:$0xff]
  %v3155 = vld [vmem:[%s3 + $0x510] sm:$0xff]
  %v3156 = vld [vmem:[%s3 + $0x518] sm:$0xff]
  %v3157 = vld [vmem:[%s3 + $0x520] sm:$0xff]
  %v3158 = vld [vmem:[%s3 + $0x528] sm:$0xff]
  %v3159 = vld [vmem:[%s3 + $0x530] sm:$0xff]
  %v3160 = vld [vmem:[%s3 + $0x538] sm:$0xff]
  %v3161 = vld [vmem:[%s3 + $0x540] sm:$0xff]
  %v3162 = vld [vmem:[%s3 + $0x548] sm:$0xff]
  %v3163 = vld [vmem:[%s3 + $0x550] sm:$0xff]
  %v3164 = vld [vmem:[%s3 + $0x558] sm:$0xff]
  %v3165 = vld [vmem:[%s3 + $0x560] sm:$0xff]
  %v3166 = vld [vmem:[%s3 + $0x568] sm:$0xff]
  %v3167 = vld [vmem:[%s3 + $0x570] sm:$0xff]
  %v3168 = vld [vmem:[%s3 + $0x578] sm:$0xff]
  %v3169 = vld [vmem:[%s3 + $0x580] sm:$0xff]
  %v3170 = vld [vmem:[%s3 + $0x588] sm:$0xff]
  %v3171 = vld [vmem:[%s3 + $0x590] sm:$0xff]
  %v3172 = vld [vmem:[%s3 + $0x598] sm:$0xff]
  %v3173 = vld [vmem:[%s3 + $0x5a0] sm:$0xff]
  %v3174 = vld [vmem:[%s3 + $0x5a8] sm:$0xff]
  %v3175 = vld [vmem:[%s3 + $0x5b0] sm:$0xff]
  %v3176 = vld [vmem:[%s3 + $0x5b8] sm:$0xff]
  %v3177 = vld [vmem:[%s3 + $0x5c0] sm:$0xff]
  %v3178 = vld [vmem:[%s3 + $0x5c8] sm:$0xff]
  %v3179 = vld [vmem:[%s3 + $0x5d0] sm:$0xff]
  %v3180 = vld [vmem:[%s3 + $0x5d8] sm:$0xff]
  %v3181 = vld [vmem:[%s3 + $0x5e0] sm:$0xff]
  %v3182 = vld [vmem:[%s3 + $0x5e8] sm:$0xff]
  %v3183 = vld [vmem:[%s3 + $0x5f0] sm:$0xff]
  %v3184 = vld [vmem:[%s3 + $0x5f8] sm:$0xff]
  %v3185 = vld [vmem:[%s3 + $0x600] sm:$0xff]
  %v3186 = vld [vmem:[%s3 + $0x608] sm:$0xff]
  %v3187 = vld [vmem:[%s3 + $0x610] sm:$0xff]
  %v3188 = vld [vmem:[%s3 + $0x618] sm:$0xff]
  %v3189 = vld [vmem:[%s3 + $0x620] sm:$0xff]
  %v3190 = vld [vmem:[%s3 + $0x628] sm:$0xff]
  %v3191 = vld [vmem:[%s3 + $0x630] sm:$0xff]
  %v3192 = vld [vmem:[%s3 + $0x638] sm:$0xff]
  %v3193 = vld [vmem:[%s3 + $0x640] sm:$0xff]
  %v3194 = vld [vmem:[%s3 + $0x648] sm:$0xff]
  %v3195 = vld [vmem:[%s3 + $0x650] sm:$0xff]
  %v3196 = vld [vmem:[%s3 + $0x658] sm:$0xff]
  %v3197 = vld [vmem:[%s3 + $0x660] sm:$0xff]
  %v3198 = vld [vmem:[%s3 + $0x668] sm:$0xff]
  %v3199 = vld [vmem:[%s3 + $0x670] sm:$0xff]
  %v3200 = vld [vmem:[%s3 + $0x678] sm:$0xff]
  %v3201 = vld [vmem:[%s3 + $0x680] sm:$0xff]
  %v3202 = vld [vmem:[%s3 + $0x688] sm:$0xff]
  %v3203 = vld [vmem:[%s3 + $0x690] sm:$0xff]
  %v3204 = vld [vmem:[%s3 + $0x698] sm:$0xff]
  %v3205 = vld [vmem:[%s3 + $0x6a0] sm:$0xff]
  %v3206 = vld [vmem:[%s3 + $0x6a8] sm:$0xff]
  %v3207 = vld [vmem:[%s3 + $0x6b0] sm:$0xff]
  %v3208 = vld [vmem:[%s3 + $0x6b8] sm:$0xff]
  %v3209 = vld [vmem:[%s3 + $0x6c0] sm:$0xff]
  %v3210 = vld [vmem:[%s3 + $0x6c8] sm:$0xff]
  %v3211 = vld [vmem:[%s3 + $0x6d0] sm:$0xff]
  %v3212 = vld [vmem:[%s3 + $0x6d8] sm:$0xff]
  %v3213 = vld [vmem:[%s3 + $0x6e0] sm:$0xff]
  %v3214 = vld [vmem:[%s3 + $0x6e8] sm:$0xff]
  %v3215 = vld [vmem:[%s3 + $0x6f0] sm:$0xff]
  %v3216 = vld [vmem:[%s3 + $0x6f8] sm:$0xff]
  %v3217 = vld [vmem:[%s3 + $0x700] sm:$0xff]
  %v3218 = vld [vmem:[%s3 + $0x708] sm:$0xff]
  %v3219 = vld [vmem:[%s3 + $0x710] sm:$0xff]
  %v3220 = vld [vmem:[%s3 + $0x718] sm:$0xff]
  %v3221 = vld [vmem:[%s3 + $0x720] sm:$0xff]
  %v3222 = vld [vmem:[%s3 + $0x728] sm:$0xff]
  %v3223 = vld [vmem:[%s3 + $0x730] sm:$0xff]
  %v3224 = vld [vmem:[%s3 + $0x738] sm:$0xff]
  %v3225 = vld [vmem:[%s3 + $0x740] sm:$0xff]
  %v3226 = vld [vmem:[%s3 + $0x748] sm:$0xff]
  %v3227 = vld [vmem:[%s3 + $0x750] sm:$0xff]
  %v3228 = vld [vmem:[%s3 + $0x758] sm:$0xff]
  %v3229 = vld [vmem:[%s3 + $0x760] sm:$0xff]
  %v3230 = vld [vmem:[%s3 + $0x768] sm:$0xff]
  %v3231 = vld [vmem:[%s3 + $0x770] sm:$0xff]
  %v3232 = vld [vmem:[%s3 + $0x778] sm:$0xff]
  %v3233 = vld [vmem:[%s3 + $0x780] sm:$0xff]
  %v3234 = vld [vmem:[%s3 + $0x788] sm:$0xff]
  %v3235 = vld [vmem:[%s3 + $0x790] sm:$0xff]
  %v3236 = vld [vmem:[%s3 + $0x798] sm:$0xff]
  %v3237 = vld [vmem:[%s3 + $0x7a0] sm:$0xff]
  %v3238 = vld [vmem:[%s3 + $0x7a8] sm:$0xff]
  %v3239 = vld [vmem:[%s3 + $0x7b0] sm:$0xff]
  %v3240 = vld [vmem:[%s3 + $0x7b8] sm:$0xff]
  %v3241 = vld [vmem:[%s3 + $0x7c0] sm:$0xff]
  %v3242 = vld [vmem:[%s3 + $0x7c8] sm:$0xff]
  %v3243 = vld [vmem:[%s3 + $0x7d0] sm:$0xff]
  %v3244 = vld [vmem:[%s3 + $0x7d8] sm:$0xff]
  %v3245 = vld [vmem:[%s3 + $0x7e0] sm:$0xff]
  %v3246 = vld [vmem:[%s3 + $0x7e8] sm:$0xff]
  %v3247 = vld [vmem:[%s3 + $0x7f0] sm:$0xff]
  %v3248 = vld [vmem:[%s3 + $0x7f8] sm:$0xff]
  %v3249 = vld [vmem:[%s3 + $0x800] sm:$0xff]
  %v3250 = vld [vmem:[%s3 + $0x808] sm:$0xff]
  %v3251 = vld [vmem:[%s3 + $0x810] sm:$0xff]
  %v3252 = vld [vmem:[%s3 + $0x818] sm:$0xff]
  %v3253 = vld [vmem:[%s3 + $0x820] sm:$0xff]
  %v3254 = vld [vmem:[%s3 + $0x828] sm:$0xff]
  %v3255 = vld [vmem:[%s3 + $0x830] sm:$0xff]
  %v3256 = vld [vmem:[%s3 + $0x838] sm:$0xff]
  %v3257 = vld [vmem:[%s3 + $0x840] sm:$0xff]
  %v3258 = vld [vmem:[%s3 + $0x848] sm:$0xff]
  %v3259 = vld [vmem:[%s3 + $0x850] sm:$0xff]
  %v3260 = vld [vmem:[%s3 + $0x858] sm:$0xff]
  %v3261 = vld [vmem:[%s3 + $0x860] sm:$0xff]
  %v3262 = vld [vmem:[%s3 + $0x868] sm:$0xff]
  %v3263 = vld [vmem:[%s3 + $0x870] sm:$0xff]
  %v3264 = vld [vmem:[%s3 + $0x878] sm:$0xff]
  %v3265 = vld [vmem:[%s3 + $0x880] sm:$0xff]
  %v3266 = vld [vmem:[%s3 + $0x888] sm:$0xff]
  %v3267 = vld [vmem:[%s3 + $0x890] sm:$0xff]
  %v3268 = vld [vmem:[%s3 + $0x898] sm:$0xff]
  %v3269 = vld [vmem:[%s3 + $0x8a0] sm:$0xff]
  %v3270 = vld [vmem:[%s3 + $0x8a8] sm:$0xff]
  %v3271 = vld [vmem:[%s3 + $0x8b0] sm:$0xff]
  %v3272 = vld [vmem:[%s3 + $0x8b8] sm:$0xff]
  %v3273 = vld [vmem:[%s3 + $0x8c0] sm:$0xff]
  %v3274 = vld [vmem:[%s3 + $0x8c8] sm:$0xff]
  %v3275 = vld [vmem:[%s3 + $0x8d0] sm:$0xff]
  %v3276 = vld [vmem:[%s3 + $0x8d8] sm:$0xff]
  %v3277 = vld [vmem:[%s3 + $0x8e0] sm:$0xff]
  %v3278 = vld [vmem:[%s3 + $0x8e8] sm:$0xff]
  %v3279 = vld [vmem:[%s3 + $0x8f0] sm:$0xff]
  %v3280 = vld [vmem:[%s3 + $0x8f8] sm:$0xff]
  %v3281 = vld [vmem:[%s3 + $0x900] sm:$0xff]
  %v3282 = vld [vmem:[%s3 + $0x908] sm:$0xff]
  %v3283 = vld [vmem:[%s3 + $0x910] sm:$0xff]
  %v3284 = vld [vmem:[%s3 + $0x918] sm:$0xff]
  %v3285 = vld [vmem:[%s3 + $0x920] sm:$0xff]
  %v3286 = vld [vmem:[%s3 + $0x928] sm:$0xff]
  %v3287 = vld [vmem:[%s3 + $0x930] sm:$0xff]
  %v3288 = vld [vmem:[%s3 + $0x938] sm:$0xff]
  %v3289 = vld [vmem:[%s3 + $0x940] sm:$0xff]
  %v3290 = vld [vmem:[%s3 + $0x948] sm:$0xff]
  %v3291 = vld [vmem:[%s3 + $0x950] sm:$0xff]
  %v3292 = vld [vmem:[%s3 + $0x958] sm:$0xff]
  %v3293 = vld [vmem:[%s3 + $0x960] sm:$0xff]
  %v3294 = vld [vmem:[%s3 + $0x968] sm:$0xff]
  %v3295 = vld [vmem:[%s3 + $0x970] sm:$0xff]
  %v3296 = vld [vmem:[%s3 + $0x978] sm:$0xff]
  %v3297 = vld [vmem:[%s3 + $0x980] sm:$0xff]
  %v3298 = vld [vmem:[%s3 + $0x988] sm:$0xff]
  %v3299 = vld [vmem:[%s3 + $0x990] sm:$0xff]
  %v3300 = vld [vmem:[%s3 + $0x998] sm:$0xff]
  %v3301 = vld [vmem:[%s3 + $0x9a0] sm:$0xff]
  %v3302 = vld [vmem:[%s3 + $0x9a8] sm:$0xff]
  %v3303 = vld [vmem:[%s3 + $0x9b0] sm:$0xff]
  %v3304 = vld [vmem:[%s3 + $0x9b8] sm:$0xff]
  %v3305 = vld [vmem:[%s3 + $0x9c0] sm:$0xff]
  %v3306 = vld [vmem:[%s3 + $0x9c8] sm:$0xff]
  %v3307 = vld [vmem:[%s3 + $0x9d0] sm:$0xff]
  %v3308 = vld [vmem:[%s3 + $0x9d8] sm:$0xff]
  %v3309 = vld [vmem:[%s3 + $0x9e0] sm:$0xff]
  %v3310 = vld [vmem:[%s3 + $0x9e8] sm:$0xff]
  %v3311 = vld [vmem:[%s3 + $0x9f0] sm:$0xff]
  %v3312 = vld [vmem:[%s3 + $0x9f8] sm:$0xff]
  %v3313 = vld [vmem:[%s3 + $0xa00] sm:$0xff]
  %v3314 = vld [vmem:[%s3 + $0xa08] sm:$0xff]
  %v3315 = vld [vmem:[%s3 + $0xa10] sm:$0xff]
  %v3316 = vld [vmem:[%s3 + $0xa18] sm:$0xff]
  %v3317 = vld [vmem:[%s3 + $0xa20] sm:$0xff]
  %v3318 = vld [vmem:[%s3 + $0xa28] sm:$0xff]
  %v3319 = vld [vmem:[%s3 + $0xa30] sm:$0xff]
  %v3320 = vld [vmem:[%s3 + $0xa38] sm:$0xff]
  %v3321 = vld [vmem:[%s3 + $0xa40] sm:$0xff]
  %v3322 = vld [vmem:[%s3 + $0xa48] sm:$0xff]
  %v3323 = vld [vmem:[%s3 + $0xa50] sm:$0xff]
  %v3324 = vld [vmem:[%s3 + $0xa58] sm:$0xff]
  %v3325 = vld [vmem:[%s3 + $0xa60] sm:$0xff]
  %v3326 = vld [vmem:[%s3 + $0xa68] sm:$0xff]
  %v3327 = vld [vmem:[%s3 + $0xa70] sm:$0xff]
  %v3328 = vld [vmem:[%s3 + $0xa78] sm:$0xff]
  %v3329 = vld [vmem:[%s3 + $0xa80] sm:$0xff]
  %v3330 = vld [vmem:[%s3 + $0xa88] sm:$0xff]
  %v3331 = vld [vmem:[%s3 + $0xa90] sm:$0xff]
  %v3332 = vld [vmem:[%s3 + $0xa98] sm:$0xff]
  %v3333 = vld [vmem:[%s3 + $0xaa0] sm:$0xff]
  %v3334 = vld [vmem:[%s3 + $0xaa8] sm:$0xff]
  %v3335 = vld [vmem:[%s3 + $0xab0] sm:$0xff]
  %v3336 = vld [vmem:[%s3 + $0xab8] sm:$0xff]
  %v3337 = vld [vmem:[%s3 + $0xac0] sm:$0xff]
  %v3338 = vld [vmem:[%s3 + $0xac8] sm:$0xff]
  %v3339 = vld [vmem:[%s3 + $0xad0] sm:$0xff]
  %v3340 = vld [vmem:[%s3 + $0xad8] sm:$0xff]
  %v3341 = vld [vmem:[%s3 + $0xae0] sm:$0xff]
  %v3342 = vld [vmem:[%s3 + $0xae8] sm:$0xff]
  %v3343 = vld [vmem:[%s3 + $0xaf0] sm:$0xff]
  %v3344 = vld [vmem:[%s3 + $0xaf8] sm:$0xff]
  %v3345 = vld [vmem:[%s3 + $0xb00] sm:$0xff]
  %v3346 = vld [vmem:[%s3 + $0xb08] sm:$0xff]
  %v3347 = vld [vmem:[%s3 + $0xb10] sm:$0xff]
  %v3348 = vld [vmem:[%s3 + $0xb18] sm:$0xff]
  %v3349 = vld [vmem:[%s3 + $0xb20] sm:$0xff]
  %v3350 = vld [vmem:[%s3 + $0xb28] sm:$0xff]
  %v3351 = vld [vmem:[%s3 + $0xb30] sm:$0xff]
  %v3352 = vld [vmem:[%s3 + $0xb38] sm:$0xff]
  %v3353 = vld [vmem:[%s3 + $0xb40] sm:$0xff]
  %v3354 = vld [vmem:[%s3 + $0xb48] sm:$0xff]
  %v3355 = vld [vmem:[%s3 + $0xb50] sm:$0xff]
  %v3356 = vld [vmem:[%s3 + $0xb58] sm:$0xff]
  %v3357 = vld [vmem:[%s3 + $0xb60] sm:$0xff]
  %v3358 = vld [vmem:[%s3 + $0xb68] sm:$0xff]
  %v3359 = vld [vmem:[%s3 + $0xb70] sm:$0xff]
  %v3360 = vld [vmem:[%s3 + $0xb78] sm:$0xff]
  %v3361 = vld [vmem:[%s3 + $0xb80] sm:$0xff]
  %v3362 = vld [vmem:[%s3 + $0xb88] sm:$0xff]
  %v3363 = vld [vmem:[%s3 + $0xb90] sm:$0xff]
  %v3364 = vld [vmem:[%s3 + $0xb98] sm:$0xff]
  %vm3365 = vcmask 654336
  %v3367 = vsel %vm3365, %v3004, 0
  %v3370 = vsel %vm3365, %v3016, 0
  %v3373 = vsel %vm3365, %v3028, 0
  %v3376 = vsel %vm3365, %v3040, 0
  %v3379 = vsel %vm3365, %v3052, 0
  %v3382 = vsel %vm3365, %v3064, 0
  %v3385 = vsel %vm3365, %v3076, 0
  %v3388 = vsel %vm3365, %v3088, 0
  %v3391 = vsel %vm3365, %v3100, 0
  %v3394 = vsel %vm3365, %v3112, 0
  %v3397 = vsel %vm3365, %v3124, 0
  %v3400 = vsel %vm3365, %v3136, 0
  %v3403 = vsel %vm3365, %v3148, 0
  %v3406 = vsel %vm3365, %v3160, 0
  %v3409 = vsel %vm3365, %v3172, 0
  %v3412 = vsel %vm3365, %v3184, 0
  %v3415 = vsel %vm3365, %v3196, 0
  %v3418 = vsel %vm3365, %v3208, 0
  %v3421 = vsel %vm3365, %v3220, 0
  %v3424 = vsel %vm3365, %v3232, 0
  %v3427 = vsel %vm3365, %v3244, 0
  %v3430 = vsel %vm3365, %v3256, 0
  %v3433 = vsel %vm3365, %v3268, 0
  %v3436 = vsel %vm3365, %v3280, 0
  %v3439 = vsel %vm3365, %v3292, 0
  %v3442 = vsel %vm3365, %v3304, 0
  %v3445 = vsel %vm3365, %v3316, 0
  %v3448 = vsel %vm3365, %v3328, 0
  %v3451 = vsel %vm3365, %v3340, 0
  %v3454 = vsel %vm3365, %v3352, 0
  %v3457 = vsel %vm3365, %v3364, 0
  %3459 = vmatprep.subr.mxu0 0.0
  %3460 = vmatpush1.msra.mxu0 %v2807
  %3461 = vmatprep.subr.mxu0 0.0
  %3462 = vmatpush1.msra.mxu0 %v2808
  %3463 = vmatprep.subr.mxu0 0.0
  %3464 = vmatpush1.msra.mxu0 %v2809
  %3465 = vmatprep.subr.mxu0 0.0
  %3466 = vmatpush1.msra.mxu0 %v2810
  %3467 = vmatprep.subr.mxu0 0.0
  %3468 = vmatpush1.msra.mxu0 %v2811
  %3469 = vmatprep.subr.mxu0 0.0
  %3470 = vmatpush1.msra.mxu0 %v2812
  %3471 = vmatprep.subr.mxu0 0.0
  %3472 = vmatpush1.msra.mxu0 %v2813
  %3473 = vmatprep.subr.mxu0 0.0
  %3474 = vmatpush1.msra.mxu0 %v2814
  %3475 = vmatprep.subr.mxu0 0.0
  %3476 = vmatpush1.msra.mxu0 %v2815
  %3477 = vmatprep.subr.mxu0 0.0
  %3478 = vmatpush1.msra.mxu0 %v2816
  %3479 = vmatprep.subr.mxu0 0.0
  %3480 = vmatpush1.msra.mxu0 %v2817
  %3481 = vmatprep.subr.mxu0 0.0
  %3482 = vmatpush1.msra.mxu0 %v2818
  %3483 = vmatprep.subr.mxu0 0.0
  %3484 = vmatpush1.msra.mxu0 %v2819
  %3485 = vmatprep.subr.mxu0 0.0
  %3486 = vmatpush1.msra.mxu0 %v2820
  %3487 = vmatprep.subr.mxu0 0.0
  %3488 = vmatpush1.msra.mxu0 %v2821
  %3489 = vmatprep.subr.mxu0 0.0
  %3490 = vmatpush1.msra.mxu0 %v2822
  %3491 = vmatprep.subr.mxu0 0.0
  %3492 = vmatpush1.msra.mxu0 %v2823
  %3493 = vmatprep.subr.mxu0 0.0
  %3494 = vmatpush1.msra.mxu0 %v2824
  %3495 = vmatprep.subr.mxu0 0.0
  %3496 = vmatpush1.msra.mxu0 %v2825
  %3497 = vmatprep.subr.mxu0 0.0
  %3498 = vmatpush1.msra.mxu0 %v2826
  %3499 = vmatprep.subr.mxu0 0.0
  %3500 = vmatpush1.msra.mxu0 %v2827
  %3501 = vmatprep.subr.mxu0 0.0
  %3502 = vmatpush1.msra.mxu0 %v2828
  %3503 = vmatprep.subr.mxu0 0.0
  %3504 = vmatpush1.msra.mxu0 %v2829
  %3505 = vmatprep.subr.mxu0 0.0
  %3506 = vmatpush1.msra.mxu0 %v2830
  %3507 = vmatprep.subr.mxu0 0.0
  %3508 = vmatpush1.msra.mxu0 %v2831
  %3509 = vmatprep.subr.mxu0 0.0
  %3510 = vmatpush1.msra.mxu0 %v2832
  %3511 = vmatprep.subr.mxu0 0.0
  %3512 = vmatpush1.msra.mxu0 %v2833
  %3513 = vmatprep.subr.mxu0 0.0
  %3514 = vmatpush1.msra.mxu0 %v2834
  %3515 = vmatprep.subr.mxu0 0.0
  %3516 = vmatpush1.msra.mxu0 %v2835
  %3517 = vmatprep.subr.mxu0 0.0
  %3518 = vmatpush1.msra.mxu0 %v2836
  %3519 = vmatprep.subr.mxu0 0.0
  %3520 = vmatpush1.msra.mxu0 %v2837
  %3521 = vmatprep.subr.mxu0 0.0
  %3522 = vmatpush1.msra.mxu0 %v2838
  %3523 = vmatprep.mubr.f32.mxu0 %v2994
  %3524 = vmatmul.mubr.f32.gmra.mrb[0].mxu0 %v2993
  %v3525 = vpop.f32.mrb[0].mxu0
  %v3526 = vadd.f32 0.0, %v3525
  %v3527 = vpop.f32.mrb[0].mxu0
  %3528 = vmatprep.mubr.f32.mxu0 %v3006
  %3529 = vmatmul.mubr.f32.gmra.mrb[0].mxu0 %v3005
  %v3530 = vpop.f32.mrb[0].mxu0
  %v3531 = vadd.f32 0.0, %v3530
  %v3532 = vpop.f32.mrb[0].mxu0
  %3533 = vmatprep.mubr.f32.mxu0 %v3018
  %3534 = vmatmul.mubr.f32.gmra.mrb[0].mxu0 %v3017
  %v3535 = vpop.f32.mrb[0].mxu0
  %v3536 = vadd.f32 0.0, %v3535
  %v3537 = vpop.f32.mrb[0].mxu0
  %3538 = vmatprep.mubr.f32.mxu0 %v3030
  %3539 = vmatmul.mubr.f32.gmra.mrb[0].mxu0 %v3029
  %v3540 = vpop.f32.mrb[0].mxu0
  %v3541 = vadd.f32 0.0, %v3540
  %v3542 = vpop.f32.mrb[0].mxu0
  %3543 = vmatprep.mubr.f32.mxu0 %v3042
  %3544 = vmatmul.mubr.f32.gmra.mrb[0].mxu0 %v3041
  %v3545 = vpop.f32.mrb[0].mxu0
  %v3546 = vadd.f32 0.0, %v3545
  %v3547 = vpop.f32.mrb[0].mxu0
  %3548 = vmatprep.mubr.f32.mxu0 %v3054
  %3549 = vmatmul.mubr.f32.gmra.mrb[0].mxu0 %v3053
  %v3550 = vpop.f32.mrb[0].mxu0
  %v3551 = vadd.f32 0.0, %v3550
  %v3552 = vpop.f32.mrb[0].mxu0
  %3553 = vmatprep.mubr.f32.mxu0 %v3066
  %3554 = vmatmul.mubr.f32.gmra.mrb[0].mxu0 %v3065
  %v3555 = vpop.f32.mrb[0].mxu0
  %v3556 = vadd.f32 0.0, %v3555
  %v3557 = vpop.f32.mrb[0].mxu0
  %3558 = vmatprep.mubr.f32.mxu0 %v3078
  %3559 = vmatmul.mubr.f32.gmra.mrb[0].mxu0 %v3077
  %v3560 = vpop.f32.mrb[0].mxu0
  %v3561 = vadd.f32 0.0, %v3560
  %v3562 = vpop.f32.mrb[0].mxu0
  %3563 = vmatprep.mubr.f32.mxu0 %v3090
  %3564 = vmatmul.mubr.f32.gmra.mrb[0].mxu0 %v3089
  %v3565 = vpop.f32.mrb[0].mxu0
  %v3566 = vadd.f32 0.0, %v3565
  %v3567 = vpop.f32.mrb[0].mxu0
  %3568 = vmatprep.mubr.f32.mxu0 %v3102
  %3569 = vmatmul.mubr.f32.gmra.mrb[0].mxu0 %v3101
  %v3570 = vpop.f32.mrb[0].mxu0
  %v3571 = vadd.f32 0.0, %v3570
  %v3572 = vpop.f32.mrb[0].mxu0
  %3573 = vmatprep.mubr.f32.mxu0 %v3114
  %3574 = vmatmul.mubr.f32.gmra.mrb[0].mxu0 %v3113
  %v3575 = vpop.f32.mrb[0].mxu0
  %v3576 = vadd.f32 0.0, %v3575
  %v3577 = vpop.f32.mrb[0].mxu0
  %3578 = vmatprep.mubr.f32.mxu0 %v3126
  %3579 = vmatmul.mubr.f32.gmra.mrb[0].mxu0 %v3125
  %v3580 = vpop.f32.mrb[0].mxu0
  %v3581 = vadd.f32 0.0, %v3580
  %v3582 = vpop.f32.mrb[0].mxu0
  %3583 = vmatprep.mubr.f32.mxu0 %v3138
  %3584 = vmatmul.mubr.f32.gmra.mrb[0].mxu0 %v3137
  %v3585 = vpop.f32.mrb[0].mxu0
  %v3586 = vadd.f32 0.0, %v3585
  %v3587 = vpop.f32.mrb[0].mxu0
  %3588 = vmatprep.mubr.f32.mxu0 %v3150
  %3589 = vmatmul.mubr.f32.gmra.mrb[0].mxu0 %v3149
  %v3590 = vpop.f32.mrb[0].mxu0
  %v3591 = vadd.f32 0.0, %v3590
  %v3592 = vpop.f32.mrb[0].mxu0
  %3593 = vmatprep.mubr.f32.mxu0 %v3162
  %3594 = vmatmul.mubr.f32.gmra.mrb[0].mxu0 %v3161
  %v3595 = vpop.f32.mrb[0].mxu0
  %v3596 = vadd.f32 0.0, %v3595
  %v3597 = vpop.f32.mrb[0].mxu0
  %3598 = vmatprep.mubr.f32.mxu0 %v3174
  %3599 = vmatmul.mubr.f32.gmra.mrb[0].mxu0 %v3173
  %v3600 = vpop.f32.mrb[0].mxu0
  %v3601 = vadd.f32 0.0, %v3600
  %v3602 = vpop.f32.mrb[0].mxu0
  %3603 = vmatprep.mubr.f32.mxu0 %v3186
  %3604 = vmatmul.mubr.f32.gmra.mrb[0].mxu0 %v3185
  %v3605 = vpop.f32.mrb[0].mxu0
  %v3606 = vadd.f32 0.0, %v3605
  %v3607 = vpop.f32.mrb[0].mxu0
  %3608 = vmatprep.mubr.f32.mxu0 %v3198
  %3609 = vmatmul.mubr.f32.gmra.mrb[0].mxu0 %v3197
  %v3610 = vpop.f32.mrb[0].mxu0
  %v3611 = vadd.f32 0.0, %v3610
  %v3612 = vpop.f32.mrb[0].mxu0
  %3613 = vmatprep.mubr.f32.mxu0 %v3210
  %3614 = vmatmul.mubr.f32.gmra.mrb[0].mxu0 %v3209
  %v3615 = vpop.f32.mrb[0].mxu0
  %v3616 = vadd.f32 0.0, %v3615
  %v3617 = vpop.f32.mrb[0].mxu0
  %3618 = vmatprep.mubr.f32.mxu0 %v3222
  %3619 = vmatmul.mubr.f32.gmra.mrb[0].mxu0 %v3221
  %v3620 = vpop.f32.mrb[0].mxu0
  %v3621 = vadd.f32 0.0, %v3620
  %v3622 = vpop.f32.mrb[0].mxu0
  %3623 = vmatprep.mubr.f32.mxu0 %v3234
  %3624 = vmatmul.mubr.f32.gmra.mrb[0].mxu0 %v3233
  %v3625 = vpop.f32.mrb[0].mxu0
  %v3626 = vadd.f32 0.0, %v3625
  %v3627 = vpop.f32.mrb[0].mxu0
  %3628 = vmatprep.mubr.f32.mxu0 %v3246
  %3629 = vmatmul.mubr.f32.gmra.mrb[0].mxu0 %v3245
  %v3630 = vpop.f32.mrb[0].mxu0
  %v3631 = vadd.f32 0.0, %v3630
  %v3632 = vpop.f32.mrb[0].mxu0
  %3633 = vmatprep.mubr.f32.mxu0 %v3258
  %3634 = vmatmul.mubr.f32.gmra.mrb[0].mxu0 %v3257
  %v3635 = vpop.f32.mrb[0].mxu0
  %v3636 = vadd.f32 0.0, %v3635
  %v3637 = vpop.f32.mrb[0].mxu0
  %3638 = vmatprep.mubr.f32.mxu0 %v3270
  %3639 = vmatmul.mubr.f32.gmra.mrb[0].mxu0 %v3269
  %v3640 = vpop.f32.mrb[0].mxu0
  %v3641 = vadd.f32 0.0, %v3640
  %v3642 = vpop.f32.mrb[0].mxu0
  %3643 = vmatprep.mubr.f32.mxu0 %v3282
  %3644 = vmatmul.mubr.f32.gmra.mrb[0].mxu0 %v3281
  %v3645 = vpop.f32.mrb[0].mxu0
  %v3646 = vadd.f32 0.0, %v3645
  %v3647 = vpop.f32.mrb[0].mxu0
  %3648 = vmatprep.mubr.f32.mxu0 %v3294
  %3649 = vmatmul.mubr.f32.gmra.mrb[0].mxu0 %v3293
  %v3650 = vpop.f32.mrb[0].mxu0
  %v3651 = vadd.f32 0.0, %v3650
  %v3652 = vpop.f32.mrb[0].mxu0
  %3653 = vmatprep.mubr.f32.mxu0 %v3306
  %3654 = vmatmul.mubr.f32.gmra.mrb[0].mxu0 %v3305
  %v3655 = vpop.f32.mrb[0].mxu0
  %v3656 = vadd.f32 0.0, %v3655
  %v3657 = vpop.f32.mrb[0].mxu0
  %3658 = vmatprep.mubr.f32.mxu0 %v3318
  %3659 = vmatmul.mubr.f32.gmra.mrb[0].mxu0 %v3317
  %v3660 = vpop.f32.mrb[0].mxu0
  %v3661 = vadd.f32 0.0, %v3660
  %v3662 = vpop.f32.mrb[0].mxu0
  %3663 = vmatprep.mubr.f32.mxu0 %v3330
  %3664 = vmatmul.mubr.f32.gmra.mrb[0].mxu0 %v3329
  %v3665 = vpop.f32.mrb[0].mxu0
  %v3666 = vadd.f32 0.0, %v3665
  %v3667 = vpop.f32.mrb[0].mxu0
  %3668 = vmatprep.mubr.f32.mxu0 %v3342
  %3669 = vmatmul.mubr.f32.gmra.mrb[0].mxu0 %v3341
  %v3670 = vpop.f32.mrb[0].mxu0
  %v3671 = vadd.f32 0.0, %v3670
  %v3672 = vpop.f32.mrb[0].mxu0
  %3673 = vmatprep.mubr.f32.mxu0 %v3354
  %3674 = vmatmul.mubr.f32.gmra.mrb[0].mxu0 %v3353
  %v3675 = vpop.f32.mrb[0].mxu0
  %v3676 = vadd.f32 0.0, %v3675
  %v3677 = vpop.f32.mrb[0].mxu0
  %3678 = vdwg.mxu0
  %3679 = vmatprep.subr.mxu0 0.0
  %3680 = vmatpush1.msra.mxu0 %v2839
  %3681 = vmatprep.subr.mxu0 0.0
  %3682 = vmatpush1.msra.mxu0 %v2840
  %3683 = vmatprep.subr.mxu0 0.0
  %3684 = vmatpush1.msra.mxu0 %v2841
  %3685 = vmatprep.subr.mxu0 0.0
  %3686 = vmatpush1.msra.mxu0 %v2842
  %3687 = vmatprep.subr.mxu0 0.0
  %3688 = vmatpush1.msra.mxu0 %v2843
  %3689 = vmatprep.subr.mxu0 0.0
  %3690 = vmatpush1.msra.mxu0 %v2844
  %3691 = vmatprep.subr.mxu0 0.0
  %3692 = vmatpush1.msra.mxu0 %v2845
  %3693 = vmatprep.subr.mxu0 0.0
  %3694 = vmatpush1.msra.mxu0 %v2846
  %3695 = vmatprep.subr.mxu0 0.0
  %3696 = vmatpush1.msra.mxu0 %v2847
  %3697 = vmatprep.subr.mxu0 0.0
  %3698 = vmatpush1.msra.mxu0 %v2848
  %3699 = vmatprep.subr.mxu0 0.0
  %3700 = vmatpush1.msra.mxu0 %v2849
  %3701 = vmatprep.subr.mxu0 0.0
  %3702 = vmatpush1.msra.mxu0 %v2850
  %3703 = vmatprep.subr.mxu0 0.0
  %3704 = vmatpush1.msra.mxu0 %v2851
  %3705 = vmatprep.subr.mxu0 0.0
  %3706 = vmatpush1.msra.mxu0 %v2852
  %3707 = vmatprep.subr.mxu0 0.0
  %3708 = vmatpush1.msra.mxu0 %v2853
  %3709 = vmatprep.subr.mxu0 0.0
  %3710 = vmatpush1.msra.mxu0 %v2854
  %3711 = vmatprep.subr.mxu0 0.0
  %3712 = vmatpush1.msra.mxu0 %v2855
  %3713 = vmatprep.subr.mxu0 0.0
  %3714 = vmatpush1.msra.mxu0 %v2856
  %3715 = vmatprep.subr.mxu0 0.0
  %3716 = vmatpush1.msra.mxu0 %v2857
  %3717 = vmatprep.subr.mxu0 0.0
  %3718 = vmatpush1.msra.mxu0 %v2858
  %3719 = vmatprep.subr.mxu0 0.0
  %3720 = vmatpush1.msra.mxu0 %v2859
  %3721 = vmatprep.subr.mxu0 0.0
  %3722 = vmatpush1.msra.mxu0 %v2860
  %3723 = vmatprep.subr.mxu0 0.0
  %3724 = vmatpush1.msra.mxu0 %v2861
  %3725 = vmatprep.subr.mxu0 0.0
  %3726 = vmatpush1.msra.mxu0 %v2862
  %3727 = vmatprep.subr.mxu0 0.0
  %3728 = vmatpush1.msra.mxu0 %v2863
  %3729 = vmatprep.subr.mxu0 0.0
  %3730 = vmatpush1.msra.mxu0 %v2864
  %3731 = vmatprep.subr.mxu0 0.0
  %3732 = vmatpush1.msra.mxu0 %v2865
  %3733 = vmatprep.subr.mxu0 0.0
  %3734 = vmatpush1.msra.mxu0 %v2866
  %3735 = vmatprep.subr.mxu0 0.0
  %3736 = vmatpush1.msra.mxu0 %v2867
  %3737 = vmatprep.subr.mxu0 0.0
  %3738 = vmatpush1.msra.mxu0 %v2868
  %3739 = vmatprep.subr.mxu0 0.0
  %3740 = vmatpush1.msra.mxu0 %v2869
  %3741 = vmatprep.subr.mxu0 0.0
  %3742 = vmatpush1.msra.mxu0 %v2870
  %3743 = vmatprep.mubr.f32.mxu0 %v2996
  %3744 = vmatmul.mubr.f32.gmra.mrb[0].mxu0 %v2995
  %v3745 = vpop.f32.mrb[0].mxu0
  %v3746 = vadd.f32 %v3526, %v3745
  %v3747 = vpop.f32.mrb[0].mxu0
  %3748 = vmatprep.mubr.f32.mxu0 %v3008
  %3749 = vmatmul.mubr.f32.gmra.mrb[0].mxu0 %v3007
  %v3750 = vpop.f32.mrb[0].mxu0
  %v3751 = vadd.f32 %v3531, %v3750
  %v3752 = vpop.f32.mrb[0].mxu0
  %3753 = vmatprep.mubr.f32.mxu0 %v3020
  %3754 = vmatmul.mubr.f32.gmra.mrb[0].mxu0 %v3019
  %v3755 = vpop.f32.mrb[0].mxu0
  %v3756 = vadd.f32 %v3536, %v3755
  %v3757 = vpop.f32.mrb[0].mxu0
  %3758 = vmatprep.mubr.f32.mxu0 %v3032
  %3759 = vmatmul.mubr.f32.gmra.mrb[0].mxu0 %v3031
  %v3760 = vpop.f32.mrb[0].mxu0
  %v3761 = vadd.f32 %v3541, %v3760
  %v3762 = vpop.f32.mrb[0].mxu0
  %3763 = vmatprep.mubr.f32.mxu0 %v3044
  %3764 = vmatmul.mubr.f32.gmra.mrb[0].mxu0 %v3043
  %v3765 = vpop.f32.mrb[0].mxu0
  %v3766 = vadd.f32 %v3546, %v3765
  %v3767 = vpop.f32.mrb[0].mxu0
  %3768 = vmatprep.mubr.f32.mxu0 %v3056
  %3769 = vmatmul.mubr.f32.gmra.mrb[0].mxu0 %v3055
  %v3770 = vpop.f32.mrb[0].mxu0
  %v3771 = vadd.f32 %v3551, %v3770
  %v3772 = vpop.f32.mrb[0].mxu0
  %3773 = vmatprep.mubr.f32.mxu0 %v3068
  %3774 = vmatmul.mubr.f32.gmra.mrb[0].mxu0 %v3067
  %v3775 = vpop.f32.mrb[0].mxu0
  %v3776 = vadd.f32 %v3556, %v3775
  %v3777 = vpop.f32.mrb[0].mxu0
  %3778 = vmatprep.mubr.f32.mxu0 %v3080
  %3779 = vmatmul.mubr.f32.gmra.mrb[0].mxu0 %v3079
  %v3780 = vpop.f32.mrb[0].mxu0
  %v3781 = vadd.f32 %v3561, %v3780
  %v3782 = vpop.f32.mrb[0].mxu0
  %3783 = vmatprep.mubr.f32.mxu0 %v3092
  %3784 = vmatmul.mubr.f32.gmra.mrb[0].mxu0 %v3091
  %v3785 = vpop.f32.mrb[0].mxu0
  %v3786 = vadd.f32 %v3566, %v3785
  %v3787 = vpop.f32.mrb[0].mxu0
  %3788 = vmatprep.mubr.f32.mxu0 %v3104
  %3789 = vmatmul.mubr.f32.gmra.mrb[0].mxu0 %v3103
  %v3790 = vpop.f32.mrb[0].mxu0
  %v3791 = vadd.f32 %v3571, %v3790
  %v3792 = vpop.f32.mrb[0].mxu0
  %3793 = vmatprep.mubr.f32.mxu0 %v3116
  %3794 = vmatmul.mubr.f32.gmra.mrb[0].mxu0 %v3115
  %v3795 = vpop.f32.mrb[0].mxu0
  %v3796 = vadd.f32 %v3576, %v3795
  %v3797 = vpop.f32.mrb[0].mxu0
  %3798 = vmatprep.mubr.f32.mxu0 %v3128
  %3799 = vmatmul.mubr.f32.gmra.mrb[0].mxu0 %v3127
  %v3800 = vpop.f32.mrb[0].mxu0
  %v3801 = vadd.f32 %v3581, %v3800
  %v3802 = vpop.f32.mrb[0].mxu0
  %3803 = vmatprep.mubr.f32.mxu0 %v3140
  %3804 = vmatmul.mubr.f32.gmra.mrb[0].mxu0 %v3139
  %v3805 = vpop.f32.mrb[0].mxu0
  %v3806 = vadd.f32 %v3586, %v3805
  %v3807 = vpop.f32.mrb[0].mxu0
  %3808 = vmatprep.mubr.f32.mxu0 %v3152
  %3809 = vmatmul.mubr.f32.gmra.mrb[0].mxu0 %v3151
  %v3810 = vpop.f32.mrb[0].mxu0
  %v3811 = vadd.f32 %v3591, %v3810
  %v3812 = vpop.f32.mrb[0].mxu0
  %3813 = vmatprep.mubr.f32.mxu0 %v3164
  %3814 = vmatmul.mubr.f32.gmra.mrb[0].mxu0 %v3163
  %v3815 = vpop.f32.mrb[0].mxu0
  %v3816 = vadd.f32 %v3596, %v3815
  %v3817 = vpop.f32.mrb[0].mxu0
  %3818 = vmatprep.mubr.f32.mxu0 %v3176
  %3819 = vmatmul.mubr.f32.gmra.mrb[0].mxu0 %v3175
  %v3820 = vpop.f32.mrb[0].mxu0
  %v3821 = vadd.f32 %v3601, %v3820
  %v3822 = vpop.f32.mrb[0].mxu0
  %3823 = vmatprep.mubr.f32.mxu0 %v3188
  %3824 = vmatmul.mubr.f32.gmra.mrb[0].mxu0 %v3187
  %v3825 = vpop.f32.mrb[0].mxu0
  %v3826 = vadd.f32 %v3606, %v3825
  %v3827 = vpop.f32.mrb[0].mxu0
  %3828 = vmatprep.mubr.f32.mxu0 %v3200
  %3829 = vmatmul.mubr.f32.gmra.mrb[0].mxu0 %v3199
  %v3830 = vpop.f32.mrb[0].mxu0
  %v3831 = vadd.f32 %v3611, %v3830
  %v3832 = vpop.f32.mrb[0].mxu0
  %3833 = vmatprep.mubr.f32.mxu0 %v3212
  %3834 = vmatmul.mubr.f32.gmra.mrb[0].mxu0 %v3211
  %v3835 = vpop.f32.mrb[0].mxu0
  %v3836 = vadd.f32 %v3616, %v3835
  %v3837 = vpop.f32.mrb[0].mxu0
  %3838 = vmatprep.mubr.f32.mxu0 %v3224
  %3839 = vmatmul.mubr.f32.gmra.mrb[0].mxu0 %v3223
  %v3840 = vpop.f32.mrb[0].mxu0
  %v3841 = vadd.f32 %v3621, %v3840
  %v3842 = vpop.f32.mrb[0].mxu0
  %3843 = vmatprep.mubr.f32.mxu0 %v3236
  %3844 = vmatmul.mubr.f32.gmra.mrb[0].mxu0 %v3235
  %v3845 = vpop.f32.mrb[0].mxu0
  %v3846 = vadd.f32 %v3626, %v3845
  %v3847 = vpop.f32.mrb[0].mxu0
  %3848 = vmatprep.mubr.f32.mxu0 %v3248
  %3849 = vmatmul.mubr.f32.gmra.mrb[0].mxu0 %v3247
  %v3850 = vpop.f32.mrb[0].mxu0
  %v3851 = vadd.f32 %v3631, %v3850
  %v3852 = vpop.f32.mrb[0].mxu0
  %3853 = vmatprep.mubr.f32.mxu0 %v3260
  %3854 = vmatmul.mubr.f32.gmra.mrb[0].mxu0 %v3259
  %v3855 = vpop.f32.mrb[0].mxu0
  %v3856 = vadd.f32 %v3636, %v3855
  %v3857 = vpop.f32.mrb[0].mxu0
  %3858 = vmatprep.mubr.f32.mxu0 %v3272
  %3859 = vmatmul.mubr.f32.gmra.mrb[0].mxu0 %v3271
  %v3860 = vpop.f32.mrb[0].mxu0
  %v3861 = vadd.f32 %v3641, %v3860
  %v3862 = vpop.f32.mrb[0].mxu0
  %3863 = vmatprep.mubr.f32.mxu0 %v3284
  %3864 = vmatmul.mubr.f32.gmra.mrb[0].mxu0 %v3283
  %v3865 = vpop.f32.mrb[0].mxu0
  %v3866 = vadd.f32 %v3646, %v3865
  %v3867 = vpop.f32.mrb[0].mxu0
  %3868 = vmatprep.mubr.f32.mxu0 %v3296
  %3869 = vmatmul.mubr.f32.gmra.mrb[0].mxu0 %v3295
  %v3870 = vpop.f32.mrb[0].mxu0
  %v3871 = vadd.f32 %v3651, %v3870
  %v3872 = vpop.f32.mrb[0].mxu0
  %3873 = vmatprep.mubr.f32.mxu0 %v3308
  %3874 = vmatmul.mubr.f32.gmra.mrb[0].mxu0 %v3307
  %v3875 = vpop.f32.mrb[0].mxu0
  %v3876 = vadd.f32 %v3656, %v3875
  %v3877 = vpop.f32.mrb[0].mxu0
  %3878 = vmatprep.mubr.f32.mxu0 %v3320
  %3879 = vmatmul.mubr.f32.gmra.mrb[0].mxu0 %v3319
  %v3880 = vpop.f32.mrb[0].mxu0
  %v3881 = vadd.f32 %v3661, %v3880
  %v3882 = vpop.f32.mrb[0].mxu0
  %3883 = vmatprep.mubr.f32.mxu0 %v3332
  %3884 = vmatmul.mubr.f32.gmra.mrb[0].mxu0 %v3331
  %v3885 = vpop.f32.mrb[0].mxu0
  %v3886 = vadd.f32 %v3666, %v3885
  %v3887 = vpop.f32.mrb[0].mxu0
  %3888 = vmatprep.mubr.f32.mxu0 %v3344
  %3889 = vmatmul.mubr.f32.gmra.mrb[0].mxu0 %v3343
  %v3890 = vpop.f32.mrb[0].mxu0
  %v3891 = vadd.f32 %v3671, %v3890
  %v3892 = vpop.f32.mrb[0].mxu0
  %3893 = vmatprep.mubr.f32.mxu0 %v3356
  %3894 = vmatmul.mubr.f32.gmra.mrb[0].mxu0 %v3355
  %v3895 = vpop.f32.mrb[0].mxu0
  %v3896 = vadd.f32 %v3676, %v3895
  %v3897 = vpop.f32.mrb[0].mxu0
  %3898 = vdwg.mxu0
  %3899 = vmatprep.subr.mxu0 0.0
  %3900 = vmatpush1.msra.mxu0 %v2871
  %3901 = vmatprep.subr.mxu0 0.0
  %3902 = vmatpush1.msra.mxu0 %v2872
  %3903 = vmatprep.subr.mxu0 0.0
  %3904 = vmatpush1.msra.mxu0 %v2873
  %3905 = vmatprep.subr.mxu0 0.0
  %3906 = vmatpush1.msra.mxu0 %v2874
  %3907 = vmatprep.subr.mxu0 0.0
  %3908 = vmatpush1.msra.mxu0 %v2875
  %3909 = vmatprep.subr.mxu0 0.0
  %3910 = vmatpush1.msra.mxu0 %v2876
  %3911 = vmatprep.subr.mxu0 0.0
  %3912 = vmatpush1.msra.mxu0 %v2877
  %3913 = vmatprep.subr.mxu0 0.0
  %3914 = vmatpush1.msra.mxu0 %v2878
  %3915 = vmatprep.subr.mxu0 0.0
  %3916 = vmatpush1.msra.mxu0 %v2879
  %3917 = vmatprep.subr.mxu0 0.0
  %3918 = vmatpush1.msra.mxu0 %v2880
  %3919 = vmatprep.subr.mxu0 0.0
  %3920 = vmatpush1.msra.mxu0 %v2881
  %3921 = vmatprep.subr.mxu0 0.0
  %3922 = vmatpush1.msra.mxu0 %v2882
  %3923 = vmatprep.subr.mxu0 0.0
  %3924 = vmatpush1.msra.mxu0 %v2883
  %3925 = vmatprep.subr.mxu0 0.0
  %3926 = vmatpush1.msra.mxu0 %v2884
  %3927 = vmatprep.subr.mxu0 0.0
  %3928 = vmatpush1.msra.mxu0 %v2885
  %3929 = vmatprep.subr.mxu0 0.0
  %3930 = vmatpush1.msra.mxu0 %v2886
  %3931 = vmatprep.subr.mxu0 0.0
  %3932 = vmatpush1.msra.mxu0 %v2887
  %3933 = vmatprep.subr.mxu0 0.0
  %3934 = vmatpush1.msra.mxu0 %v2888
  %3935 = vmatprep.subr.mxu0 0.0
  %3936 = vmatpush1.msra.mxu0 %v2889
  %3937 = vmatprep.subr.mxu0 0.0
  %3938 = vmatpush1.msra.mxu0 %v2890
  %3939 = vmatprep.subr.mxu0 0.0
  %3940 = vmatpush1.msra.mxu0 %v2891
  %3941 = vmatprep.subr.mxu0 0.0
  %3942 = vmatpush1.msra.mxu0 %v2892
  %3943 = vmatprep.subr.mxu0 0.0
  %3944 = vmatpush1.msra.mxu0 %v2893
  %3945 = vmatprep.subr.mxu0 0.0
  %3946 = vmatpush1.msra.mxu0 %v2894
  %3947 = vmatprep.subr.mxu0 0.0
  %3948 = vmatpush1.msra.mxu0 %v2895
  %3949 = vmatprep.subr.mxu0 0.0
  %3950 = vmatpush1.msra.mxu0 %v2896
  %3951 = vmatprep.subr.mxu0 0.0
  %3952 = vmatpush1.msra.mxu0 %v2897
  %3953 = vmatprep.subr.mxu0 0.0
  %3954 = vmatpush1.msra.mxu0 %v2898
  %3955 = vmatprep.subr.mxu0 0.0
  %3956 = vmatpush1.msra.mxu0 %v2899
  %3957 = vmatprep.subr.mxu0 0.0
  %3958 = vmatpush1.msra.mxu0 %v2900
  %3959 = vmatprep.subr.mxu0 0.0
  %3960 = vmatpush1.msra.mxu0 %v2901
  %3961 = vmatprep.subr.mxu0 0.0
  %3962 = vmatpush1.msra.mxu0 %v2902
  %3963 = vmatprep.mubr.f32.mxu0 %v2998
  %3964 = vmatmul.mubr.f32.gmra.mrb[0].mxu0 %v2997
  %v3965 = vpop.f32.mrb[0].mxu0
  %v3966 = vadd.f32 %v3746, %v3965
  %v3967 = vpop.f32.mrb[0].mxu0
  %3968 = vmatprep.mubr.f32.mxu0 %v3010
  %3969 = vmatmul.mubr.f32.gmra.mrb[0].mxu0 %v3009
  %v3970 = vpop.f32.mrb[0].mxu0
  %v3971 = vadd.f32 %v3751, %v3970
  %v3972 = vpop.f32.mrb[0].mxu0
  %3973 = vmatprep.mubr.f32.mxu0 %v3022
  %3974 = vmatmul.mubr.f32.gmra.mrb[0].mxu0 %v3021
  %v3975 = vpop.f32.mrb[0].mxu0
  %v3976 = vadd.f32 %v3756, %v3975
  %v3977 = vpop.f32.mrb[0].mxu0
  %3978 = vmatprep.mubr.f32.mxu0 %v3034
  %3979 = vmatmul.mubr.f32.gmra.mrb[0].mxu0 %v3033
  %v3980 = vpop.f32.mrb[0].mxu0
  %v3981 = vadd.f32 %v3761, %v3980
  %v3982 = vpop.f32.mrb[0].mxu0
  %3983 = vmatprep.mubr.f32.mxu0 %v3046
  %3984 = vmatmul.mubr.f32.gmra.mrb[0].mxu0 %v3045
  %v3985 = vpop.f32.mrb[0].mxu0
  %v3986 = vadd.f32 %v3766, %v3985
  %v3987 = vpop.f32.mrb[0].mxu0
  %3988 = vmatprep.mubr.f32.mxu0 %v3058
  %3989 = vmatmul.mubr.f32.gmra.mrb[0].mxu0 %v3057
  %v3990 = vpop.f32.mrb[0].mxu0
  %v3991 = vadd.f32 %v3771, %v3990
  %v3992 = vpop.f32.mrb[0].mxu0
  %3993 = vmatprep.mubr.f32.mxu0 %v3070
  %3994 = vmatmul.mubr.f32.gmra.mrb[0].mxu0 %v3069
  %v3995 = vpop.f32.mrb[0].mxu0
  %v3996 = vadd.f32 %v3776, %v3995
  %v3997 = vpop.f32.mrb[0].mxu0
  %3998 = vmatprep.mubr.f32.mxu0 %v3082
  %3999 = vmatmul.mubr.f32.gmra.mrb[0].mxu0 %v3081
  %v4000 = vpop.f32.mrb[0].mxu0
  %v4001 = vadd.f32 %v3781, %v4000
  %v4002 = vpop.f32.mrb[0].mxu0
  %4003 = vmatprep.mubr.f32.mxu0 %v3094
  %4004 = vmatmul.mubr.f32.gmra.mrb[0].mxu0 %v3093
  %v4005 = vpop.f32.mrb[0].mxu0
  %v4006 = vadd.f32 %v3786, %v4005
  %v4007 = vpop.f32.mrb[0].mxu0
  %4008 = vmatprep.mubr.f32.mxu0 %v3106
  %4009 = vmatmul.mubr.f32.gmra.mrb[0].mxu0 %v3105
  %v4010 = vpop.f32.mrb[0].mxu0
  %v4011 = vadd.f32 %v3791, %v4010
  %v4012 = vpop.f32.mrb[0].mxu0
  %4013 = vmatprep.mubr.f32.mxu0 %v3118
  %4014 = vmatmul.mubr.f32.gmra.mrb[0].mxu0 %v3117
  %v4015 = vpop.f32.mrb[0].mxu0
  %v4016 = vadd.f32 %v3796, %v4015
  %v4017 = vpop.f32.mrb[0].mxu0
  %4018 = vmatprep.mubr.f32.mxu0 %v3130
  %4019 = vmatmul.mubr.f32.gmra.mrb[0].mxu0 %v3129
  %v4020 = vpop.f32.mrb[0].mxu0
  %v4021 = vadd.f32 %v3801, %v4020
  %v4022 = vpop.f32.mrb[0].mxu0
  %4023 = vmatprep.mubr.f32.mxu0 %v3142
  %4024 = vmatmul.mubr.f32.gmra.mrb[0].mxu0 %v3141
  %v4025 = vpop.f32.mrb[0].mxu0
  %v4026 = vadd.f32 %v3806, %v4025
  %v4027 = vpop.f32.mrb[0].mxu0
  %4028 = vmatprep.mubr.f32.mxu0 %v3154
  %4029 = vmatmul.mubr.f32.gmra.mrb[0].mxu0 %v3153
  %v4030 = vpop.f32.mrb[0].mxu0
  %v4031 = vadd.f32 %v3811, %v4030
  %v4032 = vpop.f32.mrb[0].mxu0
  %4033 = vmatprep.mubr.f32.mxu0 %v3166
  %4034 = vmatmul.mubr.f32.gmra.mrb[0].mxu0 %v3165
  %v4035 = vpop.f32.mrb[0].mxu0
  %v4036 = vadd.f32 %v3816, %v4035
  %v4037 = vpop.f32.mrb[0].mxu0
  %4038 = vmatprep.mubr.f32.mxu0 %v3178
  %4039 = vmatmul.mubr.f32.gmra.mrb[0].mxu0 %v3177
  %v4040 = vpop.f32.mrb[0].mxu0
  %v4041 = vadd.f32 %v3821, %v4040
  %v4042 = vpop.f32.mrb[0].mxu0
  %4043 = vmatprep.mubr.f32.mxu0 %v3190
  %4044 = vmatmul.mubr.f32.gmra.mrb[0].mxu0 %v3189
  %v4045 = vpop.f32.mrb[0].mxu0
  %v4046 = vadd.f32 %v3826, %v4045
  %v4047 = vpop.f32.mrb[0].mxu0
  %4048 = vmatprep.mubr.f32.mxu0 %v3202
  %4049 = vmatmul.mubr.f32.gmra.mrb[0].mxu0 %v3201
  %v4050 = vpop.f32.mrb[0].mxu0
  %v4051 = vadd.f32 %v3831, %v4050
  %v4052 = vpop.f32.mrb[0].mxu0
  %4053 = vmatprep.mubr.f32.mxu0 %v3214
  %4054 = vmatmul.mubr.f32.gmra.mrb[0].mxu0 %v3213
  %v4055 = vpop.f32.mrb[0].mxu0
  %v4056 = vadd.f32 %v3836, %v4055
  %v4057 = vpop.f32.mrb[0].mxu0
  %4058 = vmatprep.mubr.f32.mxu0 %v3226
  %4059 = vmatmul.mubr.f32.gmra.mrb[0].mxu0 %v3225
  %v4060 = vpop.f32.mrb[0].mxu0
  %v4061 = vadd.f32 %v3841, %v4060
  %v4062 = vpop.f32.mrb[0].mxu0
  %4063 = vmatprep.mubr.f32.mxu0 %v3238
  %4064 = vmatmul.mubr.f32.gmra.mrb[0].mxu0 %v3237
  %v4065 = vpop.f32.mrb[0].mxu0
  %v4066 = vadd.f32 %v3846, %v4065
  %v4067 = vpop.f32.mrb[0].mxu0
  %4068 = vmatprep.mubr.f32.mxu0 %v3250
  %4069 = vmatmul.mubr.f32.gmra.mrb[0].mxu0 %v3249
  %v4070 = vpop.f32.mrb[0].mxu0
  %v4071 = vadd.f32 %v3851, %v4070
  %v4072 = vpop.f32.mrb[0].mxu0
  %4073 = vmatprep.mubr.f32.mxu0 %v3262
  %4074 = vmatmul.mubr.f32.gmra.mrb[0].mxu0 %v3261
  %v4075 = vpop.f32.mrb[0].mxu0
  %v4076 = vadd.f32 %v3856, %v4075
  %v4077 = vpop.f32.mrb[0].mxu0
  %4078 = vmatprep.mubr.f32.mxu0 %v3274
  %4079 = vmatmul.mubr.f32.gmra.mrb[0].mxu0 %v3273
  %v4080 = vpop.f32.mrb[0].mxu0
  %v4081 = vadd.f32 %v3861, %v4080
  %v4082 = vpop.f32.mrb[0].mxu0
  %4083 = vmatprep.mubr.f32.mxu0 %v3286
  %4084 = vmatmul.mubr.f32.gmra.mrb[0].mxu0 %v3285
  %v4085 = vpop.f32.mrb[0].mxu0
  %v4086 = vadd.f32 %v3866, %v4085
  %v4087 = vpop.f32.mrb[0].mxu0
  %4088 = vmatprep.mubr.f32.mxu0 %v3298
  %4089 = vmatmul.mubr.f32.gmra.mrb[0].mxu0 %v3297
  %v4090 = vpop.f32.mrb[0].mxu0
  %v4091 = vadd.f32 %v3871, %v4090
  %v4092 = vpop.f32.mrb[0].mxu0
  %4093 = vmatprep.mubr.f32.mxu0 %v3310
  %4094 = vmatmul.mubr.f32.gmra.mrb[0].mxu0 %v3309
  %v4095 = vpop.f32.mrb[0].mxu0
  %v4096 = vadd.f32 %v3876, %v4095
  %v4097 = vpop.f32.mrb[0].mxu0
  %4098 = vmatprep.mubr.f32.mxu0 %v3322
  %4099 = vmatmul.mubr.f32.gmra.mrb[0].mxu0 %v3321
  %v4100 = vpop.f32.mrb[0].mxu0
  %v4101 = vadd.f32 %v3881, %v4100
  %v4102 = vpop.f32.mrb[0].mxu0
  %4103 = vmatprep.mubr.f32.mxu0 %v3334
  %4104 = vmatmul.mubr.f32.gmra.mrb[0].mxu0 %v3333
  %v4105 = vpop.f32.mrb[0].mxu0
  %v4106 = vadd.f32 %v3886, %v4105
  %v4107 = vpop.f32.mrb[0].mxu0
  %4108 = vmatprep.mubr.f32.mxu0 %v3346
  %4109 = vmatmul.mubr.f32.gmra.mrb[0].mxu0 %v3345
  %v4110 = vpop.f32.mrb[0].mxu0
  %v4111 = vadd.f32 %v3891, %v4110
  %v4112 = vpop.f32.mrb[0].mxu0
  %4113 = vmatprep.mubr.f32.mxu0 %v3358
  %4114 = vmatmul.mubr.f32.gmra.mrb[0].mxu0 %v3357
  %v4115 = vpop.f32.mrb[0].mxu0
  %v4116 = vadd.f32 %v3896, %v4115
  %v4117 = vpop.f32.mrb[0].mxu0
  %4118 = vdwg.mxu0
  %4119 = vmatprep.subr.mxu0 0.0
  %4120 = vmatpush1.msra.mxu0 %v2903
  %4121 = vmatprep.subr.mxu0 0.0
  %4122 = vmatpush1.msra.mxu0 %v2904
  %4123 = vmatprep.subr.mxu0 0.0
  %4124 = vmatpush1.msra.mxu0 %v2905
  %4125 = vmatprep.subr.mxu0 0.0
  %4126 = vmatpush1.msra.mxu0 %v2906
  %4127 = vmatprep.subr.mxu0 0.0
  %4128 = vmatpush1.msra.mxu0 %v2907
  %4129 = vmatprep.subr.mxu0 0.0
  %4130 = vmatpush1.msra.mxu0 %v2908
  %4131 = vmatprep.subr.mxu0 0.0
  %4132 = vmatpush1.msra.mxu0 %v2909
  %4133 = vmatprep.subr.mxu0 0.0
  %4134 = vmatpush1.msra.mxu0 %v2910
  %4135 = vmatprep.subr.mxu0 0.0
  %4136 = vmatpush1.msra.mxu0 %v2911
  %4137 = vmatprep.subr.mxu0 0.0
  %4138 = vmatpush1.msra.mxu0 %v2912
  %4139 = vmatprep.subr.mxu0 0.0
  %4140 = vmatpush1.msra.mxu0 %v2913
  %4141 = vmatprep.subr.mxu0 0.0
  %4142 = vmatpush1.msra.mxu0 %v2914
  %4143 = vmatprep.subr.mxu0 0.0
  %4144 = vmatpush1.msra.mxu0 %v2915
  %4145 = vmatprep.subr.mxu0 0.0
  %4146 = vmatpush1.msra.mxu0 %v2916
  %4147 = vmatprep.subr.mxu0 0.0
  %4148 = vmatpush1.msra.mxu0 %v2917
  %4149 = vmatprep.subr.mxu0 0.0
  %4150 = vmatpush1.msra.mxu0 %v2918
  %4151 = vmatprep.subr.mxu0 0.0
  %4152 = vmatpush1.msra.mxu0 %v2919
  %4153 = vmatprep.subr.mxu0 0.0
  %4154 = vmatpush1.msra.mxu0 %v2920
  %4155 = vmatprep.subr.mxu0 0.0
  %4156 = vmatpush1.msra.mxu0 %v2921
  %4157 = vmatprep.subr.mxu0 0.0
  %4158 = vmatpush1.msra.mxu0 %v2922
  %4159 = vmatprep.subr.mxu0 0.0
  %4160 = vmatpush1.msra.mxu0 %v2923
  %4161 = vmatprep.subr.mxu0 0.0
  %4162 = vmatpush1.msra.mxu0 %v2924
  %4163 = vmatprep.subr.mxu0 0.0
  %4164 = vmatpush1.msra.mxu0 %v2925
  %4165 = vmatprep.subr.mxu0 0.0
  %4166 = vmatpush1.msra.mxu0 %v2926
  %4167 = vmatprep.subr.mxu0 0.0
  %4168 = vmatpush1.msra.mxu0 %v2927
  %4169 = vmatprep.subr.mxu0 0.0
  %4170 = vmatpush1.msra.mxu0 %v2928
  %4171 = vmatprep.subr.mxu0 0.0
  %4172 = vmatpush1.msra.mxu0 %v2929
  %4173 = vmatprep.subr.mxu0 0.0
  %4174 = vmatpush1.msra.mxu0 %v2930
  %4175 = vmatprep.subr.mxu0 0.0
  %4176 = vmatpush1.msra.mxu0 %v2931
  %4177 = vmatprep.subr.mxu0 0.0
  %4178 = vmatpush1.msra.mxu0 %v2932
  %4179 = vmatprep.subr.mxu0 0.0
  %4180 = vmatpush1.msra.mxu0 %v2933
  %4181 = vmatprep.subr.mxu0 0.0
  %4182 = vmatpush1.msra.mxu0 %v2934
  %4183 = vmatprep.mubr.f32.mxu0 %v3000
  %4184 = vmatmul.mubr.f32.gmra.mrb[0].mxu0 %v2999
  %v4185 = vpop.f32.mrb[0].mxu0
  %v4186 = vadd.f32 %v3966, %v4185
  %v4187 = vpop.f32.mrb[0].mxu0
  %4188 = vmatprep.mubr.f32.mxu0 %v3012
  %4189 = vmatmul.mubr.f32.gmra.mrb[0].mxu0 %v3011
  %v4190 = vpop.f32.mrb[0].mxu0
  %v4191 = vadd.f32 %v3971, %v4190
  %v4192 = vpop.f32.mrb[0].mxu0
  %4193 = vmatprep.mubr.f32.mxu0 %v3024
  %4194 = vmatmul.mubr.f32.gmra.mrb[0].mxu0 %v3023
  %v4195 = vpop.f32.mrb[0].mxu0
  %v4196 = vadd.f32 %v3976, %v4195
  %v4197 = vpop.f32.mrb[0].mxu0
  %4198 = vmatprep.mubr.f32.mxu0 %v3036
  %4199 = vmatmul.mubr.f32.gmra.mrb[0].mxu0 %v3035
  %v4200 = vpop.f32.mrb[0].mxu0
  %v4201 = vadd.f32 %v3981, %v4200
  %v4202 = vpop.f32.mrb[0].mxu0
  %4203 = vmatprep.mubr.f32.mxu0 %v3048
  %4204 = vmatmul.mubr.f32.gmra.mrb[0].mxu0 %v3047
  %v4205 = vpop.f32.mrb[0].mxu0
  %v4206 = vadd.f32 %v3986, %v4205
  %v4207 = vpop.f32.mrb[0].mxu0
  %4208 = vmatprep.mubr.f32.mxu0 %v3060
  %4209 = vmatmul.mubr.f32.gmra.mrb[0].mxu0 %v3059
  %v4210 = vpop.f32.mrb[0].mxu0
  %v4211 = vadd.f32 %v3991, %v4210
  %v4212 = vpop.f32.mrb[0].mxu0
  %4213 = vmatprep.mubr.f32.mxu0 %v3072
  %4214 = vmatmul.mubr.f32.gmra.mrb[0].mxu0 %v3071
  %v4215 = vpop.f32.mrb[0].mxu0
  %v4216 = vadd.f32 %v3996, %v4215
  %v4217 = vpop.f32.mrb[0].mxu0
  %4218 = vmatprep.mubr.f32.mxu0 %v3084
  %4219 = vmatmul.mubr.f32.gmra.mrb[0].mxu0 %v3083
  %v4220 = vpop.f32.mrb[0].mxu0
  %v4221 = vadd.f32 %v4001, %v4220
  %v4222 = vpop.f32.mrb[0].mxu0
  %4223 = vmatprep.mubr.f32.mxu0 %v3096
  %4224 = vmatmul.mubr.f32.gmra.mrb[0].mxu0 %v3095
  %v4225 = vpop.f32.mrb[0].mxu0
  %v4226 = vadd.f32 %v4006, %v4225
  %v4227 = vpop.f32.mrb[0].mxu0
  %4228 = vmatprep.mubr.f32.mxu0 %v3108
  %4229 = vmatmul.mubr.f32.gmra.mrb[0].mxu0 %v3107
  %v4230 = vpop.f32.mrb[0].mxu0
  %v4231 = vadd.f32 %v4011, %v4230
  %v4232 = vpop.f32.mrb[0].mxu0
  %4233 = vmatprep.mubr.f32.mxu0 %v3120
  %4234 = vmatmul.mubr.f32.gmra.mrb[0].mxu0 %v3119
  %v4235 = vpop.f32.mrb[0].mxu0
  %v4236 = vadd.f32 %v4016, %v4235
  %v4237 = vpop.f32.mrb[0].mxu0
  %4238 = vmatprep.mubr.f32.mxu0 %v3132
  %4239 = vmatmul.mubr.f32.gmra.mrb[0].mxu0 %v3131
  %v4240 = vpop.f32.mrb[0].mxu0
  %v4241 = vadd.f32 %v4021, %v4240
  %v4242 = vpop.f32.mrb[0].mxu0
  %4243 = vmatprep.mubr.f32.mxu0 %v3144
  %4244 = vmatmul.mubr.f32.gmra.mrb[0].mxu0 %v3143
  %v4245 = vpop.f32.mrb[0].mxu0
  %v4246 = vadd.f32 %v4026, %v4245
  %v4247 = vpop.f32.mrb[0].mxu0
  %4248 = vmatprep.mubr.f32.mxu0 %v3156
  %4249 = vmatmul.mubr.f32.gmra.mrb[0].mxu0 %v3155
  %v4250 = vpop.f32.mrb[0].mxu0
  %v4251 = vadd.f32 %v4031, %v4250
  %v4252 = vpop.f32.mrb[0].mxu0
  %4253 = vmatprep.mubr.f32.mxu0 %v3168
  %4254 = vmatmul.mubr.f32.gmra.mrb[0].mxu0 %v3167
  %v4255 = vpop.f32.mrb[0].mxu0
  %v4256 = vadd.f32 %v4036, %v4255
  %v4257 = vpop.f32.mrb[0].mxu0
  %4258 = vmatprep.mubr.f32.mxu0 %v3180
  %4259 = vmatmul.mubr.f32.gmra.mrb[0].mxu0 %v3179
  %v4260 = vpop.f32.mrb[0].mxu0
  %v4261 = vadd.f32 %v4041, %v4260
  %v4262 = vpop.f32.mrb[0].mxu0
  %4263 = vmatprep.mubr.f32.mxu0 %v3192
  %4264 = vmatmul.mubr.f32.gmra.mrb[0].mxu0 %v3191
  %v4265 = vpop.f32.mrb[0].mxu0
  %v4266 = vadd.f32 %v4046, %v4265
  %v4267 = vpop.f32.mrb[0].mxu0
  %4268 = vmatprep.mubr.f32.mxu0 %v3204
  %4269 = vmatmul.mubr.f32.gmra.mrb[0].mxu0 %v3203
  %v4270 = vpop.f32.mrb[0].mxu0
  %v4271 = vadd.f32 %v4051, %v4270
  %v4272 = vpop.f32.mrb[0].mxu0
  %4273 = vmatprep.mubr.f32.mxu0 %v3216
  %4274 = vmatmul.mubr.f32.gmra.mrb[0].mxu0 %v3215
  %v4275 = vpop.f32.mrb[0].mxu0
  %v4276 = vadd.f32 %v4056, %v4275
  %v4277 = vpop.f32.mrb[0].mxu0
  %4278 = vmatprep.mubr.f32.mxu0 %v3228
  %4279 = vmatmul.mubr.f32.gmra.mrb[0].mxu0 %v3227
  %v4280 = vpop.f32.mrb[0].mxu0
  %v4281 = vadd.f32 %v4061, %v4280
  %v4282 = vpop.f32.mrb[0].mxu0
  %4283 = vmatprep.mubr.f32.mxu0 %v3240
  %4284 = vmatmul.mubr.f32.gmra.mrb[0].mxu0 %v3239
  %v4285 = vpop.f32.mrb[0].mxu0
  %v4286 = vadd.f32 %v4066, %v4285
  %v4287 = vpop.f32.mrb[0].mxu0
  %4288 = vmatprep.mubr.f32.mxu0 %v3252
  %4289 = vmatmul.mubr.f32.gmra.mrb[0].mxu0 %v3251
  %v4290 = vpop.f32.mrb[0].mxu0
  %v4291 = vadd.f32 %v4071, %v4290
  %v4292 = vpop.f32.mrb[0].mxu0
  %4293 = vmatprep.mubr.f32.mxu0 %v3264
  %4294 = vmatmul.mubr.f32.gmra.mrb[0].mxu0 %v3263
  %v4295 = vpop.f32.mrb[0].mxu0
  %v4296 = vadd.f32 %v4076, %v4295
  %v4297 = vpop.f32.mrb[0].mxu0
  %4298 = vmatprep.mubr.f32.mxu0 %v3276
  %4299 = vmatmul.mubr.f32.gmra.mrb[0].mxu0 %v3275
  %v4300 = vpop.f32.mrb[0].mxu0
  %v4301 = vadd.f32 %v4081, %v4300
  %v4302 = vpop.f32.mrb[0].mxu0
  %4303 = vmatprep.mubr.f32.mxu0 %v3288
  %4304 = vmatmul.mubr.f32.gmra.mrb[0].mxu0 %v3287
  %v4305 = vpop.f32.mrb[0].mxu0
  %v4306 = vadd.f32 %v4086, %v4305
  %v4307 = vpop.f32.mrb[0].mxu0
  %4308 = vmatprep.mubr.f32.mxu0 %v3300
  %4309 = vmatmul.mubr.f32.gmra.mrb[0].mxu0 %v3299
  %v4310 = vpop.f32.mrb[0].mxu0
  %v4311 = vadd.f32 %v4091, %v4310
  %v4312 = vpop.f32.mrb[0].mxu0
  %4313 = vmatprep.mubr.f32.mxu0 %v3312
  %4314 = vmatmul.mubr.f32.gmra.mrb[0].mxu0 %v3311
  %v4315 = vpop.f32.mrb[0].mxu0
  %v4316 = vadd.f32 %v4096, %v4315
  %v4317 = vpop.f32.mrb[0].mxu0
  %4318 = vmatprep.mubr.f32.mxu0 %v3324
  %4319 = vmatmul.mubr.f32.gmra.mrb[0].mxu0 %v3323
  %v4320 = vpop.f32.mrb[0].mxu0
  %v4321 = vadd.f32 %v4101, %v4320
  %v4322 = vpop.f32.mrb[0].mxu0
  %4323 = vmatprep.mubr.f32.mxu0 %v3336
  %4324 = vmatmul.mubr.f32.gmra.mrb[0].mxu0 %v3335
  %v4325 = vpop.f32.mrb[0].mxu0
  %v4326 = vadd.f32 %v4106, %v4325
  %v4327 = vpop.f32.mrb[0].mxu0
  %4328 = vmatprep.mubr.f32.mxu0 %v3348
  %4329 = vmatmul.mubr.f32.gmra.mrb[0].mxu0 %v3347
  %v4330 = vpop.f32.mrb[0].mxu0
  %v4331 = vadd.f32 %v4111, %v4330
  %v4332 = vpop.f32.mrb[0].mxu0
  %4333 = vmatprep.mubr.f32.mxu0 %v3360
  %4334 = vmatmul.mubr.f32.gmra.mrb[0].mxu0 %v3359
  %v4335 = vpop.f32.mrb[0].mxu0
  %v4336 = vadd.f32 %v4116, %v4335
  %v4337 = vpop.f32.mrb[0].mxu0
  %4338 = vdwg.mxu0
  %4339 = vmatprep.subr.mxu0 0.0
  %4340 = vmatpush1.msra.mxu0 %v2935
  %4341 = vmatprep.subr.mxu0 0.0
  %4342 = vmatpush1.msra.mxu0 %v2936
  %4343 = vmatprep.subr.mxu0 0.0
  %4344 = vmatpush1.msra.mxu0 %v2937
  %4345 = vmatprep.subr.mxu0 0.0
  %4346 = vmatpush1.msra.mxu0 %v2938
  %4347 = vmatprep.subr.mxu0 0.0
  %4348 = vmatpush1.msra.mxu0 %v2939
  %4349 = vmatprep.subr.mxu0 0.0
  %4350 = vmatpush1.msra.mxu0 %v2940
  %4351 = vmatprep.subr.mxu0 0.0
  %4352 = vmatpush1.msra.mxu0 %v2941
  %4353 = vmatprep.subr.mxu0 0.0
  %4354 = vmatpush1.msra.mxu0 %v2942
  %4355 = vmatprep.subr.mxu0 0.0
  %4356 = vmatpush1.msra.mxu0 %v2943
  %4357 = vmatprep.subr.mxu0 0.0
  %4358 = vmatpush1.msra.mxu0 %v2944
  %4359 = vmatprep.subr.mxu0 0.0
  %4360 = vmatpush1.msra.mxu0 %v2945
  %4361 = vmatprep.subr.mxu0 0.0
  %4362 = vmatpush1.msra.mxu0 %v2946
  %4363 = vmatprep.subr.mxu0 0.0
  %4364 = vmatpush1.msra.mxu0 %v2947
  %4365 = vmatprep.subr.mxu0 0.0
  %4366 = vmatpush1.msra.mxu0 %v2948
  %4367 = vmatprep.subr.mxu0 0.0
  %4368 = vmatpush1.msra.mxu0 %v2949
  %4369 = vmatprep.subr.mxu0 0.0
  %4370 = vmatpush1.msra.mxu0 %v2950
  %4371 = vmatprep.subr.mxu0 0.0
  %4372 = vmatpush1.msra.mxu0 %v2951
  %4373 = vmatprep.subr.mxu0 0.0
  %4374 = vmatpush1.msra.mxu0 %v2952
  %4375 = vmatprep.subr.mxu0 0.0
  %4376 = vmatpush1.msra.mxu0 %v2953
  %4377 = vmatprep.subr.mxu0 0.0
  %4378 = vmatpush1.msra.mxu0 %v2954
  %4379 = vmatprep.subr.mxu0 0.0
  %4380 = vmatpush1.msra.mxu0 %v2955
  %4381 = vmatprep.subr.mxu0 0.0
  %4382 = vmatpush1.msra.mxu0 %v2956
  %4383 = vmatprep.subr.mxu0 0.0
  %4384 = vmatpush1.msra.mxu0 %v2957
  %4385 = vmatprep.subr.mxu0 0.0
  %4386 = vmatpush1.msra.mxu0 %v2958
  %4387 = vmatprep.subr.mxu0 0.0
  %4388 = vmatpush1.msra.mxu0 %v2959
  %4389 = vmatprep.subr.mxu0 0.0
  %4390 = vmatpush1.msra.mxu0 %v2960
  %4391 = vmatprep.subr.mxu0 0.0
  %4392 = vmatpush1.msra.mxu0 %v2961
  %4393 = vmatprep.subr.mxu0 0.0
  %4394 = vmatpush1.msra.mxu0 %v2962
  %4395 = vmatprep.subr.mxu0 0.0
  %4396 = vmatpush1.msra.mxu0 %v2963
  %4397 = vmatprep.subr.mxu0 0.0
  %4398 = vmatpush1.msra.mxu0 %v2964
  %4399 = vmatprep.subr.mxu0 0.0
  %4400 = vmatpush1.msra.mxu0 %v2965
  %4401 = vmatprep.subr.mxu0 0.0
  %4402 = vmatpush1.msra.mxu0 %v2966
  %4403 = vmatprep.mubr.f32.mxu0 %v3002
  %4404 = vmatmul.mubr.f32.gmra.mrb[0].mxu0 %v3001
  %v4405 = vpop.f32.mrb[0].mxu0
  %v4406 = vadd.f32 %v4186, %v4405
  %v4407 = vpop.f32.mrb[0].mxu0
  %4408 = vmatprep.mubr.f32.mxu0 %v3014
  %4409 = vmatmul.mubr.f32.gmra.mrb[0].mxu0 %v3013
  %v4410 = vpop.f32.mrb[0].mxu0
  %v4411 = vadd.f32 %v4191, %v4410
  %v4412 = vpop.f32.mrb[0].mxu0
  %4413 = vmatprep.mubr.f32.mxu0 %v3026
  %4414 = vmatmul.mubr.f32.gmra.mrb[0].mxu0 %v3025
  %v4415 = vpop.f32.mrb[0].mxu0
  %v4416 = vadd.f32 %v4196, %v4415
  %v4417 = vpop.f32.mrb[0].mxu0
  %4418 = vmatprep.mubr.f32.mxu0 %v3038
  %4419 = vmatmul.mubr.f32.gmra.mrb[0].mxu0 %v3037
  %v4420 = vpop.f32.mrb[0].mxu0
  %v4421 = vadd.f32 %v4201, %v4420
  %v4422 = vpop.f32.mrb[0].mxu0
  %4423 = vmatprep.mubr.f32.mxu0 %v3050
  %4424 = vmatmul.mubr.f32.gmra.mrb[0].mxu0 %v3049
  %v4425 = vpop.f32.mrb[0].mxu0
  %v4426 = vadd.f32 %v4206, %v4425
  %v4427 = vpop.f32.mrb[0].mxu0
  %4428 = vmatprep.mubr.f32.mxu0 %v3062
  %4429 = vmatmul.mubr.f32.gmra.mrb[0].mxu0 %v3061
  %v4430 = vpop.f32.mrb[0].mxu0
  %v4431 = vadd.f32 %v4211, %v4430
  %v4432 = vpop.f32.mrb[0].mxu0
  %4433 = vmatprep.mubr.f32.mxu0 %v3074
  %4434 = vmatmul.mubr.f32.gmra.mrb[0].mxu0 %v3073
  %v4435 = vpop.f32.mrb[0].mxu0
  %v4436 = vadd.f32 %v4216, %v4435
  %v4437 = vpop.f32.mrb[0].mxu0
  %4438 = vmatprep.mubr.f32.mxu0 %v3086
  %4439 = vmatmul.mubr.f32.gmra.mrb[0].mxu0 %v3085
  %v4440 = vpop.f32.mrb[0].mxu0
  %v4441 = vadd.f32 %v4221, %v4440
  %v4442 = vpop.f32.mrb[0].mxu0
  %4443 = vmatprep.mubr.f32.mxu0 %v3098
  %4444 = vmatmul.mubr.f32.gmra.mrb[0].mxu0 %v3097
  %v4445 = vpop.f32.mrb[0].mxu0
  %v4446 = vadd.f32 %v4226, %v4445
  %v4447 = vpop.f32.mrb[0].mxu0
  %4448 = vmatprep.mubr.f32.mxu0 %v3110
  %4449 = vmatmul.mubr.f32.gmra.mrb[0].mxu0 %v3109
  %v4450 = vpop.f32.mrb[0].mxu0
  %v4451 = vadd.f32 %v4231, %v4450
  %v4452 = vpop.f32.mrb[0].mxu0
  %4453 = vmatprep.mubr.f32.mxu0 %v3122
  %4454 = vmatmul.mubr.f32.gmra.mrb[0].mxu0 %v3121
  %v4455 = vpop.f32.mrb[0].mxu0
  %v4456 = vadd.f32 %v4236, %v4455
  %v4457 = vpop.f32.mrb[0].mxu0
  %4458 = vmatprep.mubr.f32.mxu0 %v3134
  %4459 = vmatmul.mubr.f32.gmra.mrb[0].mxu0 %v3133
  %v4460 = vpop.f32.mrb[0].mxu0
  %v4461 = vadd.f32 %v4241, %v4460
  %v4462 = vpop.f32.mrb[0].mxu0
  %4463 = vmatprep.mubr.f32.mxu0 %v3146
  %4464 = vmatmul.mubr.f32.gmra.mrb[0].mxu0 %v3145
  %v4465 = vpop.f32.mrb[0].mxu0
  %v4466 = vadd.f32 %v4246, %v4465
  %v4467 = vpop.f32.mrb[0].mxu0
  %4468 = vmatprep.mubr.f32.mxu0 %v3158
  %4469 = vmatmul.mubr.f32.gmra.mrb[0].mxu0 %v3157
  %v4470 = vpop.f32.mrb[0].mxu0
  %v4471 = vadd.f32 %v4251, %v4470
  %v4472 = vpop.f32.mrb[0].mxu0
  %4473 = vmatprep.mubr.f32.mxu0 %v3170
  %4474 = vmatmul.mubr.f32.gmra.mrb[0].mxu0 %v3169
  %v4475 = vpop.f32.mrb[0].mxu0
  %v4476 = vadd.f32 %v4256, %v4475
  %v4477 = vpop.f32.mrb[0].mxu0
  %4478 = vmatprep.mubr.f32.mxu0 %v3182
  %4479 = vmatmul.mubr.f32.gmra.mrb[0].mxu0 %v3181
  %v4480 = vpop.f32.mrb[0].mxu0
  %v4481 = vadd.f32 %v4261, %v4480
  %v4482 = vpop.f32.mrb[0].mxu0
  %4483 = vmatprep.mubr.f32.mxu0 %v3194
  %4484 = vmatmul.mubr.f32.gmra.mrb[0].mxu0 %v3193
  %v4485 = vpop.f32.mrb[0].mxu0
  %v4486 = vadd.f32 %v4266, %v4485
  %v4487 = vpop.f32.mrb[0].mxu0
  %4488 = vmatprep.mubr.f32.mxu0 %v3206
  %4489 = vmatmul.mubr.f32.gmra.mrb[0].mxu0 %v3205
  %v4490 = vpop.f32.mrb[0].mxu0
  %v4491 = vadd.f32 %v4271, %v4490
  %v4492 = vpop.f32.mrb[0].mxu0
  %4493 = vmatprep.mubr.f32.mxu0 %v3218
  %4494 = vmatmul.mubr.f32.gmra.mrb[0].mxu0 %v3217
  %v4495 = vpop.f32.mrb[0].mxu0
  %v4496 = vadd.f32 %v4276, %v4495
  %v4497 = vpop.f32.mrb[0].mxu0
  %4498 = vmatprep.mubr.f32.mxu0 %v3230
  %4499 = vmatmul.mubr.f32.gmra.mrb[0].mxu0 %v3229
  %v4500 = vpop.f32.mrb[0].mxu0
  %v4501 = vadd.f32 %v4281, %v4500
  %v4502 = vpop.f32.mrb[0].mxu0
  %4503 = vmatprep.mubr.f32.mxu0 %v3242
  %4504 = vmatmul.mubr.f32.gmra.mrb[0].mxu0 %v3241
  %v4505 = vpop.f32.mrb[0].mxu0
  %v4506 = vadd.f32 %v4286, %v4505
  %v4507 = vpop.f32.mrb[0].mxu0
  %4508 = vmatprep.mubr.f32.mxu0 %v3254
  %4509 = vmatmul.mubr.f32.gmra.mrb[0].mxu0 %v3253
  %v4510 = vpop.f32.mrb[0].mxu0
  %v4511 = vadd.f32 %v4291, %v4510
  %v4512 = vpop.f32.mrb[0].mxu0
  %4513 = vmatprep.mubr.f32.mxu0 %v3266
  %4514 = vmatmul.mubr.f32.gmra.mrb[0].mxu0 %v3265
  %v4515 = vpop.f32.mrb[0].mxu0
  %v4516 = vadd.f32 %v4296, %v4515
  %v4517 = vpop.f32.mrb[0].mxu0
  %4518 = vmatprep.mubr.f32.mxu0 %v3278
  %4519 = vmatmul.mubr.f32.gmra.mrb[0].mxu0 %v3277
  %v4520 = vpop.f32.mrb[0].mxu0
  %v4521 = vadd.f32 %v4301, %v4520
  %v4522 = vpop.f32.mrb[0].mxu0
  %4523 = vmatprep.mubr.f32.mxu0 %v3290
  %4524 = vmatmul.mubr.f32.gmra.mrb[0].mxu0 %v3289
  %v4525 = vpop.f32.mrb[0].mxu0
  %v4526 = vadd.f32 %v4306, %v4525
  %v4527 = vpop.f32.mrb[0].mxu0
  %4528 = vmatprep.mubr.f32.mxu0 %v3302
  %4529 = vmatmul.mubr.f32.gmra.mrb[0].mxu0 %v3301
  %v4530 = vpop.f32.mrb[0].mxu0
  %v4531 = vadd.f32 %v4311, %v4530
  %v4532 = vpop.f32.mrb[0].mxu0
  %4533 = vmatprep.mubr.f32.mxu0 %v3314
  %4534 = vmatmul.mubr.f32.gmra.mrb[0].mxu0 %v3313
  %v4535 = vpop.f32.mrb[0].mxu0
  %v4536 = vadd.f32 %v4316, %v4535
  %v4537 = vpop.f32.mrb[0].mxu0
  %4538 = vmatprep.mubr.f32.mxu0 %v3326
  %4539 = vmatmul.mubr.f32.gmra.mrb[0].mxu0 %v3325
  %v4540 = vpop.f32.mrb[0].mxu0
  %v4541 = vadd.f32 %v4321, %v4540
  %v4542 = vpop.f32.mrb[0].mxu0
  %4543 = vmatprep.mubr.f32.mxu0 %v3338
  %4544 = vmatmul.mubr.f32.gmra.mrb[0].mxu0 %v3337
  %v4545 = vpop.f32.mrb[0].mxu0
  %v4546 = vadd.f32 %v4326, %v4545
  %v4547 = vpop.f32.mrb[0].mxu0
  %4548 = vmatprep.mubr.f32.mxu0 %v3350
  %4549 = vmatmul.mubr.f32.gmra.mrb[0].mxu0 %v3349
  %v4550 = vpop.f32.mrb[0].mxu0
  %v4551 = vadd.f32 %v4331, %v4550
  %v4552 = vpop.f32.mrb[0].mxu0
  %4553 = vmatprep.mubr.f32.mxu0 %v3362
  %4554 = vmatmul.mubr.f32.gmra.mrb[0].mxu0 %v3361
  %v4555 = vpop.f32.mrb[0].mxu0
  %v4556 = vadd.f32 %v4336, %v4555
  %v4557 = vpop.f32.mrb[0].mxu0
  %4558 = vdwg.mxu0
  %4559 = vmatprep.subr.mxu0 0.0
  %4560 = vmatpush1.msra.mxu0 %v2967
  %4561 = vmatprep.subr.mxu0 0.0
  %4562 = vmatpush1.msra.mxu0 %v2968
  %4563 = vmatprep.subr.mxu0 0.0
  %4564 = vmatpush1.msra.mxu0 %v2969
  %4565 = vmatprep.subr.mxu0 0.0
  %4566 = vmatpush1.msra.mxu0 %v2970
  %4567 = vmatprep.subr.mxu0 0.0
  %4568 = vmatpush1.msra.mxu0 %v2971
  %4569 = vmatprep.subr.mxu0 0.0
  %4570 = vmatpush1.msra.mxu0 %v2972
  %4571 = vmatprep.subr.mxu0 0.0
  %4572 = vmatpush1.msra.mxu0 %v2973
  %4573 = vmatprep.subr.mxu0 0.0
  %4574 = vmatpush1.msra.mxu0 %v2974
  %4575 = vmatprep.subr.mxu0 0.0
  %4576 = vmatpush1.msra.mxu0 %v2975
  %4577 = vmatprep.subr.mxu0 0.0
  %4578 = vmatpush1.msra.mxu0 %v2976
  %4579 = vmatprep.subr.mxu0 0.0
  %4580 = vmatpush1.msra.mxu0 %v2977
  %4581 = vmatprep.subr.mxu0 0.0
  %4582 = vmatpush1.msra.mxu0 %v2978
  %4583 = vmatprep.subr.mxu0 0.0
  %4584 = vmatpush1.msra.mxu0 %v2979
  %4585 = vmatprep.subr.mxu0 0.0
  %4586 = vmatpush1.msra.mxu0 %v2980
  %4587 = vmatprep.subr.mxu0 0.0
  %4588 = vmatpush1.msra.mxu0 %v2981
  %4589 = vmatprep.subr.mxu0 0.0
  %4590 = vmatpush1.msra.mxu0 %v2982
  %4591 = vmatprep.subr.mxu0 0.0
  %4592 = vmatpush1.msra.mxu0 %v2983
  %4593 = vmatprep.subr.mxu0 0.0
  %4594 = vmatpush1.msra.mxu0 %v2984
  %4595 = vmatprep.subr.mxu0 0.0
  %4596 = vmatpush1.msra.mxu0 %v2985
  %4597 = vmatprep.subr.mxu0 0.0
  %4598 = vmatpush1.msra.mxu0 %v2986
  %4599 = vmatprep.subr.mxu0 0.0
  %4600 = vmatpush1.msra.mxu0 %v2987
  %4601 = vmatprep.subr.mxu0 0.0
  %4602 = vmatpush1.msra.mxu0 %v2988
  %4603 = vmatprep.subr.mxu0 0.0
  %4604 = vmatpush1.msra.mxu0 %v2989
  %4605 = vmatprep.subr.mxu0 0.0
  %4606 = vmatpush1.msra.mxu0 %v2990
  %4607 = vmatprep.subr.mxu0 0.0
  %4608 = vmatpush1.msra.mxu0 %v2991
  %4609 = vmatprep.subr.mxu0 0.0
  %4610 = vmatpush1.msra.mxu0 %v2992
  %4611 = vmatprep.subr.mxu0 0.0
  %4612 = vmatpush1.msra.mxu0 0.0
  %4613 = vmatprep.subr.mxu0 0.0
  %4614 = vmatpush1.msra.mxu0 0.0
  %4615 = vmatprep.subr.mxu0 0.0
  %4616 = vmatpush1.msra.mxu0 0.0
  %4617 = vmatprep.subr.mxu0 0.0
  %4618 = vmatpush1.msra.mxu0 0.0
  %4619 = vmatprep.subr.mxu0 0.0
  %4620 = vmatpush1.msra.mxu0 0.0
  %4621 = vmatprep.subr.mxu0 0.0
  %4622 = vmatpush1.msra.mxu0 0.0
  %4623 = vmatprep.mubr.f32.mxu0 %v3367
  %4624 = vmatmul.mubr.f32.gmra.mrb[0].mxu0 %v3003
  %v4625 = vpop.f32.mrb[0].mxu0
  %v4626 = vadd.f32 %v4406, %v4625
  %v4627 = vpop.f32.mrb[0].mxu0
  %4628 = vmatprep.mubr.f32.mxu0 %v3370
  %4629 = vmatmul.mubr.f32.gmra.mrb[0].mxu0 %v3015
  %v4630 = vpop.f32.mrb[0].mxu0
  %v4631 = vadd.f32 %v4411, %v4630
  %v4632 = vpop.f32.mrb[0].mxu0
  %4633 = vmatprep.mubr.f32.mxu0 %v3373
  %4634 = vmatmul.mubr.f32.gmra.mrb[0].mxu0 %v3027
  %v4635 = vpop.f32.mrb[0].mxu0
  %v4636 = vadd.f32 %v4416, %v4635
  %v4637 = vpop.f32.mrb[0].mxu0
  %4638 = vmatprep.mubr.f32.mxu0 %v3376
  %4639 = vmatmul.mubr.f32.gmra.mrb[0].mxu0 %v3039
  %v4640 = vpop.f32.mrb[0].mxu0
  %v4641 = vadd.f32 %v4421, %v4640
  %v4642 = vpop.f32.mrb[0].mxu0
  %4643 = vmatprep.mubr.f32.mxu0 %v3379
  %4644 = vmatmul.mubr.f32.gmra.mrb[0].mxu0 %v3051
  %v4645 = vpop.f32.mrb[0].mxu0
  %v4646 = vadd.f32 %v4426, %v4645
  %v4647 = vpop.f32.mrb[0].mxu0
  %4648 = vmatprep.mubr.f32.mxu0 %v3382
  %4649 = vmatmul.mubr.f32.gmra.mrb[0].mxu0 %v3063
  %v4650 = vpop.f32.mrb[0].mxu0
  %v4651 = vadd.f32 %v4431, %v4650
  %v4652 = vpop.f32.mrb[0].mxu0
  %4653 = vmatprep.mubr.f32.mxu0 %v3385
  %4654 = vmatmul.mubr.f32.gmra.mrb[0].mxu0 %v3075
  %v4655 = vpop.f32.mrb[0].mxu0
  %v4656 = vadd.f32 %v4436, %v4655
  %v4657 = vpop.f32.mrb[0].mxu0
  %4658 = vmatprep.mubr.f32.mxu0 %v3388
  %4659 = vmatmul.mubr.f32.gmra.mrb[0].mxu0 %v3087
  %v4660 = vpop.f32.mrb[0].mxu0
  %v4661 = vadd.f32 %v4441, %v4660
  %v4662 = vpop.f32.mrb[0].mxu0
  %4663 = vmatprep.mubr.f32.mxu0 %v3391
  %4664 = vmatmul.mubr.f32.gmra.mrb[0].mxu0 %v3099
  %v4665 = vpop.f32.mrb[0].mxu0
  %v4666 = vadd.f32 %v4446, %v4665
  %v4667 = vpop.f32.mrb[0].mxu0
  %4668 = vmatprep.mubr.f32.mxu0 %v3394
  %4669 = vmatmul.mubr.f32.gmra.mrb[0].mxu0 %v3111
  %v4670 = vpop.f32.mrb[0].mxu0
  %v4671 = vadd.f32 %v4451, %v4670
  %v4672 = vpop.f32.mrb[0].mxu0
  %4673 = vmatprep.mubr.f32.mxu0 %v3397
  %4674 = vmatmul.mubr.f32.gmra.mrb[0].mxu0 %v3123
  %v4675 = vpop.f32.mrb[0].mxu0
  %v4676 = vadd.f32 %v4456, %v4675
  %v4677 = vpop.f32.mrb[0].mxu0
  %4678 = vmatprep.mubr.f32.mxu0 %v3400
  %4679 = vmatmul.mubr.f32.gmra.mrb[0].mxu0 %v3135
  %v4680 = vpop.f32.mrb[0].mxu0
  %v4681 = vadd.f32 %v4461, %v4680
  %v4682 = vpop.f32.mrb[0].mxu0
  %4683 = vmatprep.mubr.f32.mxu0 %v3403
  %4684 = vmatmul.mubr.f32.gmra.mrb[0].mxu0 %v3147
  %v4685 = vpop.f32.mrb[0].mxu0
  %v4686 = vadd.f32 %v4466, %v4685
  %v4687 = vpop.f32.mrb[0].mxu0
  %4688 = vmatprep.mubr.f32.mxu0 %v3406
  %4689 = vmatmul.mubr.f32.gmra.mrb[0].mxu0 %v3159
  %v4690 = vpop.f32.mrb[0].mxu0
  %v4691 = vadd.f32 %v4471, %v4690
  %v4692 = vpop.f32.mrb[0].mxu0
  %4693 = vmatprep.mubr.f32.mxu0 %v3409
  %4694 = vmatmul.mubr.f32.gmra.mrb[0].mxu0 %v3171
  %v4695 = vpop.f32.mrb[0].mxu0
  %v4696 = vadd.f32 %v4476, %v4695
  %v4697 = vpop.f32.mrb[0].mxu0
  %4698 = vmatprep.mubr.f32.mxu0 %v3412
  %4699 = vmatmul.mubr.f32.gmra.mrb[0].mxu0 %v3183
  %v4700 = vpop.f32.mrb[0].mxu0
  %v4701 = vadd.f32 %v4481, %v4700
  %v4702 = vpop.f32.mrb[0].mxu0
  %4703 = vmatprep.mubr.f32.mxu0 %v3415
  %4704 = vmatmul.mubr.f32.gmra.mrb[0].mxu0 %v3195
  %v4705 = vpop.f32.mrb[0].mxu0
  %v4706 = vadd.f32 %v4486, %v4705
  %v4707 = vpop.f32.mrb[0].mxu0
  %4708 = vmatprep.mubr.f32.mxu0 %v3418
  %4709 = vmatmul.mubr.f32.gmra.mrb[0].mxu0 %v3207
  %v4710 = vpop.f32.mrb[0].mxu0
  %v4711 = vadd.f32 %v4491, %v4710
  %v4712 = vpop.f32.mrb[0].mxu0
  %4713 = vmatprep.mubr.f32.mxu0 %v3421
  %4714 = vmatmul.mubr.f32.gmra.mrb[0].mxu0 %v3219
  %v4715 = vpop.f32.mrb[0].mxu0
  %v4716 = vadd.f32 %v4496, %v4715
  %v4717 = vpop.f32.mrb[0].mxu0
  %4718 = vmatprep.mubr.f32.mxu0 %v3424
  %4719 = vmatmul.mubr.f32.gmra.mrb[0].mxu0 %v3231
  %v4720 = vpop.f32.mrb[0].mxu0
  %v4721 = vadd.f32 %v4501, %v4720
  %v4722 = vpop.f32.mrb[0].mxu0
  %4723 = vmatprep.mubr.f32.mxu0 %v3427
  %4724 = vmatmul.mubr.f32.gmra.mrb[0].mxu0 %v3243
  %v4725 = vpop.f32.mrb[0].mxu0
  %v4726 = vadd.f32 %v4506, %v4725
  %v4727 = vpop.f32.mrb[0].mxu0
  %4728 = vmatprep.mubr.f32.mxu0 %v3430
  %4729 = vmatmul.mubr.f32.gmra.mrb[0].mxu0 %v3255
  %v4730 = vpop.f32.mrb[0].mxu0
  %v4731 = vadd.f32 %v4511, %v4730
  %v4732 = vpop.f32.mrb[0].mxu0
  %4733 = vmatprep.mubr.f32.mxu0 %v3433
  %4734 = vmatmul.mubr.f32.gmra.mrb[0].mxu0 %v3267
  %v4735 = vpop.f32.mrb[0].mxu0
  %v4736 = vadd.f32 %v4516, %v4735
  %v4737 = vpop.f32.mrb[0].mxu0
  %4738 = vmatprep.mubr.f32.mxu0 %v3436
  %4739 = vmatmul.mubr.f32.gmra.mrb[0].mxu0 %v3279
  %v4740 = vpop.f32.mrb[0].mxu0
  %v4741 = vadd.f32 %v4521, %v4740
  %v4742 = vpop.f32.mrb[0].mxu0
  %4743 = vmatprep.mubr.f32.mxu0 %v3439
  %4744 = vmatmul.mubr.f32.gmra.mrb[0].mxu0 %v3291
  %v4745 = vpop.f32.mrb[0].mxu0
  %v4746 = vadd.f32 %v4526, %v4745
  %v4747 = vpop.f32.mrb[0].mxu0
  %4748 = vmatprep.mubr.f32.mxu0 %v3442
  %4749 = vmatmul.mubr.f32.gmra.mrb[0].mxu0 %v3303
  %v4750 = vpop.f32.mrb[0].mxu0
  %v4751 = vadd.f32 %v4531, %v4750
  %v4752 = vpop.f32.mrb[0].mxu0
  %4753 = vmatprep.mubr.f32.mxu0 %v3445
  %4754 = vmatmul.mubr.f32.gmra.mrb[0].mxu0 %v3315
  %v4755 = vpop.f32.mrb[0].mxu0
  %v4756 = vadd.f32 %v4536, %v4755
  %v4757 = vpop.f32.mrb[0].mxu0
  %4758 = vmatprep.mubr.f32.mxu0 %v3448
  %4759 = vmatmul.mubr.f32.gmra.mrb[0].mxu0 %v3327
  %v4760 = vpop.f32.mrb[0].mxu0
  %v4761 = vadd.f32 %v4541, %v4760
  %v4762 = vpop.f32.mrb[0].mxu0
  %4763 = vmatprep.mubr.f32.mxu0 %v3451
  %4764 = vmatmul.mubr.f32.gmra.mrb[0].mxu0 %v3339
  %v4765 = vpop.f32.mrb[0].mxu0
  %v4766 = vadd.f32 %v4546, %v4765
  %v4767 = vpop.f32.mrb[0].mxu0
  %4768 = vmatprep.mubr.f32.mxu0 %v3454
  %4769 = vmatmul.mubr.f32.gmra.mrb[0].mxu0 %v3351
  %v4770 = vpop.f32.mrb[0].mxu0
  %v4771 = vadd.f32 %v4551, %v4770
  %v4772 = vpop.f32.mrb[0].mxu0
  %4773 = vmatprep.mubr.f32.mxu0 %v3457
  %4774 = vmatmul.mubr.f32.gmra.mrb[0].mxu0 %v3363
  %v4775 = vpop.f32.mrb[0].mxu0
  %v4776 = vadd.f32 %v4556, %v4775
  %v4777 = vpop.f32.mrb[0].mxu0
  %4778 = vdwg.mxu0
  %vm4779 = vcmask 400384
  %4780 = vst.msk [vmem:[%s4] sm:$0xff] %vm4779, %v4626
  %4781 = vst.msk [vmem:[%s4 + $0x8] sm:$0xff] %vm4779, %v4631
  %4782 = vst.msk [vmem:[%s4 + $0x10] sm:$0xff] %vm4779, %v4636
  %4783 = vst.msk [vmem:[%s4 + $0x18] sm:$0xff] %vm4779, %v4641
  %4784 = vst.msk [vmem:[%s4 + $0x20] sm:$0xff] %vm4779, %v4646
  %4785 = vst.msk [vmem:[%s4 + $0x28] sm:$0xff] %vm4779, %v4651
  %4786 = vst.msk [vmem:[%s4 + $0x30] sm:$0xff] %vm4779, %v4656
  %4787 = vst.msk [vmem:[%s4 + $0x38] sm:$0xff] %vm4779, %v4661
  %4788 = vst.msk [vmem:[%s4 + $0x40] sm:$0xff] %vm4779, %v4666
  %4789 = vst.msk [vmem:[%s4 + $0x48] sm:$0xff] %vm4779, %v4671
  %4790 = vst.msk [vmem:[%s4 + $0x50] sm:$0xff] %vm4779, %v4676
  %4791 = vst.msk [vmem:[%s4 + $0x58] sm:$0xff] %vm4779, %v4681
  %4792 = vst.msk [vmem:[%s4 + $0x60] sm:$0xff] %vm4779, %v4686
  %4793 = vst.msk [vmem:[%s4 + $0x68] sm:$0xff] %vm4779, %v4691
  %4794 = vst.msk [vmem:[%s4 + $0x70] sm:$0xff] %vm4779, %v4696
  %4795 = vst.msk [vmem:[%s4 + $0x78] sm:$0xff] %vm4779, %v4701
  %4796 = vst.msk [vmem:[%s4 + $0x80] sm:$0xff] %vm4779, %v4706
  %4797 = vst.msk [vmem:[%s4 + $0x88] sm:$0xff] %vm4779, %v4711
  %4798 = vst.msk [vmem:[%s4 + $0x90] sm:$0xff] %vm4779, %v4716
  %4799 = vst.msk [vmem:[%s4 + $0x98] sm:$0xff] %vm4779, %v4721
  %4800 = vst.msk [vmem:[%s4 + $0xa0] sm:$0xff] %vm4779, %v4726
  %4801 = vst.msk [vmem:[%s4 + $0xa8] sm:$0xff] %vm4779, %v4731
  %4802 = vst.msk [vmem:[%s4 + $0xb0] sm:$0xff] %vm4779, %v4736
  %4803 = vst.msk [vmem:[%s4 + $0xb8] sm:$0xff] %vm4779, %v4741
  %4804 = vst.msk [vmem:[%s4 + $0xc0] sm:$0xff] %vm4779, %v4746
  %4805 = vst.msk [vmem:[%s4 + $0xc8] sm:$0xff] %vm4779, %v4751
  %4806 = vst.msk [vmem:[%s4 + $0xd0] sm:$0xff] %vm4779, %v4756
  %4807 = vst.msk [vmem:[%s4 + $0xd8] sm:$0xff] %vm4779, %v4761
  %4808 = vst.msk [vmem:[%s4 + $0xe0] sm:$0xff] %vm4779, %v4766
  %4809 = vst.msk [vmem:[%s4 + $0xe8] sm:$0xff] %vm4779, %v4771
  %4810 = vst.msk [vmem:[%s4 + $0xf0] sm:$0xff] %vm4779, %v4776
  // Predicated region
  $region18: #{bn_relu_conv2d_1x1.1} parent=0 // pred_check
    _
  $region19: #{bn_relu_conv2d_1x1.1} parent=0 // pred_check_branch
    %4812 = sbr.rel (0) target = $region21
  $region20: #{bn_relu_conv2d_1x1.1} parent=0 // pred_region
    _
  $region21: #{bn_relu_conv2d_1x1.1} parent=0 // pred_fallthru
    _
  // Predicated region
  $region22: #{bn_relu_conv2d_1x1.1} parent=0 // pred_check
    _
  $region23: #{bn_relu_conv2d_1x1.1} parent=0 // pred_check_branch
    %4814 = sbr.rel (0) target = $region25
  $region24: #{bn_relu_conv2d_1x1.1} parent=0 // pred_region
    _
  $region25: #{bn_relu_conv2d_1x1.1} parent=0 // pred_fallthru
    _

</llo_original>
